<compile_context>
chip_gen: v6e
topology: v6e:2x2x1
jax: 0.10.0
libtpu: 0.0.40
codegen_flags: <defaults>
</compile_context>

<pallas_src>
import jax
import jax.numpy as jnp
from jax.experimental import pallas as pl
from jax.experimental.pallas import tpu as pltpu

# ----------------------------- configuration --------------------------------
B = 2                                   # number of image pairs
CHANNELS = 3
IMG = 16
PATCH = 8
GRID = IMG // PATCH
NUM_PATCHES = GRID * GRID                       # 4
SEQ = NUM_PATCHES + 1                           # +CLS = 5
N_IMAGES = 2 * B                                # both images of every pair
T_TOTAL = N_IMAGES * SEQ                        # 20 tokens in the fused slab
PATCH_DIM = CHANNELS * PATCH * PATCH            # 192
HIDDEN = 32
HEADS = 2
HEAD_DIM = HIDDEN // HEADS
LAYERS = 2
INTERMEDIATE = 4 * HIDDEN                       # 128
CLS_HIDDEN = 512
LN_EPS = 1e-12                                  # HF ViT layer_norm_eps
MASK_VALUE = -1e9
MXU_DTYPE = jnp.bfloat16                        # matmul operand dtype


# ------------------------------ fused kernel ---------------------------------
def _fused_vit_pair_kernel(
    patch_ref,        # [T_TOTAL, PATCH_DIM] f32 (CLS rows are zero)
    patch_w_ref,      # [PATCH_DIM, HIDDEN]  bf16
    tok_add_ref,      # [T_TOTAL, HIDDEN]    f32 (cls/pos/patch-bias fold)
    mask_ref,         # [T_TOTAL, T_TOTAL]   f32 block-diagonal additive mask
    ln1_g_ref, ln1_b_ref,            # [LAYERS, 1, HIDDEN]
    wq_ref, bq_ref,                  # [L*H, HIDDEN, HEAD_DIM] bf16 / [L*H,1,HD] (scale folded)
    wkt_ref, bkt_ref,                # [L*H, HEAD_DIM, HIDDEN] bf16 / [L*H,HD,1] (K pre-transposed)
    wv_ref, bv_ref,                  # [L*H, HIDDEN, HEAD_DIM] bf16 / [L*H,1,HD]
    wo_ref, bo_ref,                  # [L*H, HEAD_DIM, HIDDEN] bf16 / [LAYERS,1,HIDDEN]
    ln2_g_ref, ln2_b_ref,            # [LAYERS, 1, HIDDEN]
    w1_ref, b1_ref,                  # [LAYERS, HIDDEN, INTERMEDIATE] / [LAYERS,1,I]
    w2_ref, b2_ref,                  # [LAYERS, INTERMEDIATE, HIDDEN] / [LAYERS,1,H]
    lnf_g_ref, lnf_b_ref,            # [1, HIDDEN]
    sel0_ref, sel1_ref,              # [B, T_TOTAL] CLS-row selection matrices
    cw1a_ref, cw1b_ref, cb1_ref,     # [HIDDEN, CLS_HIDDEN] x2 bf16 / [1, CLS_HIDDEN]
    cw2_ref, cb2_ref,                # [1, CLS_HIDDEN] f32 / [1, 1]
    out_ref,                         # [B, 1] f32 logits for all pairs
):
    def mm(a, b):
        # bf16 MXU operands, f32 accumulation.
        return jnp.dot(a.astype(MXU_DTYPE), b.astype(MXU_DTYPE),
                       preferred_element_type=jnp.float32)

    def layernorm(h, g, b):
        mu = jnp.mean(h, axis=-1, keepdims=True)
        c = h - mu
        var = jnp.mean(c * c, axis=-1, keepdims=True)
        return c * jax.lax.rsqrt(var + LN_EPS) * g + b

    def gelu(y):
        # TODO(synk): HF ViT uses exact erf-GELU; tanh approximation (EUP) used here.
        c = 0.7978845608028654  # sqrt(2/pi)
        return 0.5 * y * (1.0 + jnp.tanh(c * (y + 0.044715 * y * y * y)))

    mask = mask_ref[...]

    # --- token embedding for all 2*B images at once ---
    x = mm(patch_ref[...], patch_w_ref[...]) + tok_add_ref[...]       # [T, H] f32

    for li in range(LAYERS):   # static unroll; switch to fori_loop if LAYERS grows
        # ---------------- self-attention block (pre-LN) ----------------
        h = layernorm(x, ln1_g_ref[li], ln1_b_ref[li])
        hT = h.T                                      # single transpose per layer
        attn = jnp.zeros_like(x)
        for hd in range(HEADS):
            lh = li * HEADS + hd
            q = mm(h, wq_ref[lh]) + bq_ref[lh]        # [T, HD], 1/sqrt(d) folded in
            kT = mm(wkt_ref[lh], hT) + bkt_ref[lh]    # [HD, T], no per-head transpose
            v = mm(h, wv_ref[lh]) + bv_ref[lh]        # [T, HD]
            s = mm(q, kT) + mask                      # [T, T]
            s = s - jnp.max(s, axis=-1, keepdims=True)
            p = jnp.exp(s)
            # TODO(synk): approx reciprocal -> softmax rows not exactly sum-to-1.
            p = p * pl.reciprocal(jnp.sum(p, axis=-1, keepdims=True), approx=True)
            attn = attn + mm(mm(p, v), wo_ref[lh])    # accumulate per-head out-proj
        x = x + attn + bo_ref[li]

        # ---------------- MLP block (pre-LN) ----------------
        h = layernorm(x, ln2_g_ref[li], ln2_b_ref[li])
        x = x + mm(gelu(mm(h, w1_ref[li]) + b1_ref[li]), w2_ref[li]) + b2_ref[li]

    # CLS features of all pairs via selection matmuls (no row/lane concat);
    # the final LayerNorm is row-wise, so applying it only to the selected
    # CLS rows equals HF's last_hidden_state[:, 0].
    cls0 = layernorm(mm(sel0_ref[...], x), lnf_g_ref[...], lnf_b_ref[...])  # [B, H]
    cls1 = layernorm(mm(sel1_ref[...], x), lnf_g_ref[...], lnf_b_ref[...])  # [B, H]

    # classifier head batched over all pairs; Linear(2H->512) split by row halves
    h1 = jnp.maximum(mm(cls0, cw1a_ref[...]) + mm(cls1, cw1b_ref[...])
                     + cb1_ref[...], 0.0)                                   # [B, 512]
    # final 512->1 as VPU multiply + lane reduction (no [512,1] padded operand)
    out_ref[...] = jnp.sum(h1 * cw2_ref[...], axis=-1, keepdims=True) + cb2_ref[...]


def _full_spec(a):
    """Whole-array block, constant index (single grid step)."""
    nd = a.ndim
    return pl.BlockSpec(a.shape, lambda i, _nd=nd: (0,) * _nd)


# ----------------------------- parameter init --------------------------------
def init_params(key):
    def nrm(k, shape, std=0.02):
        return std * jax.random.normal(k, shape, dtype=jnp.float32)

    keys = jax.random.split(key, 12)
    scale = 1.0 / float(HEAD_DIM) ** 0.5
    p = {}
    p["patch_w"] = nrm(keys[0], (PATCH_DIM, HIDDEN)).astype(MXU_DTYPE)
    p["patch_b"] = jnp.zeros((1, HIDDEN), jnp.float32)
    p["cls"] = nrm(keys[1], (1, HIDDEN))
    p["pos"] = nrm(keys[2], (SEQ, HIDDEN))

    p["ln1_g"] = jnp.ones((LAYERS, 1, HIDDEN), jnp.float32)
    p["ln1_b"] = jnp.zeros((LAYERS, 1, HIDDEN), jnp.float32)
    # per-head projections; 1/sqrt(head_dim) folded into Q weights / bias
    p["wq"] = (nrm(keys[3], (LAYERS * HEADS, HIDDEN, HEAD_DIM)) * scale).astype(MXU_DTYPE)
    p["bq"] = jnp.zeros((LAYERS * HEADS, 1, HEAD_DIM), jnp.float32)
    # K stored pre-transposed ([head_dim, hidden]) so K^T needs no in-kernel K transpose
    p["wkT"] = nrm(keys[4], (LAYERS * HEADS, HEAD_DIM, HIDDEN)).astype(MXU_DTYPE)
    p["bkT"] = jnp.zeros((LAYERS * HEADS, HEAD_DIM, 1), jnp.float32)
    p["wv"] = nrm(keys[5], (LAYERS * HEADS, HIDDEN, HEAD_DIM)).astype(MXU_DTYPE)
    p["bv"] = jnp.zeros((LAYERS * HEADS, 1, HEAD_DIM), jnp.float32)
    p["wo"] = nrm(keys[6], (LAYERS * HEADS, HEAD_DIM, HIDDEN)).astype(MXU_DTYPE)
    p["bo"] = jnp.zeros((LAYERS, 1, HIDDEN), jnp.float32)
    p["ln2_g"] = jnp.ones((LAYERS, 1, HIDDEN), jnp.float32)
    p["ln2_b"] = jnp.zeros((LAYERS, 1, HIDDEN), jnp.float32)
    p["w1"] = nrm(keys[7], (LAYERS, HIDDEN, INTERMEDIATE)).astype(MXU_DTYPE)
    p["b1"] = jnp.zeros((LAYERS, 1, INTERMEDIATE), jnp.float32)
    p["w2"] = nrm(keys[8], (LAYERS, INTERMEDIATE, HIDDEN)).astype(MXU_DTYPE)
    p["b2"] = jnp.zeros((LAYERS, 1, HIDDEN), jnp.float32)

    p["lnf_g"] = jnp.ones((1, HIDDEN), jnp.float32)
    p["lnf_b"] = jnp.zeros((1, HIDDEN), jnp.float32)

    # classifier: Linear(2H->512) split into image-0 / image-1 row halves
    p["cls_w1a"] = nrm(keys[9], (HIDDEN, CLS_HIDDEN)).astype(MXU_DTYPE)
    p["cls_w1b"] = nrm(keys[10], (HIDDEN, CLS_HIDDEN)).astype(MXU_DTYPE)
    p["cls_b1"] = jnp.zeros((1, CLS_HIDDEN), jnp.float32)
    # final 512->1 stored as a [1, 512] row (VPU multiply + lane reduction)
    p["cls_w2"] = nrm(keys[11], (1, CLS_HIDDEN))
    p["cls_b2"] = jnp.zeros((1, 1), jnp.float32)
    return p


# ------------------------------- forward pass ---------------------------------
def vit_pair_classifier_forward(pair_imgs, params):
    """pair_imgs: [B, 2, C, H, W] -> logits [B, 1]."""
    n_pairs = pair_imgs.shape[0]
    n_img = n_pairs * 2
    t_total = n_img * SEQ

    # Patchify (Conv2d kernel=stride=PATCH equivalent), content order (C, ph, pw)
    x = pair_imgs.reshape(n_img, CHANNELS, GRID, PATCH, GRID, PATCH)
    x = x.transpose(0, 2, 4, 1, 3, 5).reshape(n_img, NUM_PATCHES, PATCH_DIM)
    # prepend a zero "CLS content" row per image (cls/pos/bias folded into tok_add)
    x = jnp.concatenate(
        [jnp.zeros((n_img, 1, PATCH_DIM), jnp.float32), x.astype(jnp.float32)], axis=1)
    patch_slab = x.reshape(t_total, PATCH_DIM)            # single batch-wide slab

    # per-token additive slab: CLS row -> cls + pos[0]; patch rows -> pos + patch bias
    per_img = jnp.concatenate(
        [params["cls"] + params["pos"][0:1, :],
         params["pos"][1:, :] + params["patch_b"]], axis=0)          # [SEQ, HIDDEN]
    tok_add = jnp.tile(per_img, (n_img, 1))                           # [T_TOTAL, HIDDEN]

    # batch-wide block-diagonal additive mask: attention stays within each image
    img_id = jnp.arange(t_total) // SEQ
    mask = jnp.where(img_id[:, None] == img_id[None, :], 0.0,
                     MASK_VALUE).astype(jnp.float32)

    # CLS-row selection matrices (pair p: image0 CLS at row 2p*SEQ, image1 at +SEQ)
    rows = jnp.arange(t_total)
    pidx = jnp.arange(n_pairs)
    sel0 = (rows[None, :] == (pidx * 2 * SEQ)[:, None]).astype(jnp.float32)
    sel1 = (rows[None, :] == (pidx * 2 * SEQ + SEQ)[:, None]).astype(jnp.float32)

    args = (patch_slab, params["patch_w"], tok_add, mask,
            params["ln1_g"], params["ln1_b"],
            params["wq"], params["bq"], params["wkT"], params["bkT"],
            params["wv"], params["bv"], params["wo"], params["bo"],
            params["ln2_g"], params["ln2_b"],
            params["w1"], params["b1"], params["w2"], params["b2"],
            params["lnf_g"], params["lnf_b"],
            sel0, sel1,
            params["cls_w1a"], params["cls_w1b"], params["cls_b1"],
            params["cls_w2"], params["cls_b2"])

    # Single grid step: everything (weights + activations) resident in VMEM.
    # TODO(synk): for a real ViT-B (hidden=768, 12 layers) switch to per-layer
    # weight streaming (layer grid axis / emit_pipeline) and set vmem_limit_bytes.
    out = pl.pallas_call(
        _fused_vit_pair_kernel,
        out_shape=jax.ShapeDtypeStruct((n_pairs, 1), jnp.float32),
        grid=(1,),
        in_specs=[_full_spec(a) for a in args],
        out_specs=pl.BlockSpec((n_pairs, 1), lambda i: (0, 0)),
        compiler_params=pltpu.CompilerParams(
            dimension_semantics=("arbitrary",)),
    )(*args)
    return out


# ---------------------------------- main --------------------------------------
if __name__ == "__main__":
    key = jax.random.PRNGKey(0)
    k_params, k_data = jax.random.split(key)

    params = init_params(k_params)
    pair_imgs = jax.random.normal(
        k_data, (B, 2, CHANNELS, IMG, IMG), dtype=jnp.float32)

    fwd = jax.jit(vit_pair_classifier_forward)
    logits = jax.block_until_ready(fwd(pair_imgs, params))

    assert logits.shape == (B, 1), logits.shape
    assert bool(jnp.all(jnp.isfinite(logits)))
    print("KERNEL_OK")
</pallas_src>

<mosaic_0001>
module attributes {stable_mosaic.version = 11 : i64} {
  func.func @_fused_vit_pair_kernel(%arg0: i32, %arg1: memref<20x192xf32, #tpu.memory_space<vmem>>, %arg2: memref<192x32xbf16, #tpu.memory_space<vmem>>, %arg3: memref<20x32xf32, #tpu.memory_space<vmem>>, %arg4: memref<20x20xf32, #tpu.memory_space<vmem>>, %arg5: memref<2x1x32xf32, #tpu.memory_space<vmem>>, %arg6: memref<2x1x32xf32, #tpu.memory_space<vmem>>, %arg7: memref<4x32x16xbf16, #tpu.memory_space<vmem>>, %arg8: memref<4x1x16xf32, #tpu.memory_space<vmem>>, %arg9: memref<4x16x32xbf16, #tpu.memory_space<vmem>>, %arg10: memref<4x16x1xf32, #tpu.memory_space<vmem>>, %arg11: memref<4x32x16xbf16, #tpu.memory_space<vmem>>, %arg12: memref<4x1x16xf32, #tpu.memory_space<vmem>>, %arg13: memref<4x16x32xbf16, #tpu.memory_space<vmem>>, %arg14: memref<2x1x32xf32, #tpu.memory_space<vmem>>, %arg15: memref<2x1x32xf32, #tpu.memory_space<vmem>>, %arg16: memref<2x1x32xf32, #tpu.memory_space<vmem>>, %arg17: memref<2x32x128xbf16, #tpu.memory_space<vmem>>, %arg18: memref<2x1x128xf32, #tpu.memory_space<vmem>>, %arg19: memref<2x128x32xbf16, #tpu.memory_space<vmem>>, %arg20: memref<2x1x32xf32, #tpu.memory_space<vmem>>, %arg21: memref<1x32xf32, #tpu.memory_space<vmem>>, %arg22: memref<1x32xf32, #tpu.memory_space<vmem>>, %arg23: memref<2x20xf32, #tpu.memory_space<vmem>>, %arg24: memref<2x20xf32, #tpu.memory_space<vmem>>, %arg25: memref<32x512xbf16, #tpu.memory_space<vmem>>, %arg26: memref<32x512xbf16, #tpu.memory_space<vmem>>, %arg27: memref<1x512xf32, #tpu.memory_space<vmem>>, %arg28: memref<1x512xf32, #tpu.memory_space<vmem>>, %arg29: memref<1x1xf32, #tpu.memory_space<vmem>>, %arg30: memref<2x1xf32, #tpu.memory_space<vmem>>) attributes {dimension_semantics = [#tpu.dimension_semantics<arbitrary>], iteration_bounds = array<i64: 1>, scalar_prefetch = 0 : i64, scratch_operands = 0 : i64, tpu.core_type = #tpu.core_type<tc>, window_params = [{pipeline_mode = #tpu.pipeline_mode<synchronous>, transform_indices = @transform_0, window_bounds = array<i64: 20, 192>}, {pipeline_mode = #tpu.pipeline_mode<synchronous>, transform_indices = @transform_1, window_bounds = array<i64: 192, 32>}, {pipeline_mode = #tpu.pipeline_mode<synchronous>, transform_indices = @transform_2, window_bounds = array<i64: 20, 32>}, {pipeline_mode = #tpu.pipeline_mode<synchronous>, transform_indices = @transform_3, window_bounds = array<i64: 20, 20>}, {pipeline_mode = #tpu.pipeline_mode<synchronous>, transform_indices = @transform_4, window_bounds = array<i64: 2, 1, 32>}, {pipeline_mode = #tpu.pipeline_mode<synchronous>, transform_indices = @transform_5, window_bounds = array<i64: 2, 1, 32>}, {pipeline_mode = #tpu.pipeline_mode<synchronous>, transform_indices = @transform_6, window_bounds = array<i64: 4, 32, 16>}, {pipeline_mode = #tpu.pipeline_mode<synchronous>, transform_indices = @transform_7, window_bounds = array<i64: 4, 1, 16>}, {pipeline_mode = #tpu.pipeline_mode<synchronous>, transform_indices = @transform_8, window_bounds = array<i64: 4, 16, 32>}, {pipeline_mode = #tpu.pipeline_mode<synchronous>, transform_indices = @transform_9, window_bounds = array<i64: 4, 16, 1>}, {pipeline_mode = #tpu.pipeline_mode<synchronous>, transform_indices = @transform_10, window_bounds = array<i64: 4, 32, 16>}, {pipeline_mode = #tpu.pipeline_mode<synchronous>, transform_indices = @transform_11, window_bounds = array<i64: 4, 1, 16>}, {pipeline_mode = #tpu.pipeline_mode<synchronous>, transform_indices = @transform_12, window_bounds = array<i64: 4, 16, 32>}, {pipeline_mode = #tpu.pipeline_mode<synchronous>, transform_indices = @transform_13, window_bounds = array<i64: 2, 1, 32>}, {pipeline_mode = #tpu.pipeline_mode<synchronous>, transform_indices = @transform_14, window_bounds = array<i64: 2, 1, 32>}, {pipeline_mode = #tpu.pipeline_mode<synchronous>, transform_indices = @transform_15, window_bounds = array<i64: 2, 1, 32>}, {pipeline_mode = #tpu.pipeline_mode<synchronous>, transform_indices = @transform_16, window_bounds = array<i64: 2, 32, 128>}, {pipeline_mode = #tpu.pipeline_mode<synchronous>, transform_indices = @transform_17, window_bounds = array<i64: 2, 1, 128>}, {pipeline_mode = #tpu.pipeline_mode<synchronous>, transform_indices = @transform_18, window_bounds = array<i64: 2, 128, 32>}, {pipeline_mode = #tpu.pipeline_mode<synchronous>, transform_indices = @transform_19, window_bounds = array<i64: 2, 1, 32>}, {pipeline_mode = #tpu.pipeline_mode<synchronous>, transform_indices = @transform_20, window_bounds = array<i64: 1, 32>}, {pipeline_mode = #tpu.pipeline_mode<synchronous>, transform_indices = @transform_21, window_bounds = array<i64: 1, 32>}, {pipeline_mode = #tpu.pipeline_mode<synchronous>, transform_indices = @transform_22, window_bounds = array<i64: 2, 20>}, {pipeline_mode = #tpu.pipeline_mode<synchronous>, transform_indices = @transform_23, window_bounds = array<i64: 2, 20>}, {pipeline_mode = #tpu.pipeline_mode<synchronous>, transform_indices = @transform_24, window_bounds = array<i64: 32, 512>}, {pipeline_mode = #tpu.pipeline_mode<synchronous>, transform_indices = @transform_25, window_bounds = array<i64: 32, 512>}, {pipeline_mode = #tpu.pipeline_mode<synchronous>, transform_indices = @transform_26, window_bounds = array<i64: 1, 512>}, {pipeline_mode = #tpu.pipeline_mode<synchronous>, transform_indices = @transform_27, window_bounds = array<i64: 1, 512>}, {pipeline_mode = #tpu.pipeline_mode<synchronous>, transform_indices = @transform_28, window_bounds = array<i64: 1, 1>}, {pipeline_mode = #tpu.pipeline_mode<synchronous>, transform_indices = @transform_29, window_bounds = array<i64: 2, 1>}]} {
    %c0 = arith.constant 0 : index
    %c0_0 = arith.constant 0 : index
    %0 = vector.load %arg4[%c0, %c0_0] : memref<20x20xf32, #tpu.memory_space<vmem>>, vector<20x20xf32>
    %c0_1 = arith.constant 0 : index
    %c0_2 = arith.constant 0 : index
    %1 = vector.load %arg1[%c0_1, %c0_2] : memref<20x192xf32, #tpu.memory_space<vmem>>, vector<20x192xf32>
    %c0_3 = arith.constant 0 : index
    %c0_4 = arith.constant 0 : index
    %2 = vector.load %arg2[%c0_3, %c0_4] : memref<192x32xbf16, #tpu.memory_space<vmem>>, vector<192x32xbf16>
    %3 = arith.truncf %1 : vector<20x192xf32> to vector<20x192xbf16>
    %cst = arith.constant dense<0.000000e+00> : vector<20x32xf32>
    %4 = tpu.matmul %3, %2, %cst {dimension_numbers = #tpu.dot_dimension_numbers<[1], [0], [0], [1], [0, 0, 1, 1], [], []>} : vector<20x192xbf16>, vector<192x32xbf16>, vector<20x32xf32> -> vector<20x32xf32>
    %c0_5 = arith.constant 0 : index
    %c0_6 = arith.constant 0 : index
    %5 = vector.load %arg3[%c0_5, %c0_6] : memref<20x32xf32, #tpu.memory_space<vmem>>, vector<20x32xf32>
    %6 = arith.addf %4, %5 : vector<20x32xf32>
    %c0_7 = arith.constant 0 : index
    %c0_8 = arith.constant 0 : index
    %c0_9 = arith.constant 0 : index
    %7 = vector.load %arg5[%c0_7, %c0_8, %c0_9] : memref<2x1x32xf32, #tpu.memory_space<vmem>>, vector<1x1x32xf32>
    %8 = vector.shape_cast %7 : vector<1x1x32xf32> to vector<1x32xf32>
    %c0_10 = arith.constant 0 : index
    %c0_11 = arith.constant 0 : index
    %c0_12 = arith.constant 0 : index
    %9 = vector.load %arg6[%c0_10, %c0_11, %c0_12] : memref<2x1x32xf32, #tpu.memory_space<vmem>>, vector<1x1x32xf32>
    %10 = vector.shape_cast %9 : vector<1x1x32xf32> to vector<1x32xf32>
    %cst_13 = arith.constant dense<0.000000e+00> : vector<20xf32>
    %11 = vector.multi_reduction <add>, %6, %cst_13 [1] : vector<20x32xf32> to vector<20xf32>
    %12 = vector.shape_cast %11 : vector<20xf32> to vector<20x1xf32>
    %cst_14 = arith.constant 3.200000e+01 : f32
    %13 = vector.broadcast %cst_14 : f32 to vector<20x1xf32>
    %14 = arith.divf %12, %13 : vector<20x1xf32>
    %15 = vector.broadcast %14 : vector<20x1xf32> to vector<20x32xf32>
    %16 = arith.subf %6, %15 : vector<20x32xf32>
    %17 = arith.mulf %16, %16 : vector<20x32xf32>
    %cst_15 = arith.constant dense<0.000000e+00> : vector<20xf32>
    %18 = vector.multi_reduction <add>, %17, %cst_15 [1] : vector<20x32xf32> to vector<20xf32>
    %19 = vector.shape_cast %18 : vector<20xf32> to vector<20x1xf32>
    %cst_16 = arith.constant 3.200000e+01 : f32
    %20 = vector.broadcast %cst_16 : f32 to vector<20x1xf32>
    %21 = arith.divf %19, %20 : vector<20x1xf32>
    %cst_17 = arith.constant 9.99999996E-13 : f32
    %22 = vector.broadcast %cst_17 : f32 to vector<20x1xf32>
    %23 = arith.addf %21, %22 : vector<20x1xf32>
    %24 = math.rsqrt %23 : vector<20x1xf32>
    %25 = vector.broadcast %24 : vector<20x1xf32> to vector<20x32xf32>
    %26 = arith.mulf %16, %25 : vector<20x32xf32>
    %27 = vector.broadcast %8 : vector<1x32xf32> to vector<20x32xf32>
    %28 = arith.mulf %26, %27 : vector<20x32xf32>
    %29 = vector.broadcast %10 : vector<1x32xf32> to vector<20x32xf32>
    %30 = arith.addf %28, %29 : vector<20x32xf32>
    %31 = tpu.transpose %30, [1, 0] : vector<20x32xf32> -> vector<32x20xf32>
    %cst_18 = arith.constant 0.000000e+00 : f32
    %32 = vector.broadcast %cst_18 : f32 to vector<20x32xf32>
    %c0_19 = arith.constant 0 : index
    %c0_20 = arith.constant 0 : index
    %c0_21 = arith.constant 0 : index
    %33 = vector.load %arg7[%c0_19, %c0_20, %c0_21] : memref<4x32x16xbf16, #tpu.memory_space<vmem>>, vector<1x32x16xbf16>
    %34 = vector.shape_cast %33 : vector<1x32x16xbf16> to vector<32x16xbf16>
    %35 = arith.truncf %30 : vector<20x32xf32> to vector<20x32xbf16>
    %cst_22 = arith.constant dense<0.000000e+00> : vector<20x16xf32>
    %36 = tpu.matmul %35, %34, %cst_22 {dimension_numbers = #tpu.dot_dimension_numbers<[1], [0], [0], [1], [0, 0, 1, 1], [], []>} : vector<20x32xbf16>, vector<32x16xbf16>, vector<20x16xf32> -> vector<20x16xf32>
    %c0_23 = arith.constant 0 : index
    %c0_24 = arith.constant 0 : index
    %c0_25 = arith.constant 0 : index
    %37 = vector.load %arg8[%c0_23, %c0_24, %c0_25] : memref<4x1x16xf32, #tpu.memory_space<vmem>>, vector<1x1x16xf32>
    %38 = vector.shape_cast %37 : vector<1x1x16xf32> to vector<1x16xf32>
    %39 = vector.broadcast %38 : vector<1x16xf32> to vector<20x16xf32>
    %40 = arith.addf %36, %39 : vector<20x16xf32>
    %c0_26 = arith.constant 0 : index
    %c0_27 = arith.constant 0 : index
    %c0_28 = arith.constant 0 : index
    %41 = vector.load %arg9[%c0_26, %c0_27, %c0_28] : memref<4x16x32xbf16, #tpu.memory_space<vmem>>, vector<1x16x32xbf16>
    %42 = vector.shape_cast %41 : vector<1x16x32xbf16> to vector<16x32xbf16>
    %43 = arith.truncf %31 : vector<32x20xf32> to vector<32x20xbf16>
    %cst_29 = arith.constant dense<0.000000e+00> : vector<16x20xf32>
    %44 = tpu.matmul %42, %43, %cst_29 {dimension_numbers = #tpu.dot_dimension_numbers<[1], [0], [0], [1], [0, 0, 1, 1], [], []>} : vector<16x32xbf16>, vector<32x20xbf16>, vector<16x20xf32> -> vector<16x20xf32>
    %c0_30 = arith.constant 0 : index
    %c0_31 = arith.constant 0 : index
    %c0_32 = arith.constant 0 : index
    %45 = vector.load %arg10[%c0_30, %c0_31, %c0_32] : memref<4x16x1xf32, #tpu.memory_space<vmem>>, vector<1x16x1xf32>
    %46 = vector.shape_cast %45 : vector<1x16x1xf32> to vector<16x1xf32>
    %47 = vector.broadcast %46 : vector<16x1xf32> to vector<16x20xf32>
    %48 = arith.addf %44, %47 : vector<16x20xf32>
    %c0_33 = arith.constant 0 : index
    %c0_34 = arith.constant 0 : index
    %c0_35 = arith.constant 0 : index
    %49 = vector.load %arg11[%c0_33, %c0_34, %c0_35] : memref<4x32x16xbf16, #tpu.memory_space<vmem>>, vector<1x32x16xbf16>
    %50 = vector.shape_cast %49 : vector<1x32x16xbf16> to vector<32x16xbf16>
    %51 = arith.truncf %30 : vector<20x32xf32> to vector<20x32xbf16>
    %cst_36 = arith.constant dense<0.000000e+00> : vector<20x16xf32>
    %52 = tpu.matmul %51, %50, %cst_36 {dimension_numbers = #tpu.dot_dimension_numbers<[1], [0], [0], [1], [0, 0, 1, 1], [], []>} : vector<20x32xbf16>, vector<32x16xbf16>, vector<20x16xf32> -> vector<20x16xf32>
    %c0_37 = arith.constant 0 : index
    %c0_38 = arith.constant 0 : index
    %c0_39 = arith.constant 0 : index
    %53 = vector.load %arg12[%c0_37, %c0_38, %c0_39] : memref<4x1x16xf32, #tpu.memory_space<vmem>>, vector<1x1x16xf32>
    %54 = vector.shape_cast %53 : vector<1x1x16xf32> to vector<1x16xf32>
    %55 = vector.broadcast %54 : vector<1x16xf32> to vector<20x16xf32>
    %56 = arith.addf %52, %55 : vector<20x16xf32>
    %57 = arith.truncf %40 : vector<20x16xf32> to vector<20x16xbf16>
    %58 = arith.truncf %48 : vector<16x20xf32> to vector<16x20xbf16>
    %cst_40 = arith.constant dense<0.000000e+00> : vector<20x20xf32>
    %59 = tpu.matmul %57, %58, %cst_40 {dimension_numbers = #tpu.dot_dimension_numbers<[1], [0], [0], [1], [0, 0, 1, 1], [], []>} : vector<20x16xbf16>, vector<16x20xbf16>, vector<20x20xf32> -> vector<20x20xf32>
    %60 = arith.addf %59, %0 : vector<20x20xf32>
    %cst_41 = arith.constant dense<0xFF800000> : vector<20xf32>
    %61 = vector.multi_reduction <maximumf>, %60, %cst_41 [1] : vector<20x20xf32> to vector<20xf32>
    %62 = vector.shape_cast %61 : vector<20xf32> to vector<20x1xf32>
    %63 = vector.broadcast %62 : vector<20x1xf32> to vector<20x20xf32>
    %64 = arith.subf %60, %63 : vector<20x20xf32>
    %65 = math.exp %64 : vector<20x20xf32>
    %cst_42 = arith.constant dense<0.000000e+00> : vector<20xf32>
    %66 = vector.multi_reduction <add>, %65, %cst_42 [1] : vector<20x20xf32> to vector<20xf32>
    %67 = vector.shape_cast %66 : vector<20xf32> to vector<20x1xf32>
    %68 = tpu.reciprocal %67 {approx = true} : vector<20x1xf32> -> vector<20x1xf32>
    %69 = vector.broadcast %68 : vector<20x1xf32> to vector<20x20xf32>
    %70 = arith.mulf %65, %69 : vector<20x20xf32>
    %71 = arith.truncf %70 : vector<20x20xf32> to vector<20x20xbf16>
    %72 = arith.truncf %56 : vector<20x16xf32> to vector<20x16xbf16>
    %cst_43 = arith.constant dense<0.000000e+00> : vector<20x16xf32>
    %73 = tpu.matmul %71, %72, %cst_43 {dimension_numbers = #tpu.dot_dimension_numbers<[1], [0], [0], [1], [0, 0, 1, 1], [], []>} : vector<20x20xbf16>, vector<20x16xbf16>, vector<20x16xf32> -> vector<20x16xf32>
    %c0_44 = arith.constant 0 : index
    %c0_45 = arith.constant 0 : index
    %c0_46 = arith.constant 0 : index
    %74 = vector.load %arg13[%c0_44, %c0_45, %c0_46] : memref<4x16x32xbf16, #tpu.memory_space<vmem>>, vector<1x16x32xbf16>
    %75 = vector.shape_cast %74 : vector<1x16x32xbf16> to vector<16x32xbf16>
    %76 = arith.truncf %73 : vector<20x16xf32> to vector<20x16xbf16>
    %cst_47 = arith.constant dense<0.000000e+00> : vector<20x32xf32>
    %77 = tpu.matmul %76, %75, %cst_47 {dimension_numbers = #tpu.dot_dimension_numbers<[1], [0], [0], [1], [0, 0, 1, 1], [], []>} : vector<20x16xbf16>, vector<16x32xbf16>, vector<20x32xf32> -> vector<20x32xf32>
    %78 = arith.addf %32, %77 : vector<20x32xf32>
    %c1 = arith.constant 1 : index
    %c0_48 = arith.constant 0 : index
    %c0_49 = arith.constant 0 : index
    %79 = vector.load %arg7[%c1, %c0_48, %c0_49] : memref<4x32x16xbf16, #tpu.memory_space<vmem>>, vector<1x32x16xbf16>
    %80 = vector.shape_cast %79 : vector<1x32x16xbf16> to vector<32x16xbf16>
    %81 = arith.truncf %30 : vector<20x32xf32> to vector<20x32xbf16>
    %cst_50 = arith.constant dense<0.000000e+00> : vector<20x16xf32>
    %82 = tpu.matmul %81, %80, %cst_50 {dimension_numbers = #tpu.dot_dimension_numbers<[1], [0], [0], [1], [0, 0, 1, 1], [], []>} : vector<20x32xbf16>, vector<32x16xbf16>, vector<20x16xf32> -> vector<20x16xf32>
    %c1_51 = arith.constant 1 : index
    %c0_52 = arith.constant 0 : index
    %c0_53 = arith.constant 0 : index
    %83 = vector.load %arg8[%c1_51, %c0_52, %c0_53] : memref<4x1x16xf32, #tpu.memory_space<vmem>>, vector<1x1x16xf32>
    %84 = vector.shape_cast %83 : vector<1x1x16xf32> to vector<1x16xf32>
    %85 = vector.broadcast %84 : vector<1x16xf32> to vector<20x16xf32>
    %86 = arith.addf %82, %85 : vector<20x16xf32>
    %c1_54 = arith.constant 1 : index
    %c0_55 = arith.constant 0 : index
    %c0_56 = arith.constant 0 : index
    %87 = vector.load %arg9[%c1_54, %c0_55, %c0_56] : memref<4x16x32xbf16, #tpu.memory_space<vmem>>, vector<1x16x32xbf16>
    %88 = vector.shape_cast %87 : vector<1x16x32xbf16> to vector<16x32xbf16>
    %89 = arith.truncf %31 : vector<32x20xf32> to vector<32x20xbf16>
    %cst_57 = arith.constant dense<0.000000e+00> : vector<16x20xf32>
    %90 = tpu.matmul %88, %89, %cst_57 {dimension_numbers = #tpu.dot_dimension_numbers<[1], [0], [0], [1], [0, 0, 1, 1], [], []>} : vector<16x32xbf16>, vector<32x20xbf16>, vector<16x20xf32> -> vector<16x20xf32>
    %c1_58 = arith.constant 1 : index
    %c0_59 = arith.constant 0 : index
    %c0_60 = arith.constant 0 : index
    %91 = vector.load %arg10[%c1_58, %c0_59, %c0_60] : memref<4x16x1xf32, #tpu.memory_space<vmem>>, vector<1x16x1xf32>
    %92 = vector.shape_cast %91 : vector<1x16x1xf32> to vector<16x1xf32>
    %93 = vector.broadcast %92 : vector<16x1xf32> to vector<16x20xf32>
    %94 = arith.addf %90, %93 : vector<16x20xf32>
    %c1_61 = arith.constant 1 : index
    %c0_62 = arith.constant 0 : index
    %c0_63 = arith.constant 0 : index
    %95 = vector.load %arg11[%c1_61, %c0_62, %c0_63] : memref<4x32x16xbf16, #tpu.memory_space<vmem>>, vector<1x32x16xbf16>
    %96 = vector.shape_cast %95 : vector<1x32x16xbf16> to vector<32x16xbf16>
    %97 = arith.truncf %30 : vector<20x32xf32> to vector<20x32xbf16>
    %cst_64 = arith.constant dense<0.000000e+00> : vector<20x16xf32>
    %98 = tpu.matmul %97, %96, %cst_64 {dimension_numbers = #tpu.dot_dimension_numbers<[1], [0], [0], [1], [0, 0, 1, 1], [], []>} : vector<20x32xbf16>, vector<32x16xbf16>, vector<20x16xf32> -> vector<20x16xf32>
    %c1_65 = arith.constant 1 : index
    %c0_66 = arith.constant 0 : index
    %c0_67 = arith.constant 0 : index
    %99 = vector.load %arg12[%c1_65, %c0_66, %c0_67] : memref<4x1x16xf32, #tpu.memory_space<vmem>>, vector<1x1x16xf32>
    %100 = vector.shape_cast %99 : vector<1x1x16xf32> to vector<1x16xf32>
    %101 = vector.broadcast %100 : vector<1x16xf32> to vector<20x16xf32>
    %102 = arith.addf %98, %101 : vector<20x16xf32>
    %103 = arith.truncf %86 : vector<20x16xf32> to vector<20x16xbf16>
    %104 = arith.truncf %94 : vector<16x20xf32> to vector<16x20xbf16>
    %cst_68 = arith.constant dense<0.000000e+00> : vector<20x20xf32>
    %105 = tpu.matmul %103, %104, %cst_68 {dimension_numbers = #tpu.dot_dimension_numbers<[1], [0], [0], [1], [0, 0, 1, 1], [], []>} : vector<20x16xbf16>, vector<16x20xbf16>, vector<20x20xf32> -> vector<20x20xf32>
    %106 = arith.addf %105, %0 : vector<20x20xf32>
    %cst_69 = arith.constant dense<0xFF800000> : vector<20xf32>
    %107 = vector.multi_reduction <maximumf>, %106, %cst_69 [1] : vector<20x20xf32> to vector<20xf32>
    %108 = vector.shape_cast %107 : vector<20xf32> to vector<20x1xf32>
    %109 = vector.broadcast %108 : vector<20x1xf32> to vector<20x20xf32>
    %110 = arith.subf %106, %109 : vector<20x20xf32>
    %111 = math.exp %110 : vector<20x20xf32>
    %cst_70 = arith.constant dense<0.000000e+00> : vector<20xf32>
    %112 = vector.multi_reduction <add>, %111, %cst_70 [1] : vector<20x20xf32> to vector<20xf32>
    %113 = vector.shape_cast %112 : vector<20xf32> to vector<20x1xf32>
    %114 = tpu.reciprocal %113 {approx = true} : vector<20x1xf32> -> vector<20x1xf32>
    %115 = vector.broadcast %114 : vector<20x1xf32> to vector<20x20xf32>
    %116 = arith.mulf %111, %115 : vector<20x20xf32>
    %117 = arith.truncf %116 : vector<20x20xf32> to vector<20x20xbf16>
    %118 = arith.truncf %102 : vector<20x16xf32> to vector<20x16xbf16>
    %cst_71 = arith.constant dense<0.000000e+00> : vector<20x16xf32>
    %119 = tpu.matmul %117, %118, %cst_71 {dimension_numbers = #tpu.dot_dimension_numbers<[1], [0], [0], [1], [0, 0, 1, 1], [], []>} : vector<20x20xbf16>, vector<20x16xbf16>, vector<20x16xf32> -> vector<20x16xf32>
    %c1_72 = arith.constant 1 : index
    %c0_73 = arith.constant 0 : index
    %c0_74 = arith.constant 0 : index
    %120 = vector.load %arg13[%c1_72, %c0_73, %c0_74] : memref<4x16x32xbf16, #tpu.memory_space<vmem>>, vector<1x16x32xbf16>
    %121 = vector.shape_cast %120 : vector<1x16x32xbf16> to vector<16x32xbf16>
    %122 = arith.truncf %119 : vector<20x16xf32> to vector<20x16xbf16>
    %cst_75 = arith.constant dense<0.000000e+00> : vector<20x32xf32>
    %123 = tpu.matmul %122, %121, %cst_75 {dimension_numbers = #tpu.dot_dimension_numbers<[1], [0], [0], [1], [0, 0, 1, 1], [], []>} : vector<20x16xbf16>, vector<16x32xbf16>, vector<20x32xf32> -> vector<20x32xf32>
    %124 = arith.addf %78, %123 : vector<20x32xf32>
    %125 = arith.addf %6, %124 : vector<20x32xf32>
    %c0_76 = arith.constant 0 : index
    %c0_77 = arith.constant 0 : index
    %c0_78 = arith.constant 0 : index
    %126 = vector.load %arg14[%c0_76, %c0_77, %c0_78] : memref<2x1x32xf32, #tpu.memory_space<vmem>>, vector<1x1x32xf32>
    %127 = vector.shape_cast %126 : vector<1x1x32xf32> to vector<1x32xf32>
    %128 = vector.broadcast %127 : vector<1x32xf32> to vector<20x32xf32>
    %129 = arith.addf %125, %128 : vector<20x32xf32>
    %c0_79 = arith.constant 0 : index
    %c0_80 = arith.constant 0 : index
    %c0_81 = arith.constant 0 : index
    %130 = vector.load %arg15[%c0_79, %c0_80, %c0_81] : memref<2x1x32xf32, #tpu.memory_space<vmem>>, vector<1x1x32xf32>
    %131 = vector.shape_cast %130 : vector<1x1x32xf32> to vector<1x32xf32>
    %c0_82 = arith.constant 0 : index
    %c0_83 = arith.constant 0 : index
    %c0_84 = arith.constant 0 : index
    %132 = vector.load %arg16[%c0_82, %c0_83, %c0_84] : memref<2x1x32xf32, #tpu.memory_space<vmem>>, vector<1x1x32xf32>
    %133 = vector.shape_cast %132 : vector<1x1x32xf32> to vector<1x32xf32>
    %cst_85 = arith.constant dense<0.000000e+00> : vector<20xf32>
    %134 = vector.multi_reduction <add>, %129, %cst_85 [1] : vector<20x32xf32> to vector<20xf32>
    %135 = vector.shape_cast %134 : vector<20xf32> to vector<20x1xf32>
    %cst_86 = arith.constant 3.200000e+01 : f32
    %136 = vector.broadcast %cst_86 : f32 to vector<20x1xf32>
    %137 = arith.divf %135, %136 : vector<20x1xf32>
    %138 = vector.broadcast %137 : vector<20x1xf32> to vector<20x32xf32>
    %139 = arith.subf %129, %138 : vector<20x32xf32>
    %140 = arith.mulf %139, %139 : vector<20x32xf32>
    %cst_87 = arith.constant dense<0.000000e+00> : vector<20xf32>
    %141 = vector.multi_reduction <add>, %140, %cst_87 [1] : vector<20x32xf32> to vector<20xf32>
    %142 = vector.shape_cast %141 : vector<20xf32> to vector<20x1xf32>
    %cst_88 = arith.constant 3.200000e+01 : f32
    %143 = vector.broadcast %cst_88 : f32 to vector<20x1xf32>
    %144 = arith.divf %142, %143 : vector<20x1xf32>
    %cst_89 = arith.constant 9.99999996E-13 : f32
    %145 = vector.broadcast %cst_89 : f32 to vector<20x1xf32>
    %146 = arith.addf %144, %145 : vector<20x1xf32>
    %147 = math.rsqrt %146 : vector<20x1xf32>
    %148 = vector.broadcast %147 : vector<20x1xf32> to vector<20x32xf32>
    %149 = arith.mulf %139, %148 : vector<20x32xf32>
    %150 = vector.broadcast %131 : vector<1x32xf32> to vector<20x32xf32>
    %151 = arith.mulf %149, %150 : vector<20x32xf32>
    %152 = vector.broadcast %133 : vector<1x32xf32> to vector<20x32xf32>
    %153 = arith.addf %151, %152 : vector<20x32xf32>
    %c0_90 = arith.constant 0 : index
    %c0_91 = arith.constant 0 : index
    %c0_92 = arith.constant 0 : index
    %154 = vector.load %arg17[%c0_90, %c0_91, %c0_92] : memref<2x32x128xbf16, #tpu.memory_space<vmem>>, vector<1x32x128xbf16>
    %155 = vector.shape_cast %154 : vector<1x32x128xbf16> to vector<32x128xbf16>
    %156 = arith.truncf %153 : vector<20x32xf32> to vector<20x32xbf16>
    %cst_93 = arith.constant dense<0.000000e+00> : vector<20x128xf32>
    %157 = tpu.matmul %156, %155, %cst_93 {dimension_numbers = #tpu.dot_dimension_numbers<[1], [0], [0], [1], [0, 0, 1, 1], [], []>} : vector<20x32xbf16>, vector<32x128xbf16>, vector<20x128xf32> -> vector<20x128xf32>
    %c0_94 = arith.constant 0 : index
    %c0_95 = arith.constant 0 : index
    %c0_96 = arith.constant 0 : index
    %158 = vector.load %arg18[%c0_94, %c0_95, %c0_96] : memref<2x1x128xf32, #tpu.memory_space<vmem>>, vector<1x1x128xf32>
    %159 = vector.shape_cast %158 : vector<1x1x128xf32> to vector<1x128xf32>
    %160 = vector.broadcast %159 : vector<1x128xf32> to vector<20x128xf32>
    %161 = arith.addf %157, %160 : vector<20x128xf32>
    %cst_97 = arith.constant 5.000000e-01 : f32
    %162 = vector.broadcast %cst_97 : f32 to vector<20x128xf32>
    %163 = arith.mulf %162, %161 : vector<20x128xf32>
    %cst_98 = arith.constant 4.471500e-02 : f32
    %164 = vector.broadcast %cst_98 : f32 to vector<20x128xf32>
    %165 = arith.mulf %164, %161 : vector<20x128xf32>
    %166 = arith.mulf %165, %161 : vector<20x128xf32>
    %167 = arith.mulf %166, %161 : vector<20x128xf32>
    %168 = arith.addf %161, %167 : vector<20x128xf32>
    %cst_99 = arith.constant 0.797884583 : f32
    %169 = vector.broadcast %cst_99 : f32 to vector<20x128xf32>
    %170 = arith.mulf %169, %168 : vector<20x128xf32>
    %171 = math.tanh %170 : vector<20x128xf32>
    %cst_100 = arith.constant 1.000000e+00 : f32
    %172 = vector.broadcast %cst_100 : f32 to vector<20x128xf32>
    %173 = arith.addf %172, %171 : vector<20x128xf32>
    %174 = arith.mulf %163, %173 : vector<20x128xf32>
    %c0_101 = arith.constant 0 : index
    %c0_102 = arith.constant 0 : index
    %c0_103 = arith.constant 0 : index
    %175 = vector.load %arg19[%c0_101, %c0_102, %c0_103] : memref<2x128x32xbf16, #tpu.memory_space<vmem>>, vector<1x128x32xbf16>
    %176 = vector.shape_cast %175 : vector<1x128x32xbf16> to vector<128x32xbf16>
    %177 = arith.truncf %174 : vector<20x128xf32> to vector<20x128xbf16>
    %cst_104 = arith.constant dense<0.000000e+00> : vector<20x32xf32>
    %178 = tpu.matmul %177, %176, %cst_104 {dimension_numbers = #tpu.dot_dimension_numbers<[1], [0], [0], [1], [0, 0, 1, 1], [], []>} : vector<20x128xbf16>, vector<128x32xbf16>, vector<20x32xf32> -> vector<20x32xf32>
    %179 = arith.addf %129, %178 : vector<20x32xf32>
    %c0_105 = arith.constant 0 : index
    %c0_106 = arith.constant 0 : index
    %c0_107 = arith.constant 0 : index
    %180 = vector.load %arg20[%c0_105, %c0_106, %c0_107] : memref<2x1x32xf32, #tpu.memory_space<vmem>>, vector<1x1x32xf32>
    %181 = vector.shape_cast %180 : vector<1x1x32xf32> to vector<1x32xf32>
    %182 = vector.broadcast %181 : vector<1x32xf32> to vector<20x32xf32>
    %183 = arith.addf %179, %182 : vector<20x32xf32>
    %c1_108 = arith.constant 1 : index
    %c0_109 = arith.constant 0 : index
    %c0_110 = arith.constant 0 : index
    %184 = vector.load %arg5[%c1_108, %c0_109, %c0_110] : memref<2x1x32xf32, #tpu.memory_space<vmem>>, vector<1x1x32xf32>
    %185 = vector.shape_cast %184 : vector<1x1x32xf32> to vector<1x32xf32>
    %c1_111 = arith.constant 1 : index
    %c0_112 = arith.constant 0 : index
    %c0_113 = arith.constant 0 : index
    %186 = vector.load %arg6[%c1_111, %c0_112, %c0_113] : memref<2x1x32xf32, #tpu.memory_space<vmem>>, vector<1x1x32xf32>
    %187 = vector.shape_cast %186 : vector<1x1x32xf32> to vector<1x32xf32>
    %cst_114 = arith.constant dense<0.000000e+00> : vector<20xf32>
    %188 = vector.multi_reduction <add>, %183, %cst_114 [1] : vector<20x32xf32> to vector<20xf32>
    %189 = vector.shape_cast %188 : vector<20xf32> to vector<20x1xf32>
    %cst_115 = arith.constant 3.200000e+01 : f32
    %190 = vector.broadcast %cst_115 : f32 to vector<20x1xf32>
    %191 = arith.divf %189, %190 : vector<20x1xf32>
    %192 = vector.broadcast %191 : vector<20x1xf32> to vector<20x32xf32>
    %193 = arith.subf %183, %192 : vector<20x32xf32>
    %194 = arith.mulf %193, %193 : vector<20x32xf32>
    %cst_116 = arith.constant dense<0.000000e+00> : vector<20xf32>
    %195 = vector.multi_reduction <add>, %194, %cst_116 [1] : vector<20x32xf32> to vector<20xf32>
    %196 = vector.shape_cast %195 : vector<20xf32> to vector<20x1xf32>
    %cst_117 = arith.constant 3.200000e+01 : f32
    %197 = vector.broadcast %cst_117 : f32 to vector<20x1xf32>
    %198 = arith.divf %196, %197 : vector<20x1xf32>
    %cst_118 = arith.constant 9.99999996E-13 : f32
    %199 = vector.broadcast %cst_118 : f32 to vector<20x1xf32>
    %200 = arith.addf %198, %199 : vector<20x1xf32>
    %201 = math.rsqrt %200 : vector<20x1xf32>
    %202 = vector.broadcast %201 : vector<20x1xf32> to vector<20x32xf32>
    %203 = arith.mulf %193, %202 : vector<20x32xf32>
    %204 = vector.broadcast %185 : vector<1x32xf32> to vector<20x32xf32>
    %205 = arith.mulf %203, %204 : vector<20x32xf32>
    %206 = vector.broadcast %187 : vector<1x32xf32> to vector<20x32xf32>
    %207 = arith.addf %205, %206 : vector<20x32xf32>
    %208 = tpu.transpose %207, [1, 0] : vector<20x32xf32> -> vector<32x20xf32>
    %cst_119 = arith.constant 0.000000e+00 : f32
    %209 = vector.broadcast %cst_119 : f32 to vector<20x32xf32>
    %c2 = arith.constant 2 : index
    %c0_120 = arith.constant 0 : index
    %c0_121 = arith.constant 0 : index
    %210 = vector.load %arg7[%c2, %c0_120, %c0_121] : memref<4x32x16xbf16, #tpu.memory_space<vmem>>, vector<1x32x16xbf16>
    %211 = vector.shape_cast %210 : vector<1x32x16xbf16> to vector<32x16xbf16>
    %212 = arith.truncf %207 : vector<20x32xf32> to vector<20x32xbf16>
    %cst_122 = arith.constant dense<0.000000e+00> : vector<20x16xf32>
    %213 = tpu.matmul %212, %211, %cst_122 {dimension_numbers = #tpu.dot_dimension_numbers<[1], [0], [0], [1], [0, 0, 1, 1], [], []>} : vector<20x32xbf16>, vector<32x16xbf16>, vector<20x16xf32> -> vector<20x16xf32>
    %c2_123 = arith.constant 2 : index
    %c0_124 = arith.constant 0 : index
    %c0_125 = arith.constant 0 : index
    %214 = vector.load %arg8[%c2_123, %c0_124, %c0_125] : memref<4x1x16xf32, #tpu.memory_space<vmem>>, vector<1x1x16xf32>
    %215 = vector.shape_cast %214 : vector<1x1x16xf32> to vector<1x16xf32>
    %216 = vector.broadcast %215 : vector<1x16xf32> to vector<20x16xf32>
    %217 = arith.addf %213, %216 : vector<20x16xf32>
    %c2_126 = arith.constant 2 : index
    %c0_127 = arith.constant 0 : index
    %c0_128 = arith.constant 0 : index
    %218 = vector.load %arg9[%c2_126, %c0_127, %c0_128] : memref<4x16x32xbf16, #tpu.memory_space<vmem>>, vector<1x16x32xbf16>
    %219 = vector.shape_cast %218 : vector<1x16x32xbf16> to vector<16x32xbf16>
    %220 = arith.truncf %208 : vector<32x20xf32> to vector<32x20xbf16>
    %cst_129 = arith.constant dense<0.000000e+00> : vector<16x20xf32>
    %221 = tpu.matmul %219, %220, %cst_129 {dimension_numbers = #tpu.dot_dimension_numbers<[1], [0], [0], [1], [0, 0, 1, 1], [], []>} : vector<16x32xbf16>, vector<32x20xbf16>, vector<16x20xf32> -> vector<16x20xf32>
    %c2_130 = arith.constant 2 : index
    %c0_131 = arith.constant 0 : index
    %c0_132 = arith.constant 0 : index
    %222 = vector.load %arg10[%c2_130, %c0_131, %c0_132] : memref<4x16x1xf32, #tpu.memory_space<vmem>>, vector<1x16x1xf32>
    %223 = vector.shape_cast %222 : vector<1x16x1xf32> to vector<16x1xf32>
    %224 = vector.broadcast %223 : vector<16x1xf32> to vector<16x20xf32>
    %225 = arith.addf %221, %224 : vector<16x20xf32>
    %c2_133 = arith.constant 2 : index
    %c0_134 = arith.constant 0 : index
    %c0_135 = arith.constant 0 : index
    %226 = vector.load %arg11[%c2_133, %c0_134, %c0_135] : memref<4x32x16xbf16, #tpu.memory_space<vmem>>, vector<1x32x16xbf16>
    %227 = vector.shape_cast %226 : vector<1x32x16xbf16> to vector<32x16xbf16>
    %228 = arith.truncf %207 : vector<20x32xf32> to vector<20x32xbf16>
    %cst_136 = arith.constant dense<0.000000e+00> : vector<20x16xf32>
    %229 = tpu.matmul %228, %227, %cst_136 {dimension_numbers = #tpu.dot_dimension_numbers<[1], [0], [0], [1], [0, 0, 1, 1], [], []>} : vector<20x32xbf16>, vector<32x16xbf16>, vector<20x16xf32> -> vector<20x16xf32>
    %c2_137 = arith.constant 2 : index
    %c0_138 = arith.constant 0 : index
    %c0_139 = arith.constant 0 : index
    %230 = vector.load %arg12[%c2_137, %c0_138, %c0_139] : memref<4x1x16xf32, #tpu.memory_space<vmem>>, vector<1x1x16xf32>
    %231 = vector.shape_cast %230 : vector<1x1x16xf32> to vector<1x16xf32>
    %232 = vector.broadcast %231 : vector<1x16xf32> to vector<20x16xf32>
    %233 = arith.addf %229, %232 : vector<20x16xf32>
    %234 = arith.truncf %217 : vector<20x16xf32> to vector<20x16xbf16>
    %235 = arith.truncf %225 : vector<16x20xf32> to vector<16x20xbf16>
    %cst_140 = arith.constant dense<0.000000e+00> : vector<20x20xf32>
    %236 = tpu.matmul %234, %235, %cst_140 {dimension_numbers = #tpu.dot_dimension_numbers<[1], [0], [0], [1], [0, 0, 1, 1], [], []>} : vector<20x16xbf16>, vector<16x20xbf16>, vector<20x20xf32> -> vector<20x20xf32>
    %237 = arith.addf %236, %0 : vector<20x20xf32>
    %cst_141 = arith.constant dense<0xFF800000> : vector<20xf32>
    %238 = vector.multi_reduction <maximumf>, %237, %cst_141 [1] : vector<20x20xf32> to vector<20xf32>
    %239 = vector.shape_cast %238 : vector<20xf32> to vector<20x1xf32>
    %240 = vector.broadcast %239 : vector<20x1xf32> to vector<20x20xf32>
    %241 = arith.subf %237, %240 : vector<20x20xf32>
    %242 = math.exp %241 : vector<20x20xf32>
    %cst_142 = arith.constant dense<0.000000e+00> : vector<20xf32>
    %243 = vector.multi_reduction <add>, %242, %cst_142 [1] : vector<20x20xf32> to vector<20xf32>
    %244 = vector.shape_cast %243 : vector<20xf32> to vector<20x1xf32>
    %245 = tpu.reciprocal %244 {approx = true} : vector<20x1xf32> -> vector<20x1xf32>
    %246 = vector.broadcast %245 : vector<20x1xf32> to vector<20x20xf32>
    %247 = arith.mulf %242, %246 : vector<20x20xf32>
    %248 = arith.truncf %247 : vector<20x20xf32> to vector<20x20xbf16>
    %249 = arith.truncf %233 : vector<20x16xf32> to vector<20x16xbf16>
    %cst_143 = arith.constant dense<0.000000e+00> : vector<20x16xf32>
    %250 = tpu.matmul %248, %249, %cst_143 {dimension_numbers = #tpu.dot_dimension_numbers<[1], [0], [0], [1], [0, 0, 1, 1], [], []>} : vector<20x20xbf16>, vector<20x16xbf16>, vector<20x16xf32> -> vector<20x16xf32>
    %c2_144 = arith.constant 2 : index
    %c0_145 = arith.constant 0 : index
    %c0_146 = arith.constant 0 : index
    %251 = vector.load %arg13[%c2_144, %c0_145, %c0_146] : memref<4x16x32xbf16, #tpu.memory_space<vmem>>, vector<1x16x32xbf16>
    %252 = vector.shape_cast %251 : vector<1x16x32xbf16> to vector<16x32xbf16>
    %253 = arith.truncf %250 : vector<20x16xf32> to vector<20x16xbf16>
    %cst_147 = arith.constant dense<0.000000e+00> : vector<20x32xf32>
    %254 = tpu.matmul %253, %252, %cst_147 {dimension_numbers = #tpu.dot_dimension_numbers<[1], [0], [0], [1], [0, 0, 1, 1], [], []>} : vector<20x16xbf16>, vector<16x32xbf16>, vector<20x32xf32> -> vector<20x32xf32>
    %255 = arith.addf %209, %254 : vector<20x32xf32>
    %c3 = arith.constant 3 : index
    %c0_148 = arith.constant 0 : index
    %c0_149 = arith.constant 0 : index
    %256 = vector.load %arg7[%c3, %c0_148, %c0_149] : memref<4x32x16xbf16, #tpu.memory_space<vmem>>, vector<1x32x16xbf16>
    %257 = vector.shape_cast %256 : vector<1x32x16xbf16> to vector<32x16xbf16>
    %258 = arith.truncf %207 : vector<20x32xf32> to vector<20x32xbf16>
    %cst_150 = arith.constant dense<0.000000e+00> : vector<20x16xf32>
    %259 = tpu.matmul %258, %257, %cst_150 {dimension_numbers = #tpu.dot_dimension_numbers<[1], [0], [0], [1], [0, 0, 1, 1], [], []>} : vector<20x32xbf16>, vector<32x16xbf16>, vector<20x16xf32> -> vector<20x16xf32>
    %c3_151 = arith.constant 3 : index
    %c0_152 = arith.constant 0 : index
    %c0_153 = arith.constant 0 : index
    %260 = vector.load %arg8[%c3_151, %c0_152, %c0_153] : memref<4x1x16xf32, #tpu.memory_space<vmem>>, vector<1x1x16xf32>
    %261 = vector.shape_cast %260 : vector<1x1x16xf32> to vector<1x16xf32>
    %262 = vector.broadcast %261 : vector<1x16xf32> to vector<20x16xf32>
    %263 = arith.addf %259, %262 : vector<20x16xf32>
    %c3_154 = arith.constant 3 : index
    %c0_155 = arith.constant 0 : index
    %c0_156 = arith.constant 0 : index
    %264 = vector.load %arg9[%c3_154, %c0_155, %c0_156] : memref<4x16x32xbf16, #tpu.memory_space<vmem>>, vector<1x16x32xbf16>
    %265 = vector.shape_cast %264 : vector<1x16x32xbf16> to vector<16x32xbf16>
    %266 = arith.truncf %208 : vector<32x20xf32> to vector<32x20xbf16>
    %cst_157 = arith.constant dense<0.000000e+00> : vector<16x20xf32>
    %267 = tpu.matmul %265, %266, %cst_157 {dimension_numbers = #tpu.dot_dimension_numbers<[1], [0], [0], [1], [0, 0, 1, 1], [], []>} : vector<16x32xbf16>, vector<32x20xbf16>, vector<16x20xf32> -> vector<16x20xf32>
    %c3_158 = arith.constant 3 : index
    %c0_159 = arith.constant 0 : index
    %c0_160 = arith.constant 0 : index
    %268 = vector.load %arg10[%c3_158, %c0_159, %c0_160] : memref<4x16x1xf32, #tpu.memory_space<vmem>>, vector<1x16x1xf32>
    %269 = vector.shape_cast %268 : vector<1x16x1xf32> to vector<16x1xf32>
    %270 = vector.broadcast %269 : vector<16x1xf32> to vector<16x20xf32>
    %271 = arith.addf %267, %270 : vector<16x20xf32>
    %c3_161 = arith.constant 3 : index
    %c0_162 = arith.constant 0 : index
    %c0_163 = arith.constant 0 : index
    %272 = vector.load %arg11[%c3_161, %c0_162, %c0_163] : memref<4x32x16xbf16, #tpu.memory_space<vmem>>, vector<1x32x16xbf16>
    %273 = vector.shape_cast %272 : vector<1x32x16xbf16> to vector<32x16xbf16>
    %274 = arith.truncf %207 : vector<20x32xf32> to vector<20x32xbf16>
    %cst_164 = arith.constant dense<0.000000e+00> : vector<20x16xf32>
    %275 = tpu.matmul %274, %273, %cst_164 {dimension_numbers = #tpu.dot_dimension_numbers<[1], [0], [0], [1], [0, 0, 1, 1], [], []>} : vector<20x32xbf16>, vector<32x16xbf16>, vector<20x16xf32> -> vector<20x16xf32>
    %c3_165 = arith.constant 3 : index
    %c0_166 = arith.constant 0 : index
    %c0_167 = arith.constant 0 : index
    %276 = vector.load %arg12[%c3_165, %c0_166, %c0_167] : memref<4x1x16xf32, #tpu.memory_space<vmem>>, vector<1x1x16xf32>
    %277 = vector.shape_cast %276 : vector<1x1x16xf32> to vector<1x16xf32>
    %278 = vector.broadcast %277 : vector<1x16xf32> to vector<20x16xf32>
    %279 = arith.addf %275, %278 : vector<20x16xf32>
    %280 = arith.truncf %263 : vector<20x16xf32> to vector<20x16xbf16>
    %281 = arith.truncf %271 : vector<16x20xf32> to vector<16x20xbf16>
    %cst_168 = arith.constant dense<0.000000e+00> : vector<20x20xf32>
    %282 = tpu.matmul %280, %281, %cst_168 {dimension_numbers = #tpu.dot_dimension_numbers<[1], [0], [0], [1], [0, 0, 1, 1], [], []>} : vector<20x16xbf16>, vector<16x20xbf16>, vector<20x20xf32> -> vector<20x20xf32>
    %283 = arith.addf %282, %0 : vector<20x20xf32>
    %cst_169 = arith.constant dense<0xFF800000> : vector<20xf32>
    %284 = vector.multi_reduction <maximumf>, %283, %cst_169 [1] : vector<20x20xf32> to vector<20xf32>
    %285 = vector.shape_cast %284 : vector<20xf32> to vector<20x1xf32>
    %286 = vector.broadcast %285 : vector<20x1xf32> to vector<20x20xf32>
    %287 = arith.subf %283, %286 : vector<20x20xf32>
    %288 = math.exp %287 : vector<20x20xf32>
    %cst_170 = arith.constant dense<0.000000e+00> : vector<20xf32>
    %289 = vector.multi_reduction <add>, %288, %cst_170 [1] : vector<20x20xf32> to vector<20xf32>
    %290 = vector.shape_cast %289 : vector<20xf32> to vector<20x1xf32>
    %291 = tpu.reciprocal %290 {approx = true} : vector<20x1xf32> -> vector<20x1xf32>
    %292 = vector.broadcast %291 : vector<20x1xf32> to vector<20x20xf32>
    %293 = arith.mulf %288, %292 : vector<20x20xf32>
    %294 = arith.truncf %293 : vector<20x20xf32> to vector<20x20xbf16>
    %295 = arith.truncf %279 : vector<20x16xf32> to vector<20x16xbf16>
    %cst_171 = arith.constant dense<0.000000e+00> : vector<20x16xf32>
    %296 = tpu.matmul %294, %295, %cst_171 {dimension_numbers = #tpu.dot_dimension_numbers<[1], [0], [0], [1], [0, 0, 1, 1], [], []>} : vector<20x20xbf16>, vector<20x16xbf16>, vector<20x16xf32> -> vector<20x16xf32>
    %c3_172 = arith.constant 3 : index
    %c0_173 = arith.constant 0 : index
    %c0_174 = arith.constant 0 : index
    %297 = vector.load %arg13[%c3_172, %c0_173, %c0_174] : memref<4x16x32xbf16, #tpu.memory_space<vmem>>, vector<1x16x32xbf16>
    %298 = vector.shape_cast %297 : vector<1x16x32xbf16> to vector<16x32xbf16>
    %299 = arith.truncf %296 : vector<20x16xf32> to vector<20x16xbf16>
    %cst_175 = arith.constant dense<0.000000e+00> : vector<20x32xf32>
    %300 = tpu.matmul %299, %298, %cst_175 {dimension_numbers = #tpu.dot_dimension_numbers<[1], [0], [0], [1], [0, 0, 1, 1], [], []>} : vector<20x16xbf16>, vector<16x32xbf16>, vector<20x32xf32> -> vector<20x32xf32>
    %301 = arith.addf %255, %300 : vector<20x32xf32>
    %302 = arith.addf %183, %301 : vector<20x32xf32>
    %c1_176 = arith.constant 1 : index
    %c0_177 = arith.constant 0 : index
    %c0_178 = arith.constant 0 : index
    %303 = vector.load %arg14[%c1_176, %c0_177, %c0_178] : memref<2x1x32xf32, #tpu.memory_space<vmem>>, vector<1x1x32xf32>
    %304 = vector.shape_cast %303 : vector<1x1x32xf32> to vector<1x32xf32>
    %305 = vector.broadcast %304 : vector<1x32xf32> to vector<20x32xf32>
    %306 = arith.addf %302, %305 : vector<20x32xf32>
    %c1_179 = arith.constant 1 : index
    %c0_180 = arith.constant 0 : index
    %c0_181 = arith.constant 0 : index
    %307 = vector.load %arg15[%c1_179, %c0_180, %c0_181] : memref<2x1x32xf32, #tpu.memory_space<vmem>>, vector<1x1x32xf32>
    %308 = vector.shape_cast %307 : vector<1x1x32xf32> to vector<1x32xf32>
    %c1_182 = arith.constant 1 : index
    %c0_183 = arith.constant 0 : index
    %c0_184 = arith.constant 0 : index
    %309 = vector.load %arg16[%c1_182, %c0_183, %c0_184] : memref<2x1x32xf32, #tpu.memory_space<vmem>>, vector<1x1x32xf32>
    %310 = vector.shape_cast %309 : vector<1x1x32xf32> to vector<1x32xf32>
    %cst_185 = arith.constant dense<0.000000e+00> : vector<20xf32>
    %311 = vector.multi_reduction <add>, %306, %cst_185 [1] : vector<20x32xf32> to vector<20xf32>
    %312 = vector.shape_cast %311 : vector<20xf32> to vector<20x1xf32>
    %cst_186 = arith.constant 3.200000e+01 : f32
    %313 = vector.broadcast %cst_186 : f32 to vector<20x1xf32>
    %314 = arith.divf %312, %313 : vector<20x1xf32>
    %315 = vector.broadcast %314 : vector<20x1xf32> to vector<20x32xf32>
    %316 = arith.subf %306, %315 : vector<20x32xf32>
    %317 = arith.mulf %316, %316 : vector<20x32xf32>
    %cst_187 = arith.constant dense<0.000000e+00> : vector<20xf32>
    %318 = vector.multi_reduction <add>, %317, %cst_187 [1] : vector<20x32xf32> to vector<20xf32>
    %319 = vector.shape_cast %318 : vector<20xf32> to vector<20x1xf32>
    %cst_188 = arith.constant 3.200000e+01 : f32
    %320 = vector.broadcast %cst_188 : f32 to vector<20x1xf32>
    %321 = arith.divf %319, %320 : vector<20x1xf32>
    %cst_189 = arith.constant 9.99999996E-13 : f32
    %322 = vector.broadcast %cst_189 : f32 to vector<20x1xf32>
    %323 = arith.addf %321, %322 : vector<20x1xf32>
    %324 = math.rsqrt %323 : vector<20x1xf32>
    %325 = vector.broadcast %324 : vector<20x1xf32> to vector<20x32xf32>
    %326 = arith.mulf %316, %325 : vector<20x32xf32>
    %327 = vector.broadcast %308 : vector<1x32xf32> to vector<20x32xf32>
    %328 = arith.mulf %326, %327 : vector<20x32xf32>
    %329 = vector.broadcast %310 : vector<1x32xf32> to vector<20x32xf32>
    %330 = arith.addf %328, %329 : vector<20x32xf32>
    %c1_190 = arith.constant 1 : index
    %c0_191 = arith.constant 0 : index
    %c0_192 = arith.constant 0 : index
    %331 = vector.load %arg17[%c1_190, %c0_191, %c0_192] : memref<2x32x128xbf16, #tpu.memory_space<vmem>>, vector<1x32x128xbf16>
    %332 = vector.shape_cast %331 : vector<1x32x128xbf16> to vector<32x128xbf16>
    %333 = arith.truncf %330 : vector<20x32xf32> to vector<20x32xbf16>
    %cst_193 = arith.constant dense<0.000000e+00> : vector<20x128xf32>
    %334 = tpu.matmul %333, %332, %cst_193 {dimension_numbers = #tpu.dot_dimension_numbers<[1], [0], [0], [1], [0, 0, 1, 1], [], []>} : vector<20x32xbf16>, vector<32x128xbf16>, vector<20x128xf32> -> vector<20x128xf32>
    %c1_194 = arith.constant 1 : index
    %c0_195 = arith.constant 0 : index
    %c0_196 = arith.constant 0 : index
    %335 = vector.load %arg18[%c1_194, %c0_195, %c0_196] : memref<2x1x128xf32, #tpu.memory_space<vmem>>, vector<1x1x128xf32>
    %336 = vector.shape_cast %335 : vector<1x1x128xf32> to vector<1x128xf32>
    %337 = vector.broadcast %336 : vector<1x128xf32> to vector<20x128xf32>
    %338 = arith.addf %334, %337 : vector<20x128xf32>
    %cst_197 = arith.constant 5.000000e-01 : f32
    %339 = vector.broadcast %cst_197 : f32 to vector<20x128xf32>
    %340 = arith.mulf %339, %338 : vector<20x128xf32>
    %cst_198 = arith.constant 4.471500e-02 : f32
    %341 = vector.broadcast %cst_198 : f32 to vector<20x128xf32>
    %342 = arith.mulf %341, %338 : vector<20x128xf32>
    %343 = arith.mulf %342, %338 : vector<20x128xf32>
    %344 = arith.mulf %343, %338 : vector<20x128xf32>
    %345 = arith.addf %338, %344 : vector<20x128xf32>
    %cst_199 = arith.constant 0.797884583 : f32
    %346 = vector.broadcast %cst_199 : f32 to vector<20x128xf32>
    %347 = arith.mulf %346, %345 : vector<20x128xf32>
    %348 = math.tanh %347 : vector<20x128xf32>
    %cst_200 = arith.constant 1.000000e+00 : f32
    %349 = vector.broadcast %cst_200 : f32 to vector<20x128xf32>
    %350 = arith.addf %349, %348 : vector<20x128xf32>
    %351 = arith.mulf %340, %350 : vector<20x128xf32>
    %c1_201 = arith.constant 1 : index
    %c0_202 = arith.constant 0 : index
    %c0_203 = arith.constant 0 : index
    %352 = vector.load %arg19[%c1_201, %c0_202, %c0_203] : memref<2x128x32xbf16, #tpu.memory_space<vmem>>, vector<1x128x32xbf16>
    %353 = vector.shape_cast %352 : vector<1x128x32xbf16> to vector<128x32xbf16>
    %354 = arith.truncf %351 : vector<20x128xf32> to vector<20x128xbf16>
    %cst_204 = arith.constant dense<0.000000e+00> : vector<20x32xf32>
    %355 = tpu.matmul %354, %353, %cst_204 {dimension_numbers = #tpu.dot_dimension_numbers<[1], [0], [0], [1], [0, 0, 1, 1], [], []>} : vector<20x128xbf16>, vector<128x32xbf16>, vector<20x32xf32> -> vector<20x32xf32>
    %356 = arith.addf %306, %355 : vector<20x32xf32>
    %c1_205 = arith.constant 1 : index
    %c0_206 = arith.constant 0 : index
    %c0_207 = arith.constant 0 : index
    %357 = vector.load %arg20[%c1_205, %c0_206, %c0_207] : memref<2x1x32xf32, #tpu.memory_space<vmem>>, vector<1x1x32xf32>
    %358 = vector.shape_cast %357 : vector<1x1x32xf32> to vector<1x32xf32>
    %359 = vector.broadcast %358 : vector<1x32xf32> to vector<20x32xf32>
    %360 = arith.addf %356, %359 : vector<20x32xf32>
    %c0_208 = arith.constant 0 : index
    %c0_209 = arith.constant 0 : index
    %361 = vector.load %arg23[%c0_208, %c0_209] : memref<2x20xf32, #tpu.memory_space<vmem>>, vector<2x20xf32>
    %362 = arith.truncf %361 : vector<2x20xf32> to vector<2x20xbf16>
    %363 = arith.truncf %360 : vector<20x32xf32> to vector<20x32xbf16>
    %cst_210 = arith.constant dense<0.000000e+00> : vector<2x32xf32>
    %364 = tpu.matmul %362, %363, %cst_210 {dimension_numbers = #tpu.dot_dimension_numbers<[1], [0], [0], [1], [0, 0, 1, 1], [], []>} : vector<2x20xbf16>, vector<20x32xbf16>, vector<2x32xf32> -> vector<2x32xf32>
    %c0_211 = arith.constant 0 : index
    %c0_212 = arith.constant 0 : index
    %365 = vector.load %arg21[%c0_211, %c0_212] : memref<1x32xf32, #tpu.memory_space<vmem>>, vector<1x32xf32>
    %c0_213 = arith.constant 0 : index
    %c0_214 = arith.constant 0 : index
    %366 = vector.load %arg22[%c0_213, %c0_214] : memref<1x32xf32, #tpu.memory_space<vmem>>, vector<1x32xf32>
    %cst_215 = arith.constant dense<0.000000e+00> : vector<2xf32>
    %367 = vector.multi_reduction <add>, %364, %cst_215 [1] : vector<2x32xf32> to vector<2xf32>
    %368 = vector.shape_cast %367 : vector<2xf32> to vector<2x1xf32>
    %cst_216 = arith.constant 3.200000e+01 : f32
    %369 = vector.broadcast %cst_216 : f32 to vector<2x1xf32>
    %370 = arith.divf %368, %369 : vector<2x1xf32>
    %371 = vector.broadcast %370 : vector<2x1xf32> to vector<2x32xf32>
    %372 = arith.subf %364, %371 : vector<2x32xf32>
    %373 = arith.mulf %372, %372 : vector<2x32xf32>
    %cst_217 = arith.constant dense<0.000000e+00> : vector<2xf32>
    %374 = vector.multi_reduction <add>, %373, %cst_217 [1] : vector<2x32xf32> to vector<2xf32>
    %375 = vector.shape_cast %374 : vector<2xf32> to vector<2x1xf32>
    %cst_218 = arith.constant 3.200000e+01 : f32
    %376 = vector.broadcast %cst_218 : f32 to vector<2x1xf32>
    %377 = arith.divf %375, %376 : vector<2x1xf32>
    %cst_219 = arith.constant 9.99999996E-13 : f32
    %378 = vector.broadcast %cst_219 : f32 to vector<2x1xf32>
    %379 = arith.addf %377, %378 : vector<2x1xf32>
    %380 = math.rsqrt %379 : vector<2x1xf32>
    %381 = vector.broadcast %380 : vector<2x1xf32> to vector<2x32xf32>
    %382 = arith.mulf %372, %381 : vector<2x32xf32>
    %383 = vector.broadcast %365 : vector<1x32xf32> to vector<2x32xf32>
    %384 = arith.mulf %382, %383 : vector<2x32xf32>
    %385 = vector.broadcast %366 : vector<1x32xf32> to vector<2x32xf32>
    %386 = arith.addf %384, %385 : vector<2x32xf32>
    %c0_220 = arith.constant 0 : index
    %c0_221 = arith.constant 0 : index
    %387 = vector.load %arg24[%c0_220, %c0_221] : memref<2x20xf32, #tpu.memory_space<vmem>>, vector<2x20xf32>
    %388 = arith.truncf %387 : vector<2x20xf32> to vector<2x20xbf16>
    %389 = arith.truncf %360 : vector<20x32xf32> to vector<20x32xbf16>
    %cst_222 = arith.constant dense<0.000000e+00> : vector<2x32xf32>
    %390 = tpu.matmul %388, %389, %cst_222 {dimension_numbers = #tpu.dot_dimension_numbers<[1], [0], [0], [1], [0, 0, 1, 1], [], []>} : vector<2x20xbf16>, vector<20x32xbf16>, vector<2x32xf32> -> vector<2x32xf32>
    %c0_223 = arith.constant 0 : index
    %c0_224 = arith.constant 0 : index
    %391 = vector.load %arg21[%c0_223, %c0_224] : memref<1x32xf32, #tpu.memory_space<vmem>>, vector<1x32xf32>
    %c0_225 = arith.constant 0 : index
    %c0_226 = arith.constant 0 : index
    %392 = vector.load %arg22[%c0_225, %c0_226] : memref<1x32xf32, #tpu.memory_space<vmem>>, vector<1x32xf32>
    %cst_227 = arith.constant dense<0.000000e+00> : vector<2xf32>
    %393 = vector.multi_reduction <add>, %390, %cst_227 [1] : vector<2x32xf32> to vector<2xf32>
    %394 = vector.shape_cast %393 : vector<2xf32> to vector<2x1xf32>
    %cst_228 = arith.constant 3.200000e+01 : f32
    %395 = vector.broadcast %cst_228 : f32 to vector<2x1xf32>
    %396 = arith.divf %394, %395 : vector<2x1xf32>
    %397 = vector.broadcast %396 : vector<2x1xf32> to vector<2x32xf32>
    %398 = arith.subf %390, %397 : vector<2x32xf32>
    %399 = arith.mulf %398, %398 : vector<2x32xf32>
    %cst_229 = arith.constant dense<0.000000e+00> : vector<2xf32>
    %400 = vector.multi_reduction <add>, %399, %cst_229 [1] : vector<2x32xf32> to vector<2xf32>
    %401 = vector.shape_cast %400 : vector<2xf32> to vector<2x1xf32>
    %cst_230 = arith.constant 3.200000e+01 : f32
    %402 = vector.broadcast %cst_230 : f32 to vector<2x1xf32>
    %403 = arith.divf %401, %402 : vector<2x1xf32>
    %cst_231 = arith.constant 9.99999996E-13 : f32
    %404 = vector.broadcast %cst_231 : f32 to vector<2x1xf32>
    %405 = arith.addf %403, %404 : vector<2x1xf32>
    %406 = math.rsqrt %405 : vector<2x1xf32>
    %407 = vector.broadcast %406 : vector<2x1xf32> to vector<2x32xf32>
    %408 = arith.mulf %398, %407 : vector<2x32xf32>
    %409 = vector.broadcast %391 : vector<1x32xf32> to vector<2x32xf32>
    %410 = arith.mulf %408, %409 : vector<2x32xf32>
    %411 = vector.broadcast %392 : vector<1x32xf32> to vector<2x32xf32>
    %412 = arith.addf %410, %411 : vector<2x32xf32>
    %c0_232 = arith.constant 0 : index
    %c0_233 = arith.constant 0 : index
    %413 = vector.load %arg25[%c0_232, %c0_233] : memref<32x512xbf16, #tpu.memory_space<vmem>>, vector<32x512xbf16>
    %414 = arith.truncf %386 : vector<2x32xf32> to vector<2x32xbf16>
    %cst_234 = arith.constant dense<0.000000e+00> : vector<2x512xf32>
    %415 = tpu.matmul %414, %413, %cst_234 {dimension_numbers = #tpu.dot_dimension_numbers<[1], [0], [0], [1], [0, 0, 1, 1], [], []>} : vector<2x32xbf16>, vector<32x512xbf16>, vector<2x512xf32> -> vector<2x512xf32>
    %c0_235 = arith.constant 0 : index
    %c0_236 = arith.constant 0 : index
    %416 = vector.load %arg26[%c0_235, %c0_236] : memref<32x512xbf16, #tpu.memory_space<vmem>>, vector<32x512xbf16>
    %417 = arith.truncf %412 : vector<2x32xf32> to vector<2x32xbf16>
    %cst_237 = arith.constant dense<0.000000e+00> : vector<2x512xf32>
    %418 = tpu.matmul %417, %416, %cst_237 {dimension_numbers = #tpu.dot_dimension_numbers<[1], [0], [0], [1], [0, 0, 1, 1], [], []>} : vector<2x32xbf16>, vector<32x512xbf16>, vector<2x512xf32> -> vector<2x512xf32>
    %419 = arith.addf %415, %418 : vector<2x512xf32>
    %c0_238 = arith.constant 0 : index
    %c0_239 = arith.constant 0 : index
    %420 = vector.load %arg27[%c0_238, %c0_239] : memref<1x512xf32, #tpu.memory_space<vmem>>, vector<1x512xf32>
    %421 = vector.broadcast %420 : vector<1x512xf32> to vector<2x512xf32>
    %422 = arith.addf %419, %421 : vector<2x512xf32>
    %cst_240 = arith.constant 0.000000e+00 : f32
    %423 = vector.broadcast %cst_240 : f32 to vector<2x512xf32>
    %424 = arith.maximumf %422, %423 : vector<2x512xf32>
    %c0_241 = arith.constant 0 : index
    %c0_242 = arith.constant 0 : index
    %425 = vector.load %arg28[%c0_241, %c0_242] : memref<1x512xf32, #tpu.memory_space<vmem>>, vector<1x512xf32>
    %426 = vector.broadcast %425 : vector<1x512xf32> to vector<2x512xf32>
    %427 = arith.mulf %424, %426 : vector<2x512xf32>
    %cst_243 = arith.constant dense<0.000000e+00> : vector<2xf32>
    %428 = vector.multi_reduction <add>, %427, %cst_243 [1] : vector<2x512xf32> to vector<2xf32>
    %429 = vector.shape_cast %428 : vector<2xf32> to vector<2x1xf32>
    %c0_244 = arith.constant 0 : index
    %c0_245 = arith.constant 0 : index
    %430 = vector.load %arg29[%c0_244, %c0_245] : memref<1x1xf32, #tpu.memory_space<vmem>>, vector<1x1xf32>
    %431 = vector.broadcast %430 : vector<1x1xf32> to vector<2x1xf32>
    %432 = arith.addf %429, %431 : vector<2x1xf32>
    %c0_246 = arith.constant 0 : index
    %c0_247 = arith.constant 0 : index
    %433 = vector.load %arg30[%c0_246, %c0_247] : memref<2x1xf32, #tpu.memory_space<vmem>>, vector<2x1xf32>
    tpu.vector_store %arg30[%c0_246, %c0_247], %432 {strides = array<i32>} : memref<2x1xf32, #tpu.memory_space<vmem>>, vector<2x1xf32>,
    return
  }
  func.func @transform_0(%arg0: i32) -> (i32, i32) {
    %c0_i32 = arith.constant 0 : i32
    %c0_i32_0 = arith.constant 0 : i32
    %c0_i32_1 = arith.constant 0 : i32
    return %c0_i32, %c0_i32_0 : i32, i32
  }
  func.func @transform_1(%arg0: i32) -> (i32, i32) {
    %c0_i32 = arith.constant 0 : i32
    %c0_i32_0 = arith.constant 0 : i32
    %c0_i32_1 = arith.constant 0 : i32
    return %c0_i32, %c0_i32_0 : i32, i32
  }
  func.func @transform_2(%arg0: i32) -> (i32, i32) {
    %c0_i32 = arith.constant 0 : i32
    %c0_i32_0 = arith.constant 0 : i32
    %c0_i32_1 = arith.constant 0 : i32
    return %c0_i32, %c0_i32_0 : i32, i32
  }
  func.func @transform_3(%arg0: i32) -> (i32, i32) {
    %c0_i32 = arith.constant 0 : i32
    %c0_i32_0 = arith.constant 0 : i32
    %c0_i32_1 = arith.constant 0 : i32
    return %c0_i32, %c0_i32_0 : i32, i32
  }
  func.func @transform_4(%arg0: i32) -> (i32, i32, i32) {
    %c0_i32 = arith.constant 0 : i32
    %c0_i32_0 = arith.constant 0 : i32
    %c0_i32_1 = arith.constant 0 : i32
    %c0_i32_2 = arith.constant 0 : i32
    return %c0_i32, %c0_i32_0, %c0_i32_1 : i32, i32, i32
  }
  func.func @transform_5(%arg0: i32) -> (i32, i32, i32) {
    %c0_i32 = arith.constant 0 : i32
    %c0_i32_0 = arith.constant 0 : i32
    %c0_i32_1 = arith.constant 0 : i32
    %c0_i32_2 = arith.constant 0 : i32
    return %c0_i32, %c0_i32_0, %c0_i32_1 : i32, i32, i32
  }
  func.func @transform_6(%arg0: i32) -> (i32, i32, i32) {
    %c0_i32 = arith.constant 0 : i32
    %c0_i32_0 = arith.constant 0 : i32
    %c0_i32_1 = arith.constant 0 : i32
    %c0_i32_2 = arith.constant 0 : i32
    return %c0_i32, %c0_i32_0, %c0_i32_1 : i32, i32, i32
  }
  func.func @transform_7(%arg0: i32) -> (i32, i32, i32) {
    %c0_i32 = arith.constant 0 : i32
    %c0_i32_0 = arith.constant 0 : i32
    %c0_i32_1 = arith.constant 0 : i32
    %c0_i32_2 = arith.constant 0 : i32
    return %c0_i32, %c0_i32_0, %c0_i32_1 : i32, i32, i32
  }
  func.func @transform_8(%arg0: i32) -> (i32, i32, i32) {
    %c0_i32 = arith.constant 0 : i32
    %c0_i32_0 = arith.constant 0 : i32
    %c0_i32_1 = arith.constant 0 : i32
    %c0_i32_2 = arith.constant 0 : i32
    return %c0_i32, %c0_i32_0, %c0_i32_1 : i32, i32, i32
  }
  func.func @transform_9(%arg0: i32) -> (i32, i32, i32) {
    %c0_i32 = arith.constant 0 : i32
    %c0_i32_0 = arith.constant 0 : i32
    %c0_i32_1 = arith.constant 0 : i32
    %c0_i32_2 = arith.constant 0 : i32
    return %c0_i32, %c0_i32_0, %c0_i32_1 : i32, i32, i32
  }
  func.func @transform_10(%arg0: i32) -> (i32, i32, i32) {
    %c0_i32 = arith.constant 0 : i32
    %c0_i32_0 = arith.constant 0 : i32
    %c0_i32_1 = arith.constant 0 : i32
    %c0_i32_2 = arith.constant 0 : i32
    return %c0_i32, %c0_i32_0, %c0_i32_1 : i32, i32, i32
  }
  func.func @transform_11(%arg0: i32) -> (i32, i32, i32) {
    %c0_i32 = arith.constant 0 : i32
    %c0_i32_0 = arith.constant 0 : i32
    %c0_i32_1 = arith.constant 0 : i32
    %c0_i32_2 = arith.constant 0 : i32
    return %c0_i32, %c0_i32_0, %c0_i32_1 : i32, i32, i32
  }
  func.func @transform_12(%arg0: i32) -> (i32, i32, i32) {
    %c0_i32 = arith.constant 0 : i32
    %c0_i32_0 = arith.constant 0 : i32
    %c0_i32_1 = arith.constant 0 : i32
    %c0_i32_2 = arith.constant 0 : i32
    return %c0_i32, %c0_i32_0, %c0_i32_1 : i32, i32, i32
  }
  func.func @transform_13(%arg0: i32) -> (i32, i32, i32) {
    %c0_i32 = arith.constant 0 : i32
    %c0_i32_0 = arith.constant 0 : i32
    %c0_i32_1 = arith.constant 0 : i32
    %c0_i32_2 = arith.constant 0 : i32
    return %c0_i32, %c0_i32_0, %c0_i32_1 : i32, i32, i32
  }
  func.func @transform_14(%arg0: i32) -> (i32, i32, i32) {
    %c0_i32 = arith.constant 0 : i32
    %c0_i32_0 = arith.constant 0 : i32
    %c0_i32_1 = arith.constant 0 : i32
    %c0_i32_2 = arith.constant 0 : i32
    return %c0_i32, %c0_i32_0, %c0_i32_1 : i32, i32, i32
  }
  func.func @transform_15(%arg0: i32) -> (i32, i32, i32) {
    %c0_i32 = arith.constant 0 : i32
    %c0_i32_0 = arith.constant 0 : i32
    %c0_i32_1 = arith.constant 0 : i32
    %c0_i32_2 = arith.constant 0 : i32
    return %c0_i32, %c0_i32_0, %c0_i32_1 : i32, i32, i32
  }
  func.func @transform_16(%arg0: i32) -> (i32, i32, i32) {
    %c0_i32 = arith.constant 0 : i32
    %c0_i32_0 = arith.constant 0 : i32
    %c0_i32_1 = arith.constant 0 : i32
    %c0_i32_2 = arith.constant 0 : i32
    return %c0_i32, %c0_i32_0, %c0_i32_1 : i32, i32, i32
  }
  func.func @transform_17(%arg0: i32) -> (i32, i32, i32) {
    %c0_i32 = arith.constant 0 : i32
    %c0_i32_0 = arith.constant 0 : i32
    %c0_i32_1 = arith.constant 0 : i32
    %c0_i32_2 = arith.constant 0 : i32
    return %c0_i32, %c0_i32_0, %c0_i32_1 : i32, i32, i32
  }
  func.func @transform_18(%arg0: i32) -> (i32, i32, i32) {
    %c0_i32 = arith.constant 0 : i32
    %c0_i32_0 = arith.constant 0 : i32
    %c0_i32_1 = arith.constant 0 : i32
    %c0_i32_2 = arith.constant 0 : i32
    return %c0_i32, %c0_i32_0, %c0_i32_1 : i32, i32, i32
  }
  func.func @transform_19(%arg0: i32) -> (i32, i32, i32) {
    %c0_i32 = arith.constant 0 : i32
    %c0_i32_0 = arith.constant 0 : i32
    %c0_i32_1 = arith.constant 0 : i32
    %c0_i32_2 = arith.constant 0 : i32
    return %c0_i32, %c0_i32_0, %c0_i32_1 : i32, i32, i32
  }
  func.func @transform_20(%arg0: i32) -> (i32, i32) {
    %c0_i32 = arith.constant 0 : i32
    %c0_i32_0 = arith.constant 0 : i32
    %c0_i32_1 = arith.constant 0 : i32
    return %c0_i32, %c0_i32_0 : i32, i32
  }
  func.func @transform_21(%arg0: i32) -> (i32, i32) {
    %c0_i32 = arith.constant 0 : i32
    %c0_i32_0 = arith.constant 0 : i32
    %c0_i32_1 = arith.constant 0 : i32
    return %c0_i32, %c0_i32_0 : i32, i32
  }
  func.func @transform_22(%arg0: i32) -> (i32, i32) {
    %c0_i32 = arith.constant 0 : i32
    %c0_i32_0 = arith.constant 0 : i32
    %c0_i32_1 = arith.constant 0 : i32
    return %c0_i32, %c0_i32_0 : i32, i32
  }
  func.func @transform_23(%arg0: i32) -> (i32, i32) {
    %c0_i32 = arith.constant 0 : i32
    %c0_i32_0 = arith.constant 0 : i32
    %c0_i32_1 = arith.constant 0 : i32
    return %c0_i32, %c0_i32_0 : i32, i32
  }
  func.func @transform_24(%arg0: i32) -> (i32, i32) {
    %c0_i32 = arith.constant 0 : i32
    %c0_i32_0 = arith.constant 0 : i32
    %c0_i32_1 = arith.constant 0 : i32
    return %c0_i32, %c0_i32_0 : i32, i32
  }
  func.func @transform_25(%arg0: i32) -> (i32, i32) {
    %c0_i32 = arith.constant 0 : i32
    %c0_i32_0 = arith.constant 0 : i32
    %c0_i32_1 = arith.constant 0 : i32
    return %c0_i32, %c0_i32_0 : i32, i32
  }
  func.func @transform_26(%arg0: i32) -> (i32, i32) {
    %c0_i32 = arith.constant 0 : i32
    %c0_i32_0 = arith.constant 0 : i32
    %c0_i32_1 = arith.constant 0 : i32
    return %c0_i32, %c0_i32_0 : i32, i32
  }
  func.func @transform_27(%arg0: i32) -> (i32, i32) {
    %c0_i32 = arith.constant 0 : i32
    %c0_i32_0 = arith.constant 0 : i32
    %c0_i32_1 = arith.constant 0 : i32
    return %c0_i32, %c0_i32_0 : i32, i32
  }
  func.func @transform_28(%arg0: i32) -> (i32, i32) {
    %c0_i32 = arith.constant 0 : i32
    %c0_i32_0 = arith.constant 0 : i32
    %c0_i32_1 = arith.constant 0 : i32
    return %c0_i32, %c0_i32_0 : i32, i32
  }
  func.func @transform_29(%arg0: i32) -> (i32, i32) {
    %c0_i32 = arith.constant 0 : i32
    %c0_i32_0 = arith.constant 0 : i32
    %c0_i32_1 = arith.constant 0 : i32
    return %c0_i32, %c0_i32_0 : i32, i32
  }
}

</mosaic_0001>

<llo_original>
// kernel: tile.9
$region0: #{tile.9}
  %s0 = inlined_call_operand.vmem [shape: f32[4,5,32], index: 0, kind: input, shape index: {}]
  %s1 = inlined_call_operand.vmem [shape: f32[20,32], index: 1, kind: output, shape index: {}]
  %v2 = vld [vmem:[%s0] sm:$0x1f]
  %vm3 = vcmask 261120
  %4 = vst.msk [vmem:[%s1] sm:$0x1f] %vm3, %v2
  %s5 = scalar_lea.vmem %s0, 8
  %v6 = vld [vmem:[%s5] sm:$0x1f]
  %vm7 = vcmask 261120
  %s8 = scalar_lea.vmem %s1, 5
  %9 = vst.msk [vmem:[%s8] sm:$0x1f] %vm7, %v6
  %s10 = scalar_lea.vmem %s0, 16
  %v11 = vld [vmem:[%s10] sm:$0x1f]
  %vm12 = vcmask 261120
  %s13 = scalar_lea.vmem %s1, 10
  %14 = vst.msk [vmem:[%s13] sm:$0x1f] %vm12, %v11
  %s15 = scalar_lea.vmem %s0, 24
  %v16 = vld [vmem:[%s15] sm:$0x1f]
  %vm17 = vcmask 261120
  %s18 = scalar_lea.vmem %s1, 15
  %19 = vst.msk [vmem:[%s18] sm:$0x1f] %vm17, %v16

// kernel: vit_pair_classifier_forward.1
$region0: #{vit_pair_classifier_forward.1}
  #allocation0 [shape = 'u32[]', space=smem, size = 0x4, offset = 0x4, fixed_abs, tag = 'smem constant byte address 0x4 - core index']
  #allocation1 [shape = 'u32[144,128]{1,0:T(1,128)}', space=vmem, size = 0x12000, scoped, tag = 'internal scratch']
  #allocation2 [shape = 'f32[1,1]{1,0:T(1,128)S(1)}', space=vmem, size = 0x200, scoped, tag = 'scoped memory for vit_pair_classifier_forward.1']
  %s0 = inlined_call_operand.smem [shape: u32[30], index: -1, kind: input, shape index: {}]
  %s1 = sld [smem:[%s0]]
  %s2 = scalar_lea.smem %s0, 1
  %s3 = sld [smem:[%s2]]
  %s4 = scalar_lea.smem %s0, 2
  %s5 = sld [smem:[%s4]]
  %s6 = scalar_lea.smem %s0, 3
  %s7 = sld [smem:[%s6]]
  %s8 = scalar_lea.smem %s0, 4
  %s9 = sld [smem:[%s8]]
  %s10 = scalar_lea.smem %s0, 5
  %s11 = sld [smem:[%s10]]
  %s12 = scalar_lea.smem %s0, 6
  %s13 = sld [smem:[%s12]]
  %s14 = scalar_lea.smem %s0, 7
  %s15 = sld [smem:[%s14]]
  %s16 = scalar_lea.smem %s0, 8
  %s17 = sld [smem:[%s16]]
  %s18 = scalar_lea.smem %s0, 9
  %s19 = sld [smem:[%s18]]
  %s20 = scalar_lea.smem %s0, 10
  %s21 = sld [smem:[%s20]]
  %s22 = scalar_lea.smem %s0, 11
  %s23 = sld [smem:[%s22]]
  %s24 = scalar_lea.smem %s0, 12
  %s25 = sld [smem:[%s24]]
  %s26 = scalar_lea.smem %s0, 13
  %s27 = sld [smem:[%s26]]
  %s28 = scalar_lea.smem %s0, 14
  %s29 = sld [smem:[%s28]]
  %s30 = scalar_lea.smem %s0, 15
  %s31 = sld [smem:[%s30]]
  %s32 = scalar_lea.smem %s0, 16
  %s33 = sld [smem:[%s32]]
  %s34 = scalar_lea.smem %s0, 17
  %s35 = sld [smem:[%s34]]
  %s36 = scalar_lea.smem %s0, 18
  %s37 = sld [smem:[%s36]]
  %s38 = scalar_lea.smem %s0, 19
  %s39 = sld [smem:[%s38]]
  %s40 = scalar_lea.smem %s0, 20
  %s41 = sld [smem:[%s40]]
  %s42 = scalar_lea.smem %s0, 21
  %s43 = sld [smem:[%s42]]
  %s44 = scalar_lea.smem %s0, 22
  %s45 = sld [smem:[%s44]]
  %s46 = scalar_lea.smem %s0, 23
  %s47 = sld [smem:[%s46]]
  %s48 = scalar_lea.smem %s0, 24
  %s49 = sld [smem:[%s48]]
  %s50 = scalar_lea.smem %s0, 25
  %s51 = sld [smem:[%s50]]
  %s52 = scalar_lea.smem %s0, 26
  %s53 = sld [smem:[%s52]]
  %s54 = scalar_lea.smem %s0, 27
  %s55 = sld [smem:[%s54]]
  %s56 = scalar_lea.smem %s0, 28
  %s57 = sld [smem:[%s56]]
  %s58 = scalar_lea.smem %s0, 29
  %s59 = sld [smem:[%s58]]
  %s60 = sld [smem:[#allocation0]]
  $region126: #{vit_pair_classifier_forward.1} parent=0
    _
  %s62 = ssub.s32 1, %s60
  %s63 = scalar_select 0, %s62, %s60
  %v64 = vstv %s57
  %65 = vst [vmem:[#allocation2] sm:$0x1] %v64
  // Predicated region
  $region2: #{vit_pair_classifier_forward.1} parent=0 // pred_check
    _
  $region3: #{vit_pair_classifier_forward.1} parent=0 // pred_check_branch
    %67 = sbr.rel (0) target = $region5
  $region4: #{vit_pair_classifier_forward.1} parent=0 // pred_region
    _
  $region5: #{vit_pair_classifier_forward.1} parent=0 // pred_fallthru
    _
  // Predicated region
  $region6: #{vit_pair_classifier_forward.1} parent=0 // pred_check
    _
  $region7: #{vit_pair_classifier_forward.1} parent=0 // pred_check_branch
    %69 = sbr.rel (0) target = $region9
  $region8: #{vit_pair_classifier_forward.1} parent=0 // pred_region
    _
  $region9: #{vit_pair_classifier_forward.1} parent=0 // pred_fallthru
    _
  // Predicated region
  $region10: #{vit_pair_classifier_forward.1} parent=0 // pred_check
    _
  $region11: #{vit_pair_classifier_forward.1} parent=0 // pred_check_branch
    %71 = sbr.rel (0) target = $region13
  $region12: #{vit_pair_classifier_forward.1} parent=0 // pred_region
    _
  $region13: #{vit_pair_classifier_forward.1} parent=0 // pred_fallthru
    _
  // Predicated region
  $region14: #{vit_pair_classifier_forward.1} parent=0 // pred_check
    _
  $region15: #{vit_pair_classifier_forward.1} parent=0 // pred_check_branch
    %73 = sbr.rel (0) target = $region17
  $region16: #{vit_pair_classifier_forward.1} parent=0 // pred_region
    _
  $region17: #{vit_pair_classifier_forward.1} parent=0 // pred_fallthru
    _
  // Predicated region
  $region18: #{vit_pair_classifier_forward.1} parent=0 // pred_check
    _
  $region19: #{vit_pair_classifier_forward.1} parent=0 // pred_check_branch
    %75 = sbr.rel (0) target = $region21
  $region20: #{vit_pair_classifier_forward.1} parent=0 // pred_region
    _
  $region21: #{vit_pair_classifier_forward.1} parent=0 // pred_fallthru
    _
  // Predicated region
  $region22: #{vit_pair_classifier_forward.1} parent=0 // pred_check
    _
  $region23: #{vit_pair_classifier_forward.1} parent=0 // pred_check_branch
    %77 = sbr.rel (0) target = $region25
  $region24: #{vit_pair_classifier_forward.1} parent=0 // pred_region
    _
  $region25: #{vit_pair_classifier_forward.1} parent=0 // pred_fallthru
    _
  // Predicated region
  $region26: #{vit_pair_classifier_forward.1} parent=0 // pred_check
    _
  $region27: #{vit_pair_classifier_forward.1} parent=0 // pred_check_branch
    %79 = sbr.rel (0) target = $region29
  $region28: #{vit_pair_classifier_forward.1} parent=0 // pred_region
    _
  $region29: #{vit_pair_classifier_forward.1} parent=0 // pred_fallthru
    _
  // Predicated region
  $region30: #{vit_pair_classifier_forward.1} parent=0 // pred_check
    _
  $region31: #{vit_pair_classifier_forward.1} parent=0 // pred_check_branch
    %81 = sbr.rel (0) target = $region33
  $region32: #{vit_pair_classifier_forward.1} parent=0 // pred_region
    _
  $region33: #{vit_pair_classifier_forward.1} parent=0 // pred_fallthru
    _
  // Predicated region
  $region34: #{vit_pair_classifier_forward.1} parent=0 // pred_check
    _
  $region35: #{vit_pair_classifier_forward.1} parent=0 // pred_check_branch
    %83 = sbr.rel (0) target = $region37
  $region36: #{vit_pair_classifier_forward.1} parent=0 // pred_region
    _
  $region37: #{vit_pair_classifier_forward.1} parent=0 // pred_fallthru
    _
  // Predicated region
  $region38: #{vit_pair_classifier_forward.1} parent=0 // pred_check
    _
  $region39: #{vit_pair_classifier_forward.1} parent=0 // pred_check_branch
    %85 = sbr.rel (0) target = $region41
  $region40: #{vit_pair_classifier_forward.1} parent=0 // pred_region
    _
  $region41: #{vit_pair_classifier_forward.1} parent=0 // pred_fallthru
    _
  // Predicated region
  $region42: #{vit_pair_classifier_forward.1} parent=0 // pred_check
    _
  $region43: #{vit_pair_classifier_forward.1} parent=0 // pred_check_branch
    %87 = sbr.rel (0) target = $region45
  $region44: #{vit_pair_classifier_forward.1} parent=0 // pred_region
    _
  $region45: #{vit_pair_classifier_forward.1} parent=0 // pred_fallthru
    _
  // Predicated region
  $region46: #{vit_pair_classifier_forward.1} parent=0 // pred_check
    _
  $region47: #{vit_pair_classifier_forward.1} parent=0 // pred_check_branch
    %89 = sbr.rel (0) target = $region49
  $region48: #{vit_pair_classifier_forward.1} parent=0 // pred_region
    _
  $region49: #{vit_pair_classifier_forward.1} parent=0 // pred_fallthru
    _
  // Predicated region
  $region50: #{vit_pair_classifier_forward.1} parent=0 // pred_check
    _
  $region51: #{vit_pair_classifier_forward.1} parent=0 // pred_check_branch
    %91 = sbr.rel (0) target = $region53
  $region52: #{vit_pair_classifier_forward.1} parent=0 // pred_region
    _
  $region53: #{vit_pair_classifier_forward.1} parent=0 // pred_fallthru
    _
  // Predicated region
  $region54: #{vit_pair_classifier_forward.1} parent=0 // pred_check
    _
  $region55: #{vit_pair_classifier_forward.1} parent=0 // pred_check_branch
    %93 = sbr.rel (0) target = $region57
  $region56: #{vit_pair_classifier_forward.1} parent=0 // pred_region
    _
  $region57: #{vit_pair_classifier_forward.1} parent=0 // pred_fallthru
    _
  // Predicated region
  $region58: #{vit_pair_classifier_forward.1} parent=0 // pred_check
    _
  $region59: #{vit_pair_classifier_forward.1} parent=0 // pred_check_branch
    %95 = sbr.rel (0) target = $region61
  $region60: #{vit_pair_classifier_forward.1} parent=0 // pred_region
    _
  $region61: #{vit_pair_classifier_forward.1} parent=0 // pred_fallthru
    _
  // Predicated region
  $region62: #{vit_pair_classifier_forward.1} parent=0 // pred_check
    _
  $region63: #{vit_pair_classifier_forward.1} parent=0 // pred_check_branch
    %97 = sbr.rel (0) target = $region65
  $region64: #{vit_pair_classifier_forward.1} parent=0 // pred_region
    _
  $region65: #{vit_pair_classifier_forward.1} parent=0 // pred_fallthru
    _
  // Predicated region
  $region66: #{vit_pair_classifier_forward.1} parent=0 // pred_check
    _
  $region67: #{vit_pair_classifier_forward.1} parent=0 // pred_check_branch
    %99 = sbr.rel (0) target = $region69
  $region68: #{vit_pair_classifier_forward.1} parent=0 // pred_region
    _
  $region69: #{vit_pair_classifier_forward.1} parent=0 // pred_fallthru
    _
  // Predicated region
  $region70: #{vit_pair_classifier_forward.1} parent=0 // pred_check
    _
  $region71: #{vit_pair_classifier_forward.1} parent=0 // pred_check_branch
    %101 = sbr.rel (0) target = $region73
  $region72: #{vit_pair_classifier_forward.1} parent=0 // pred_region
    _
  $region73: #{vit_pair_classifier_forward.1} parent=0 // pred_fallthru
    _
  // Predicated region
  $region74: #{vit_pair_classifier_forward.1} parent=0 // pred_check
    _
  $region75: #{vit_pair_classifier_forward.1} parent=0 // pred_check_branch
    %103 = sbr.rel (0) target = $region77
  $region76: #{vit_pair_classifier_forward.1} parent=0 // pred_region
    _
  $region77: #{vit_pair_classifier_forward.1} parent=0 // pred_fallthru
    _
  // Predicated region
  $region78: #{vit_pair_classifier_forward.1} parent=0 // pred_check
    _
  $region79: #{vit_pair_classifier_forward.1} parent=0 // pred_check_branch
    %105 = sbr.rel (0) target = $region81
  $region80: #{vit_pair_classifier_forward.1} parent=0 // pred_region
    _
  $region81: #{vit_pair_classifier_forward.1} parent=0 // pred_fallthru
    _
  // Predicated region
  $region82: #{vit_pair_classifier_forward.1} parent=0 // pred_check
    _
  $region83: #{vit_pair_classifier_forward.1} parent=0 // pred_check_branch
    %107 = sbr.rel (0) target = $region85
  $region84: #{vit_pair_classifier_forward.1} parent=0 // pred_region
    _
  $region85: #{vit_pair_classifier_forward.1} parent=0 // pred_fallthru
    _
  // Predicated region
  $region86: #{vit_pair_classifier_forward.1} parent=0 // pred_check
    _
  $region87: #{vit_pair_classifier_forward.1} parent=0 // pred_check_branch
    %109 = sbr.rel (0) target = $region89
  $region88: #{vit_pair_classifier_forward.1} parent=0 // pred_region
    _
  $region89: #{vit_pair_classifier_forward.1} parent=0 // pred_fallthru
    _
  // Predicated region
  $region90: #{vit_pair_classifier_forward.1} parent=0 // pred_check
    _
  $region91: #{vit_pair_classifier_forward.1} parent=0 // pred_check_branch
    %111 = sbr.rel (0) target = $region93
  $region92: #{vit_pair_classifier_forward.1} parent=0 // pred_region
    _
  $region93: #{vit_pair_classifier_forward.1} parent=0 // pred_fallthru
    _
  // Predicated region
  $region94: #{vit_pair_classifier_forward.1} parent=0 // pred_check
    _
  $region95: #{vit_pair_classifier_forward.1} parent=0 // pred_check_branch
    %113 = sbr.rel (0) target = $region97
  $region96: #{vit_pair_classifier_forward.1} parent=0 // pred_region
    _
  $region97: #{vit_pair_classifier_forward.1} parent=0 // pred_fallthru
    _
  // Predicated region
  $region98: #{vit_pair_classifier_forward.1} parent=0 // pred_check
    _
  $region99: #{vit_pair_classifier_forward.1} parent=0 // pred_check_branch
    %115 = sbr.rel (0) target = $region101
  $region100: #{vit_pair_classifier_forward.1} parent=0 // pred_region
    _
  $region101: #{vit_pair_classifier_forward.1} parent=0 // pred_fallthru
    _
  // Predicated region
  $region102: #{vit_pair_classifier_forward.1} parent=0 // pred_check
    _
  $region103: #{vit_pair_classifier_forward.1} parent=0 // pred_check_branch
    %117 = sbr.rel (0) target = $region105
  $region104: #{vit_pair_classifier_forward.1} parent=0 // pred_region
    _
  $region105: #{vit_pair_classifier_forward.1} parent=0 // pred_fallthru
    _
  // Predicated region
  $region106: #{vit_pair_classifier_forward.1} parent=0 // pred_check
    _
  $region107: #{vit_pair_classifier_forward.1} parent=0 // pred_check_branch
    %119 = sbr.rel (0) target = $region109
  $region108: #{vit_pair_classifier_forward.1} parent=0 // pred_region
    _
  $region109: #{vit_pair_classifier_forward.1} parent=0 // pred_fallthru
    _
  // Predicated region
  $region110: #{vit_pair_classifier_forward.1} parent=0 // pred_check
    _
  $region111: #{vit_pair_classifier_forward.1} parent=0 // pred_check_branch
    %121 = sbr.rel (0) target = $region113
  $region112: #{vit_pair_classifier_forward.1} parent=0 // pred_region
    _
  $region113: #{vit_pair_classifier_forward.1} parent=0 // pred_fallthru
    _
  // Predicated region
  $region114: #{vit_pair_classifier_forward.1} parent=0 // pred_check
    _
  $region115: #{vit_pair_classifier_forward.1} parent=0 // pred_check_branch
    %123 = sbr.rel (0) target = $region117
  $region116: #{vit_pair_classifier_forward.1} parent=0 // pred_region
    _
  $region117: #{vit_pair_classifier_forward.1} parent=0 // pred_fallthru
    _
  %v125 = vld [vmem:[%s7] sm:$0xff]
  %v126 = vld [vmem:[%s7 + $0x8] sm:$0xff]
  %v127 = vld [vmem:[%s7 + $0x10] sm:$0xf]
  %v128 = vld [vmem:[%s1] sm:$0xff]
  %v129 = vld [vmem:[%s1 + $0x8] sm:$0xff]
  %v130 = vld [vmem:[%s1 + $0x10] sm:$0xff]
  %v131 = vld [vmem:[%s1 + $0x18] sm:$0xff]
  %v132 = vld [vmem:[%s1 + $0x20] sm:$0xf]
  %v133 = vld [vmem:[%s1 + $0x28] sm:$0xf]
  %v134 = vld [vmem:[%s3] sm:$0xf]
  %v135 = vld [vmem:[%s3 + $0x4] sm:$0xf]
  %v136 = vld [vmem:[%s3 + $0x8] sm:$0xf]
  %v137 = vld [vmem:[%s3 + $0xc] sm:$0xf]
  %v138 = vld [vmem:[%s3 + $0x10] sm:$0xf]
  %v139 = vld [vmem:[%s3 + $0x14] sm:$0xf]
  %v140 = vld [vmem:[%s3 + $0x18] sm:$0xf]
  %v141 = vld [vmem:[%s3 + $0x1c] sm:$0xf]
  %v142 = vld [vmem:[%s3 + $0x20] sm:$0xf]
  %v143 = vld [vmem:[%s3 + $0x24] sm:$0xf]
  %v144 = vld [vmem:[%s3 + $0x28] sm:$0xf]
  %v145 = vld [vmem:[%s3 + $0x2c] sm:$0xf]
  %v146 = vld [vmem:[%s3 + $0x30] sm:$0xf]
  %v147 = vld [vmem:[%s3 + $0x34] sm:$0xf]
  %v148 = vld [vmem:[%s3 + $0x38] sm:$0xf]
  %v149 = vld [vmem:[%s3 + $0x3c] sm:$0xf]
  %v150 = vld [vmem:[%s3 + $0x40] sm:$0xf]
  %v151 = vld [vmem:[%s3 + $0x44] sm:$0xf]
  %v152 = vld [vmem:[%s3 + $0x48] sm:$0xf]
  %v153 = vld [vmem:[%s3 + $0x4c] sm:$0xf]
  %v154 = vld [vmem:[%s3 + $0x50] sm:$0xf]
  %v155 = vld [vmem:[%s3 + $0x54] sm:$0xf]
  %v156 = vld [vmem:[%s3 + $0x58] sm:$0xf]
  %v157 = vld [vmem:[%s3 + $0x5c] sm:$0xf]
  %v158 = vpack.c.bf16 %v130, %v128
  %v159 = vpack.c.bf16 %v131, %v129
  %v160 = vpack.c.bf16 %v132, %v132
  %v161 = vpack.c.bf16 %v133, %v133
  %v162 = vld [vmem:[%s5] sm:$0xff]
  %v163 = vld [vmem:[%s5 + $0x8] sm:$0xff]
  %v164 = vld [vmem:[%s5 + $0x10] sm:$0xf]
  %v189 = vunpack.c.l.b16 %v134
  %v190 = vunpack.c.l.b16 %v135
  %v191 = vunpack.c.l.b16 %v136
  %v192 = vunpack.c.l.b16 %v137
  %v193 = vunpack.c.l.b16 %v138
  %v194 = vunpack.c.l.b16 %v139
  %v195 = vunpack.c.l.b16 %v140
  %v196 = vunpack.c.l.b16 %v141
  %v197 = vunpack.c.l.b16 %v142
  %v198 = vunpack.c.l.b16 %v143
  %v199 = vunpack.c.l.b16 %v144
  %v200 = vunpack.c.l.b16 %v145
  %v201 = vunpack.c.l.b16 %v146
  %v202 = vunpack.c.l.b16 %v147
  %v203 = vunpack.c.l.b16 %v148
  %v204 = vunpack.c.l.b16 %v149
  %v205 = vunpack.c.l.b16 %v150
  %v206 = vunpack.c.l.b16 %v151
  %v207 = vunpack.c.l.b16 %v152
  %v208 = vunpack.c.l.b16 %v153
  %v209 = vunpack.c.l.b16 %v154
  %v210 = vunpack.c.l.b16 %v155
  %v211 = vunpack.c.l.b16 %v156
  %v212 = vunpack.c.l.b16 %v157
  %v213 = vpack.c.b16 %v190, %v189
  %v214 = vpack.c.b16 %v192, %v191
  %v215 = vpack.c.b16 %v194, %v193
  %v216 = vpack.c.b16 %v196, %v195
  %v217 = vpack.c.b16 %v198, %v197
  %v218 = vpack.c.b16 %v200, %v199
  %v219 = vpack.c.b16 %v202, %v201
  %v220 = vpack.c.b16 %v204, %v203
  %v221 = vpack.c.b16 %v206, %v205
  %v222 = vpack.c.b16 %v208, %v207
  %v223 = vpack.c.b16 %v210, %v209
  %v224 = vpack.c.b16 %v212, %v211
  %vm237 = vcmask 523264
  %v239 = vsel %vm237, %v159, 0
  %v242 = vsel %vm237, %v161, 0
  %244 = vmatprep.subr.bf16.mxu0 0
  %245 = vmatpush1.bf16.msra.mxu0 %v220
  %246 = vmatprep.subr.bf16.mxu0 0
  %247 = vmatpush1.bf16.msra.mxu0 %v219
  %248 = vmatprep.subr.bf16.mxu0 0
  %249 = vmatpush1.bf16.msra.mxu0 %v218
  %250 = vmatprep.subr.bf16.mxu0 0
  %251 = vmatpush1.bf16.msra.mxu0 %v217
  %252 = vmatprep.subr.bf16.mxu0 0
  %253 = vmatpush1.bf16.msra.mxu0 %v216
  %254 = vmatprep.subr.bf16.mxu0 0
  %255 = vmatpush1.bf16.msra.mxu0 %v215
  %256 = vmatprep.subr.bf16.mxu0 0
  %257 = vmatpush1.bf16.msra.mxu0 %v214
  %258 = vmatprep.subr.bf16.mxu0 0
  %259 = vmatpush1.bf16.msra.mxu0 %v213
  %260 = vmatprep.subr.bf16.mxu0 0
  %261 = vmatpush2.bf16.msra.mxu0 0
  %262 = vmatprep.subr.bf16.mxu0 0
  %263 = vmatpush2.bf16.msra.mxu0 0
  %264 = vmatprep.subr.bf16.mxu0 0
  %265 = vmatpush2.bf16.msra.mxu0 0
  %266 = vmatprep.subr.bf16.mxu0 0
  %267 = vmatpush2.bf16.msra.mxu0 0
  %268 = vmatprep.subr.bf16.mxu0 0
  %269 = vmatpush2.bf16.msra.mxu0 %v224
  %270 = vmatprep.subr.bf16.mxu0 0
  %271 = vmatpush2.bf16.msra.mxu0 %v223
  %272 = vmatprep.subr.bf16.mxu0 0
  %273 = vmatpush2.bf16.msra.mxu0 %v222
  %274 = vmatprep.subr.bf16.mxu0 0
  %275 = vmatpush2.bf16.msra.mxu0 %v221
  %276 = vmatprep.mubr.bf16.mxu0 %v239
  %277 = vmatmul.mubr.bf16.gmra.mxu0 %v158
  %v278 = vpop.f32.mrf.mxu0
  %v279 = vadd.f32 %v162, %v278
  %v280 = vpop.f32.mrf.mxu0
  %v281 = vpop.f32.mrf.mxu0
  %v282 = vadd.f32 %v163, %v281
  %v283 = vpop.f32.mrf.mxu0
  %284 = vmatprep.mubr.bf16.mxu0 %v242
  %285 = vmatmul.mubr.bf16.gmra.mxu0 %v160
  %v286 = vpop.f32.mrf.mxu0
  %v287 = vadd.f32 %v164, %v286
  %v288 = vpop.f32.mrf.mxu0
  %v289 = vpop.f32.mrf.mxu0
  %v290 = vpop.f32.mrf.mxu0
  %291 = vdwg.mxu0
  %v292 = vld [vmem:[%s9] sm:$0x1]
  %v293 = vld [vmem:[%s11] sm:$0x1]
  %vm294 = vcmask 261120
  %v295 = vsel %vm294, %v279, 0.0
  %296 = vadd.xlane.f32.xlu0 %v295
  %v297 = vpop.xlane.xlu0 %296
  %v298 = vsel %vm294, %v282, 0.0
  %299 = vadd.xlane.f32.xlu0 %v298
  %v300 = vpop.xlane.xlu0 %299
  %vm301 = vcmask 257024
  %v302 = vsel %vm301, %v287, 0.0
  %303 = vadd.xlane.f32.xlu0 %v302
  %v304 = vpop.xlane.xlu0 %303
  %v305 = vrcp.pop 32.0
  %v306 = vmul.f32 %v297, %v305
  %v307 = vmul.f32 %v300, %v305
  %v308 = vmul.f32 %v304, %v305
  %v309 = vsub.f32 %v279, %v306
  %v310 = vsub.f32 %v282, %v307
  %v311 = vsub.f32 %v287, %v308
  %v312 = vmul.f32 %v309, %v309
  %v313 = vmul.f32 %v310, %v310
  %v314 = vmul.f32 %v311, %v311
  %v315 = vsel %vm294, %v312, 0.0
  %316 = vadd.xlane.f32.xlu0 %v315
  %v317 = vpop.xlane.xlu0 %316
  %v318 = vsel %vm294, %v313, 0.0
  %319 = vadd.xlane.f32.xlu0 %v318
  %v320 = vpop.xlane.xlu0 %319
  %v321 = vsel %vm301, %v314, 0.0
  %322 = vadd.xlane.f32.xlu0 %v321
  %v323 = vpop.xlane.xlu0 %322
  %v324 = vmul.f32 %v317, %v305
  %v325 = vmul.f32 %v320, %v305
  %v326 = vmul.f32 %v323, %v305
  %v327 = vadd.f32 %v324, 1e-12
  %v328 = vadd.f32 %v325, 1e-12
  %v329 = vadd.f32 %v326, 1e-12
  %v330 = vrsqrt.pop %v327
  %v331 = vrsqrt.pop %v328
  %v332 = vrsqrt.pop %v329
  %v333 = vmul.f32 %v309, %v330
  %v334 = vmul.f32 %v310, %v331
  %v335 = vmul.f32 %v311, %v332
  %v337 = vlaneseq
  %v338 = vshrl.u32 %v337, 7
  %v339 = vsub.s32 0, %v338
  %v340 = vrot.slane %v292, %v339
  %v342 = vmul.f32 %v333, %v340
  %v343 = vmul.f32 %v334, %v340
  %v344 = vmul.f32 %v335, %v340
  %v346 = vlaneseq
  %v347 = vshrl.u32 %v346, 7
  %v348 = vsub.s32 0, %v347
  %v349 = vrot.slane %v293, %v348
  %v351 = vadd.f32 %v342, %v349
  %v352 = vadd.f32 %v343, %v349
  %v353 = vadd.f32 %v344, %v349
  %354 = vxpose.xlu0.b32.start [1/16] %v351, 128
  %355 = vxpose.xlu0.b32.cont [2/16] %v352, 128
  %356 = vxpose.xlu0.b32.cont [3/16] %v353, 128
  %357 = vxpose.xlu0.b32.cont [4/16] 0.0, 128
  %358 = vxpose.xlu0.b32.cont [5/16] 0.0, 128
  %359 = vxpose.xlu0.b32.cont [6/16] 0.0, 128
  %360 = vxpose.xlu0.b32.cont [7/16] 0.0, 128
  %361 = vxpose.xlu0.b32.cont [8/16] 0.0, 128
  %362 = vxpose.xlu0.b32.cont [9/16] 0.0, 128
  %363 = vxpose.xlu0.b32.cont [10/16] 0.0, 128
  %364 = vxpose.xlu0.b32.cont [11/16] 0.0, 128
  %365 = vxpose.xlu0.b32.cont [12/16] 0.0, 128
  %366 = vxpose.xlu0.b32.cont [13/16] 0.0, 128
  %367 = vxpose.xlu0.b32.cont [14/16] 0.0, 128
  %368 = vxpose.xlu0.b32.cont [15/16] 0.0, 128
  %369 = vxpose.xlu0.b32.end [16/16] 0.0, 128
  %v370 = vpop.trf.xlu0
  %v371 = vpop.trf.xlu0
  %v372 = vpop.trf.xlu0
  %v373 = vpop.trf.xlu0
  %v374 = vpop.trf.xlu0
  %v375 = vpop.trf.xlu0
  %v376 = vpop.trf.xlu0
  %v377 = vpop.trf.xlu0
  %v378 = vpop.trf.xlu0
  %v379 = vpop.trf.xlu0
  %v380 = vpop.trf.xlu0
  %v381 = vpop.trf.xlu0
  %v382 = vpop.trf.xlu0
  %v383 = vpop.trf.xlu0
  %v384 = vpop.trf.xlu0
  %v385 = vpop.trf.xlu0
  %v386 = vld [vmem:[%s13] sm:$0xf]
  %v387 = vld [vmem:[%s13 + $0x4] sm:$0xf]
  %v388 = vld [vmem:[%s13 + $0x8] sm:$0xf]
  %v389 = vld [vmem:[%s13 + $0xc] sm:$0xf]
  %v390 = vpack.c.bf16 %v352, %v351
  %v391 = vpack.c.bf16 %v353, %v353
  %v392 = vld [vmem:[%s15] sm:$0x1]
  %v394 = vlaneseq
  %v395 = vshrl.u32 %v394, 7
  %v396 = vsub.s32 0, %v395
  %v397 = vrot.slane %v392, %v396
  %v403 = vunpack.c.l.b16 %v386
  %v404 = vunpack.c.l.b16 %v387
  %v405 = vunpack.c.l.b16 %v388
  %v406 = vunpack.c.l.b16 %v389
  %v407 = vpack.c.b16 %v404, %v403
  %v408 = vpack.c.b16 %v406, %v405
  %v412 = vsel %vm294, %v390, 0
  %v415 = vsel %vm294, %v391, 0
  %417 = vmatprep.subr.bf16.mxu0 0
  %418 = vmatpush1.bf16.msra.mxu0 0
  %419 = vmatprep.subr.bf16.mxu0 0
  %420 = vmatpush1.bf16.msra.mxu0 0
  %421 = vmatprep.subr.bf16.mxu0 0
  %422 = vmatpush1.bf16.msra.mxu0 0
  %423 = vmatprep.subr.bf16.mxu0 0
  %424 = vmatpush1.bf16.msra.mxu0 0
  %425 = vmatprep.subr.bf16.mxu0 0
  %426 = vmatpush1.bf16.msra.mxu0 0
  %427 = vmatprep.subr.bf16.mxu0 0
  %428 = vmatpush1.bf16.msra.mxu0 0
  %429 = vmatprep.subr.bf16.mxu0 0
  %430 = vmatpush1.bf16.msra.mxu0 %v408
  %431 = vmatprep.subr.bf16.mxu0 0
  %432 = vmatpush1.bf16.msra.mxu0 %v407
  %433 = vmatprep.subr.bf16.mxu0 0
  %434 = vmatpush2.bf16.msra.mxu0 0
  %435 = vmatprep.subr.bf16.mxu0 0
  %436 = vmatpush2.bf16.msra.mxu0 0
  %437 = vmatprep.subr.bf16.mxu0 0
  %438 = vmatpush2.bf16.msra.mxu0 0
  %439 = vmatprep.subr.bf16.mxu0 0
  %440 = vmatpush2.bf16.msra.mxu0 0
  %441 = vmatprep.subr.bf16.mxu0 0
  %442 = vmatpush2.bf16.msra.mxu0 0
  %443 = vmatprep.subr.bf16.mxu0 0
  %444 = vmatpush2.bf16.msra.mxu0 0
  %445 = vmatprep.subr.bf16.mxu0 0
  %446 = vmatpush2.bf16.msra.mxu0 0
  %447 = vmatprep.subr.bf16.mxu0 0
  %448 = vmatpush2.bf16.msra.mxu0 0
  %449 = vmatprep.mubr.bf16.mxu0 0
  %450 = vmatmul.mubr.bf16.gmra.mxu0 %v412
  %v451 = vpop.f32.mrf.mxu0
  %v452 = vadd.f32 %v397, %v451
  %v453 = vpop.f32.mrf.mxu0
  %v454 = vpop.f32.mrf.mxu0
  %v455 = vadd.f32 %v397, %v454
  %v456 = vpop.f32.mrf.mxu0
  %457 = vmatprep.mubr.bf16.mxu0 0
  %458 = vmatmul.mubr.bf16.gmra.mxu0 %v415
  %v459 = vpop.f32.mrf.mxu0
  %v460 = vadd.f32 %v397, %v459
  %v461 = vpop.f32.mrf.mxu0
  %v462 = vpop.f32.mrf.mxu0
  %v463 = vpop.f32.mrf.mxu0
  %464 = vdwg.mxu0
  %v465 = vld [vmem:[%s17] sm:$0xf]
  %v466 = vld [vmem:[%s17 + $0x4] sm:$0xf]
  %v467 = vpack.c.bf16 %v371, %v370
  %v468 = vpack.c.bf16 %v373, %v372
  %v469 = vld [vmem:[%s19] sm:$0xff]
  %v470 = vld [vmem:[%s19 + $0x8] sm:$0xff]
  %472 = vset.pattern.permute.xlu0 0
  %473 = vperm.xlu0 %472, %v469
  %v474 = vpop.permute.xlu0 %473
  %477 = vset.pattern.permute.xlu0 0
  %478 = vperm.xlu0 %477, %v470
  %v479 = vpop.permute.xlu0 %478
  %v483 = vunpack.c.l.b16 %v465
  %v484 = vunpack.c.l.b16 %v466
  %v485 = vpack.c.b16 %v484, %v483
  %v487 = vsel %vm294, %v485, 0
  %489 = vmatprep.subr.bf16.mxu0 0
  %490 = vmatpush1.bf16.msra.mxu0 0
  %491 = vmatprep.subr.bf16.mxu0 0
  %492 = vmatpush1.bf16.msra.mxu0 0
  %493 = vmatprep.subr.bf16.mxu0 0
  %494 = vmatpush1.bf16.msra.mxu0 0
  %495 = vmatprep.subr.bf16.mxu0 0
  %496 = vmatpush1.bf16.msra.mxu0 0
  %497 = vmatprep.subr.bf16.mxu0 0
  %498 = vmatpush1.bf16.msra.mxu0 0
  %499 = vmatprep.subr.bf16.mxu0 0
  %500 = vmatpush1.bf16.msra.mxu0 0
  %501 = vmatprep.subr.bf16.mxu0 0
  %502 = vmatpush1.bf16.msra.mxu0 %v468
  %503 = vmatprep.subr.bf16.mxu0 0
  %504 = vmatpush1.bf16.msra.mxu0 %v467
  %505 = vmatprep.subr.bf16.mxu0 0
  %506 = vmatpush2.bf16.msra.mxu0 0
  %507 = vmatprep.subr.bf16.mxu0 0
  %508 = vmatpush2.bf16.msra.mxu0 0
  %509 = vmatprep.subr.bf16.mxu0 0
  %510 = vmatpush2.bf16.msra.mxu0 0
  %511 = vmatprep.subr.bf16.mxu0 0
  %512 = vmatpush2.bf16.msra.mxu0 0
  %513 = vmatprep.subr.bf16.mxu0 0
  %514 = vmatpush2.bf16.msra.mxu0 0
  %515 = vmatprep.subr.bf16.mxu0 0
  %516 = vmatpush2.bf16.msra.mxu0 0
  %517 = vmatprep.subr.bf16.mxu0 0
  %518 = vmatpush2.bf16.msra.mxu0 0
  %519 = vmatprep.subr.bf16.mxu0 0
  %520 = vmatpush2.bf16.msra.mxu0 0
  %521 = vmatprep.mubr.bf16.mxu0 0
  %522 = vmatmul.mubr.bf16.gmra.mxu0 %v487
  %v523 = vpop.f32.mrf.mxu0
  %v524 = vadd.f32 %v474, %v523
  %v525 = vpop.f32.mrf.mxu0
  %v526 = vpop.f32.mrf.mxu0
  %v527 = vadd.f32 %v479, %v526
  %v528 = vpop.f32.mrf.mxu0
  %529 = vdwg.mxu0
  %v530 = vld [vmem:[%s21] sm:$0xf]
  %v531 = vld [vmem:[%s21 + $0x4] sm:$0xf]
  %v532 = vld [vmem:[%s21 + $0x8] sm:$0xf]
  %v533 = vld [vmem:[%s21 + $0xc] sm:$0xf]
  %v534 = vld [vmem:[%s23] sm:$0x1]
  %v536 = vlaneseq
  %v537 = vshrl.u32 %v536, 7
  %v538 = vsub.s32 0, %v537
  %v539 = vrot.slane %v534, %v538
  %v545 = vunpack.c.l.b16 %v530
  %v546 = vunpack.c.l.b16 %v531
  %v547 = vunpack.c.l.b16 %v532
  %v548 = vunpack.c.l.b16 %v533
  %v549 = vpack.c.b16 %v546, %v545
  %v550 = vpack.c.b16 %v548, %v547
  %553 = vmatprep.subr.bf16.mxu0 0
  %554 = vmatpush1.bf16.msra.mxu0 0
  %555 = vmatprep.subr.bf16.mxu0 0
  %556 = vmatpush1.bf16.msra.mxu0 0
  %557 = vmatprep.subr.bf16.mxu0 0
  %558 = vmatpush1.bf16.msra.mxu0 0
  %559 = vmatprep.subr.bf16.mxu0 0
  %560 = vmatpush1.bf16.msra.mxu0 0
  %561 = vmatprep.subr.bf16.mxu0 0
  %562 = vmatpush1.bf16.msra.mxu0 0
  %563 = vmatprep.subr.bf16.mxu0 0
  %564 = vmatpush1.bf16.msra.mxu0 0
  %565 = vmatprep.subr.bf16.mxu0 0
  %566 = vmatpush1.bf16.msra.mxu0 %v550
  %567 = vmatprep.subr.bf16.mxu0 0
  %568 = vmatpush1.bf16.msra.mxu0 %v549
  %569 = vmatprep.subr.bf16.mxu0 0
  %570 = vmatpush2.bf16.msra.mxu0 0
  %571 = vmatprep.subr.bf16.mxu0 0
  %572 = vmatpush2.bf16.msra.mxu0 0
  %573 = vmatprep.subr.bf16.mxu0 0
  %574 = vmatpush2.bf16.msra.mxu0 0
  %575 = vmatprep.subr.bf16.mxu0 0
  %576 = vmatpush2.bf16.msra.mxu0 0
  %577 = vmatprep.subr.bf16.mxu0 0
  %578 = vmatpush2.bf16.msra.mxu0 0
  %579 = vmatprep.subr.bf16.mxu0 0
  %580 = vmatpush2.bf16.msra.mxu0 0
  %581 = vmatprep.subr.bf16.mxu0 0
  %582 = vmatpush2.bf16.msra.mxu0 0
  %583 = vmatprep.subr.bf16.mxu0 0
  %584 = vmatpush2.bf16.msra.mxu0 0
  %585 = vmatprep.mubr.bf16.mxu0 0
  %586 = vmatmul.mubr.bf16.gmra.mxu0 %v412
  %v587 = vpop.f32.mrf.mxu0
  %v588 = vadd.f32 %v539, %v587
  %v589 = vpop.f32.mrf.mxu0
  %v590 = vpop.f32.mrf.mxu0
  %v591 = vadd.f32 %v539, %v590
  %v592 = vpop.f32.mrf.mxu0
  %593 = vmatprep.mubr.bf16.mxu0 0
  %594 = vmatmul.mubr.bf16.gmra.mxu0 %v415
  %v595 = vpop.f32.mrf.mxu0
  %v596 = vadd.f32 %v539, %v595
  %v597 = vpop.f32.mrf.mxu0
  %v598 = vpop.f32.mrf.mxu0
  %v599 = vpop.f32.mrf.mxu0
  %600 = vdwg.mxu0
  %v601 = vpack.c.bf16 %v455, %v452
  %v602 = vpack.c.bf16 %v460, %v460
  %v603 = vpack.c.bf16 %v527, %v524
  %vm604 = vcmask 130048
  %v606 = vsel %vm604, %v601, 0
  %v609 = vsel %vm604, %v602, 0
  %611 = vmatprep.subr.bf16.mxu0 0
  %612 = vmatpush1.bf16.msra.mxu0 0
  %613 = vmatprep.subr.bf16.mxu0 0
  %614 = vmatpush1.bf16.msra.mxu0 0
  %615 = vmatprep.subr.bf16.mxu0 0
  %616 = vmatpush1.bf16.msra.mxu0 0
  %617 = vmatprep.subr.bf16.mxu0 0
  %618 = vmatpush1.bf16.msra.mxu0 0
  %619 = vmatprep.subr.bf16.mxu0 0
  %620 = vmatpush1.bf16.msra.mxu0 0
  %621 = vmatprep.subr.bf16.mxu0 0
  %622 = vmatpush1.bf16.msra.mxu0 0
  %623 = vmatprep.subr.bf16.mxu0 0
  %624 = vmatpush1.bf16.msra.mxu0 0
  %625 = vmatprep.subr.bf16.mxu0 0
  %626 = vmatpush1.bf16.msra.mxu0 %v603
  %627 = vmatprep.subr.bf16.mxu0 0
  %628 = vmatpush2.bf16.msra.mxu0 0
  %629 = vmatprep.subr.bf16.mxu0 0
  %630 = vmatpush2.bf16.msra.mxu0 0
  %631 = vmatprep.subr.bf16.mxu0 0
  %632 = vmatpush2.bf16.msra.mxu0 0
  %633 = vmatprep.subr.bf16.mxu0 0
  %634 = vmatpush2.bf16.msra.mxu0 0
  %635 = vmatprep.subr.bf16.mxu0 0
  %636 = vmatpush2.bf16.msra.mxu0 0
  %637 = vmatprep.subr.bf16.mxu0 0
  %638 = vmatpush2.bf16.msra.mxu0 0
  %639 = vmatprep.subr.bf16.mxu0 0
  %640 = vmatpush2.bf16.msra.mxu0 0
  %641 = vmatprep.subr.bf16.mxu0 0
  %642 = vmatpush2.bf16.msra.mxu0 0
  %643 = vmatprep.mubr.bf16.mxu0 0
  %644 = vmatmul.mubr.bf16.gmra.mxu0 %v606
  %v645 = vpop.f32.mrf.mxu0
  %v646 = vadd.f32 %v125, %v645
  %v647 = vpop.f32.mrf.mxu0
  %v648 = vpop.f32.mrf.mxu0
  %v649 = vadd.f32 %v126, %v648
  %v650 = vpop.f32.mrf.mxu0
  %651 = vmatprep.mubr.bf16.mxu0 0
  %652 = vmatmul.mubr.bf16.gmra.mxu0 %v609
  %v653 = vpop.f32.mrf.mxu0
  %v654 = vadd.f32 %v127, %v653
  %v655 = vpop.f32.mrf.mxu0
  %v656 = vpop.f32.mrf.mxu0
  %v657 = vpop.f32.mrf.mxu0
  %658 = vdwg.mxu0
  %vm659 = vcmask 162816
  %v660 = vsel %vm659, %v646, -inf
  %661 = vmax.xlane.f32.xlu0 %v660
  %v662 = vpop.xlane.xlu0 %661
  %v663 = vsel %vm659, %v649, -inf
  %664 = vmax.xlane.f32.xlu0 %v663
  %v665 = vpop.xlane.xlu0 %664
  %vm666 = vcmask 158720
  %v667 = vsel %vm666, %v654, -inf
  %668 = vmax.xlane.f32.xlu0 %v667
  %v669 = vpop.xlane.xlu0 %668
  %v670 = vsub.f32 %v646, %v662
  %v671 = vsub.f32 %v649, %v665
  %v672 = vsub.f32 %v654, %v669
  %v673 = vmul.f32 %v670, 1.442695
  %v674 = vpow.pop %v673
  %v675 = vmul.f32 %v671, 1.442695
  %v676 = vpow.pop %v675
  %v677 = vmul.f32 %v672, 1.442695
  %v678 = vpow.pop %v677
  %v679 = vsel %vm659, %v674, 0.0
  %680 = vadd.xlane.f32.xlu0 %v679
  %v681 = vpop.xlane.xlu0 %680
  %v682 = vsel %vm659, %v676, 0.0
  %683 = vadd.xlane.f32.xlu0 %v682
  %v684 = vpop.xlane.xlu0 %683
  %v685 = vsel %vm666, %v678, 0.0
  %686 = vadd.xlane.f32.xlu0 %v685
  %v687 = vpop.xlane.xlu0 %686
  %v688 = vrcp.pop %v681
  %v689 = vrcp.pop %v684
  %v690 = vrcp.pop %v687
  %v691 = vmul.f32 %v674, %v688
  %v692 = vmul.f32 %v676, %v689
  %v693 = vmul.f32 %v678, %v690
  %v694 = vpack.c.bf16 %v692, %v691
  %v695 = vpack.c.bf16 %v693, %v693
  %v696 = vpack.c.bf16 %v591, %v588
  %v697 = vpack.c.bf16 %v596, %v596
  %v699 = vsel %vm659, %v694, 0
  %v702 = vsel %vm659, %v695, 0
  %vm704 = vcmask 1041408
  %v706 = vsel %vm704, %v697, 0
  %708 = vmatprep.subr.bf16.mxu0 0
  %709 = vmatpush1.bf16.msra.mxu0 0
  %710 = vmatprep.subr.bf16.mxu0 0
  %711 = vmatpush1.bf16.msra.mxu0 0
  %712 = vmatprep.subr.bf16.mxu0 0
  %713 = vmatpush1.bf16.msra.mxu0 0
  %714 = vmatprep.subr.bf16.mxu0 0
  %715 = vmatpush1.bf16.msra.mxu0 0
  %716 = vmatprep.subr.bf16.mxu0 0
  %717 = vmatpush1.bf16.msra.mxu0 0
  %718 = vmatprep.subr.bf16.mxu0 0
  %719 = vmatpush1.bf16.msra.mxu0 0
  %720 = vmatprep.subr.bf16.mxu0 0
  %721 = vmatpush1.bf16.msra.mxu0 %v706
  %722 = vmatprep.subr.bf16.mxu0 0
  %723 = vmatpush1.bf16.msra.mxu0 %v696
  %724 = vmatprep.subr.bf16.mxu0 0
  %725 = vmatpush2.bf16.msra.mxu0 0
  %726 = vmatprep.subr.bf16.mxu0 0
  %727 = vmatpush2.bf16.msra.mxu0 0
  %728 = vmatprep.subr.bf16.mxu0 0
  %729 = vmatpush2.bf16.msra.mxu0 0
  %730 = vmatprep.subr.bf16.mxu0 0
  %731 = vmatpush2.bf16.msra.mxu0 0
  %732 = vmatprep.subr.bf16.mxu0 0
  %733 = vmatpush2.bf16.msra.mxu0 0
  %734 = vmatprep.subr.bf16.mxu0 0
  %735 = vmatpush2.bf16.msra.mxu0 0
  %736 = vmatprep.subr.bf16.mxu0 0
  %737 = vmatpush2.bf16.msra.mxu0 0
  %738 = vmatprep.subr.bf16.mxu0 0
  %739 = vmatpush2.bf16.msra.mxu0 0
  %740 = vmatprep.mubr.bf16.mxu0 0
  %741 = vmatmul.mubr.bf16.gmra.mxu0 %v699
  %v742 = vpop.f32.mrf.mxu0
  %v743 = vadd.f32 0.0, %v742
  %v744 = vpop.f32.mrf.mxu0
  %v745 = vpop.f32.mrf.mxu0
  %v746 = vadd.f32 0.0, %v745
  %v747 = vpop.f32.mrf.mxu0
  %748 = vmatprep.mubr.bf16.mxu0 0
  %749 = vmatmul.mubr.bf16.gmra.mxu0 %v702
  %v750 = vpop.f32.mrf.mxu0
  %v751 = vadd.f32 0.0, %v750
  %v752 = vpop.f32.mrf.mxu0
  %v753 = vpop.f32.mrf.mxu0
  %v754 = vpop.f32.mrf.mxu0
  %755 = vdwg.mxu0
  %v756 = vld [vmem:[%s25] sm:$0xf]
  %v757 = vld [vmem:[%s25 + $0x4] sm:$0xf]
  %v758 = vpack.c.bf16 %v746, %v743
  %v759 = vpack.c.bf16 %v751, %v751
  %s760 = scalar_lea.vmem %s13, 16
  %v761 = vld [vmem:[%s760] sm:$0xf]
  %v762 = vld [vmem:[%s760 + $0x4] sm:$0xf]
  %v763 = vld [vmem:[%s760 + $0x8] sm:$0xf]
  %v764 = vld [vmem:[%s760 + $0xc] sm:$0xf]
  %s765 = scalar_lea.vmem %s15, 1
  %v766 = vld [vmem:[%s765] sm:$0x1]
  %v768 = vlaneseq
  %v769 = vshrl.u32 %v768, 7
  %v770 = vsub.s32 0, %v769
  %v771 = vrot.slane %v766, %v770
  %v777 = vunpack.c.l.b16 %v761
  %v778 = vunpack.c.l.b16 %v762
  %v779 = vunpack.c.l.b16 %v763
  %v780 = vunpack.c.l.b16 %v764
  %v781 = vpack.c.b16 %v778, %v777
  %v782 = vpack.c.b16 %v780, %v779
  %785 = vmatprep.subr.bf16.mxu0 0
  %786 = vmatpush1.bf16.msra.mxu0 0
  %787 = vmatprep.subr.bf16.mxu0 0
  %788 = vmatpush1.bf16.msra.mxu0 0
  %789 = vmatprep.subr.bf16.mxu0 0
  %790 = vmatpush1.bf16.msra.mxu0 0
  %791 = vmatprep.subr.bf16.mxu0 0
  %792 = vmatpush1.bf16.msra.mxu0 0
  %793 = vmatprep.subr.bf16.mxu0 0
  %794 = vmatpush1.bf16.msra.mxu0 0
  %795 = vmatprep.subr.bf16.mxu0 0
  %796 = vmatpush1.bf16.msra.mxu0 0
  %797 = vmatprep.subr.bf16.mxu0 0
  %798 = vmatpush1.bf16.msra.mxu0 %v782
  %799 = vmatprep.subr.bf16.mxu0 0
  %800 = vmatpush1.bf16.msra.mxu0 %v781
  %801 = vmatprep.subr.bf16.mxu0 0
  %802 = vmatpush2.bf16.msra.mxu0 0
  %803 = vmatprep.subr.bf16.mxu0 0
  %804 = vmatpush2.bf16.msra.mxu0 0
  %805 = vmatprep.subr.bf16.mxu0 0
  %806 = vmatpush2.bf16.msra.mxu0 0
  %807 = vmatprep.subr.bf16.mxu0 0
  %808 = vmatpush2.bf16.msra.mxu0 0
  %809 = vmatprep.subr.bf16.mxu0 0
  %810 = vmatpush2.bf16.msra.mxu0 0
  %811 = vmatprep.subr.bf16.mxu0 0
  %812 = vmatpush2.bf16.msra.mxu0 0
  %813 = vmatprep.subr.bf16.mxu0 0
  %814 = vmatpush2.bf16.msra.mxu0 0
  %815 = vmatprep.subr.bf16.mxu0 0
  %816 = vmatpush2.bf16.msra.mxu0 0
  %817 = vmatprep.mubr.bf16.mxu0 0
  %818 = vmatmul.mubr.bf16.gmra.mxu0 %v412
  %v819 = vpop.f32.mrf.mxu0
  %v820 = vadd.f32 %v771, %v819
  %v821 = vpop.f32.mrf.mxu0
  %v822 = vpop.f32.mrf.mxu0
  %v823 = vadd.f32 %v771, %v822
  %v824 = vpop.f32.mrf.mxu0
  %825 = vmatprep.mubr.bf16.mxu0 0
  %826 = vmatmul.mubr.bf16.gmra.mxu0 %v415
  %v827 = vpop.f32.mrf.mxu0
  %v828 = vadd.f32 %v771, %v827
  %v829 = vpop.f32.mrf.mxu0
  %v830 = vpop.f32.mrf.mxu0
  %v831 = vpop.f32.mrf.mxu0
  %832 = vdwg.mxu0
  %s833 = scalar_lea.vmem %s17, 8
  %v834 = vld [vmem:[%s833] sm:$0xf]
  %v835 = vld [vmem:[%s833 + $0x4] sm:$0xf]
  %s836 = scalar_lea.vmem %s19, 16
  %v837 = vld [vmem:[%s836] sm:$0xff]
  %v838 = vld [vmem:[%s836 + $0x8] sm:$0xff]
  %840 = vset.pattern.permute.xlu0 0
  %841 = vperm.xlu0 %840, %v837
  %v842 = vpop.permute.xlu0 %841
  %845 = vset.pattern.permute.xlu0 0
  %846 = vperm.xlu0 %845, %v838
  %v847 = vpop.permute.xlu0 %846
  %v851 = vunpack.c.l.b16 %v834
  %v852 = vunpack.c.l.b16 %v835
  %v853 = vpack.c.b16 %v852, %v851
  %v855 = vsel %vm294, %v853, 0
  %857 = vmatprep.subr.bf16.mxu0 0
  %858 = vmatpush1.bf16.msra.mxu0 0
  %859 = vmatprep.subr.bf16.mxu0 0
  %860 = vmatpush1.bf16.msra.mxu0 0
  %861 = vmatprep.subr.bf16.mxu0 0
  %862 = vmatpush1.bf16.msra.mxu0 0
  %863 = vmatprep.subr.bf16.mxu0 0
  %864 = vmatpush1.bf16.msra.mxu0 0
  %865 = vmatprep.subr.bf16.mxu0 0
  %866 = vmatpush1.bf16.msra.mxu0 0
  %867 = vmatprep.subr.bf16.mxu0 0
  %868 = vmatpush1.bf16.msra.mxu0 0
  %869 = vmatprep.subr.bf16.mxu0 0
  %870 = vmatpush1.bf16.msra.mxu0 %v468
  %871 = vmatprep.subr.bf16.mxu0 0
  %872 = vmatpush1.bf16.msra.mxu0 %v467
  %873 = vmatprep.subr.bf16.mxu0 0
  %874 = vmatpush2.bf16.msra.mxu0 0
  %875 = vmatprep.subr.bf16.mxu0 0
  %876 = vmatpush2.bf16.msra.mxu0 0
  %877 = vmatprep.subr.bf16.mxu0 0
  %878 = vmatpush2.bf16.msra.mxu0 0
  %879 = vmatprep.subr.bf16.mxu0 0
  %880 = vmatpush2.bf16.msra.mxu0 0
  %881 = vmatprep.subr.bf16.mxu0 0
  %882 = vmatpush2.bf16.msra.mxu0 0
  %883 = vmatprep.subr.bf16.mxu0 0
  %884 = vmatpush2.bf16.msra.mxu0 0
  %885 = vmatprep.subr.bf16.mxu0 0
  %886 = vmatpush2.bf16.msra.mxu0 0
  %887 = vmatprep.subr.bf16.mxu0 0
  %888 = vmatpush2.bf16.msra.mxu0 0
  %889 = vmatprep.mubr.bf16.mxu0 0
  %890 = vmatmul.mubr.bf16.gmra.mxu0 %v855
  %v891 = vpop.f32.mrf.mxu0
  %v892 = vadd.f32 %v842, %v891
  %v893 = vpop.f32.mrf.mxu0
  %v894 = vpop.f32.mrf.mxu0
  %v895 = vadd.f32 %v847, %v894
  %v896 = vpop.f32.mrf.mxu0
  %897 = vdwg.mxu0
  %s898 = scalar_lea.vmem %s21, 16
  %v899 = vld [vmem:[%s898] sm:$0xf]
  %v900 = vld [vmem:[%s898 + $0x4] sm:$0xf]
  %v901 = vld [vmem:[%s898 + $0x8] sm:$0xf]
  %v902 = vld [vmem:[%s898 + $0xc] sm:$0xf]
  %s903 = scalar_lea.vmem %s23, 1
  %v904 = vld [vmem:[%s903] sm:$0x1]
  %v906 = vlaneseq
  %v907 = vshrl.u32 %v906, 7
  %v908 = vsub.s32 0, %v907
  %v909 = vrot.slane %v904, %v908
  %v915 = vunpack.c.l.b16 %v899
  %v916 = vunpack.c.l.b16 %v900
  %v917 = vunpack.c.l.b16 %v901
  %v918 = vunpack.c.l.b16 %v902
  %v919 = vpack.c.b16 %v916, %v915
  %v920 = vpack.c.b16 %v918, %v917
  %923 = vmatprep.subr.bf16.mxu0 0
  %924 = vmatpush1.bf16.msra.mxu0 0
  %925 = vmatprep.subr.bf16.mxu0 0
  %926 = vmatpush1.bf16.msra.mxu0 0
  %927 = vmatprep.subr.bf16.mxu0 0
  %928 = vmatpush1.bf16.msra.mxu0 0
  %929 = vmatprep.subr.bf16.mxu0 0
  %930 = vmatpush1.bf16.msra.mxu0 0
  %931 = vmatprep.subr.bf16.mxu0 0
  %932 = vmatpush1.bf16.msra.mxu0 0
  %933 = vmatprep.subr.bf16.mxu0 0
  %934 = vmatpush1.bf16.msra.mxu0 0
  %935 = vmatprep.subr.bf16.mxu0 0
  %936 = vmatpush1.bf16.msra.mxu0 %v920
  %937 = vmatprep.subr.bf16.mxu0 0
  %938 = vmatpush1.bf16.msra.mxu0 %v919
  %939 = vmatprep.subr.bf16.mxu0 0
  %940 = vmatpush2.bf16.msra.mxu0 0
  %941 = vmatprep.subr.bf16.mxu0 0
  %942 = vmatpush2.bf16.msra.mxu0 0
  %943 = vmatprep.subr.bf16.mxu0 0
  %944 = vmatpush2.bf16.msra.mxu0 0
  %945 = vmatprep.subr.bf16.mxu0 0
  %946 = vmatpush2.bf16.msra.mxu0 0
  %947 = vmatprep.subr.bf16.mxu0 0
  %948 = vmatpush2.bf16.msra.mxu0 0
  %949 = vmatprep.subr.bf16.mxu0 0
  %950 = vmatpush2.bf16.msra.mxu0 0
  %951 = vmatprep.subr.bf16.mxu0 0
  %952 = vmatpush2.bf16.msra.mxu0 0
  %953 = vmatprep.subr.bf16.mxu0 0
  %954 = vmatpush2.bf16.msra.mxu0 0
  %955 = vmatprep.mubr.bf16.mxu0 0
  %956 = vmatmul.mubr.bf16.gmra.mxu0 %v412
  %v957 = vpop.f32.mrf.mxu0
  %v958 = vadd.f32 %v909, %v957
  %v959 = vpop.f32.mrf.mxu0
  %v960 = vpop.f32.mrf.mxu0
  %v961 = vadd.f32 %v909, %v960
  %v962 = vpop.f32.mrf.mxu0
  %963 = vmatprep.mubr.bf16.mxu0 0
  %964 = vmatmul.mubr.bf16.gmra.mxu0 %v415
  %v965 = vpop.f32.mrf.mxu0
  %v966 = vadd.f32 %v909, %v965
  %v967 = vpop.f32.mrf.mxu0
  %v968 = vpop.f32.mrf.mxu0
  %v969 = vpop.f32.mrf.mxu0
  %970 = vdwg.mxu0
  %v971 = vpack.c.bf16 %v823, %v820
  %v972 = vpack.c.bf16 %v828, %v828
  %v973 = vpack.c.bf16 %v895, %v892
  %v975 = vsel %vm604, %v971, 0
  %v978 = vsel %vm604, %v972, 0
  %980 = vmatprep.subr.bf16.mxu0 0
  %981 = vmatpush1.bf16.msra.mxu0 0
  %982 = vmatprep.subr.bf16.mxu0 0
  %983 = vmatpush1.bf16.msra.mxu0 0
  %984 = vmatprep.subr.bf16.mxu0 0
  %985 = vmatpush1.bf16.msra.mxu0 0
  %986 = vmatprep.subr.bf16.mxu0 0
  %987 = vmatpush1.bf16.msra.mxu0 0
  %988 = vmatprep.subr.bf16.mxu0 0
  %989 = vmatpush1.bf16.msra.mxu0 0
  %990 = vmatprep.subr.bf16.mxu0 0
  %991 = vmatpush1.bf16.msra.mxu0 0
  %992 = vmatprep.subr.bf16.mxu0 0
  %993 = vmatpush1.bf16.msra.mxu0 0
  %994 = vmatprep.subr.bf16.mxu0 0
  %995 = vmatpush1.bf16.msra.mxu0 %v973
  %996 = vmatprep.subr.bf16.mxu0 0
  %997 = vmatpush2.bf16.msra.mxu0 0
  %998 = vmatprep.subr.bf16.mxu0 0
  %999 = vmatpush2.bf16.msra.mxu0 0
  %1000 = vmatprep.subr.bf16.mxu0 0
  %1001 = vmatpush2.bf16.msra.mxu0 0
  %1002 = vmatprep.subr.bf16.mxu0 0
  %1003 = vmatpush2.bf16.msra.mxu0 0
  %1004 = vmatprep.subr.bf16.mxu0 0
  %1005 = vmatpush2.bf16.msra.mxu0 0
  %1006 = vmatprep.subr.bf16.mxu0 0
  %1007 = vmatpush2.bf16.msra.mxu0 0
  %1008 = vmatprep.subr.bf16.mxu0 0
  %1009 = vmatpush2.bf16.msra.mxu0 0
  %1010 = vmatprep.subr.bf16.mxu0 0
  %1011 = vmatpush2.bf16.msra.mxu0 0
  %1012 = vmatprep.mubr.bf16.mxu0 0
  %1013 = vmatmul.mubr.bf16.gmra.mxu0 %v975
  %v1014 = vpop.f32.mrf.mxu0
  %v1015 = vadd.f32 %v125, %v1014
  %v1016 = vpop.f32.mrf.mxu0
  %v1017 = vpop.f32.mrf.mxu0
  %v1018 = vadd.f32 %v126, %v1017
  %v1019 = vpop.f32.mrf.mxu0
  %1020 = vmatprep.mubr.bf16.mxu0 0
  %1021 = vmatmul.mubr.bf16.gmra.mxu0 %v978
  %v1022 = vpop.f32.mrf.mxu0
  %v1023 = vadd.f32 %v127, %v1022
  %v1024 = vpop.f32.mrf.mxu0
  %v1025 = vpop.f32.mrf.mxu0
  %v1026 = vpop.f32.mrf.mxu0
  %1027 = vdwg.mxu0
  %v1028 = vsel %vm659, %v1015, -inf
  %1029 = vmax.xlane.f32.xlu0 %v1028
  %v1030 = vpop.xlane.xlu0 %1029
  %v1031 = vsel %vm659, %v1018, -inf
  %1032 = vmax.xlane.f32.xlu0 %v1031
  %v1033 = vpop.xlane.xlu0 %1032
  %v1034 = vsel %vm666, %v1023, -inf
  %1035 = vmax.xlane.f32.xlu0 %v1034
  %v1036 = vpop.xlane.xlu0 %1035
  %v1037 = vsub.f32 %v1015, %v1030
  %v1038 = vsub.f32 %v1018, %v1033
  %v1039 = vsub.f32 %v1023, %v1036
  %v1040 = vmul.f32 %v1037, 1.442695
  %v1041 = vpow.pop %v1040
  %v1042 = vmul.f32 %v1038, 1.442695
  %v1043 = vpow.pop %v1042
  %v1044 = vmul.f32 %v1039, 1.442695
  %v1045 = vpow.pop %v1044
  %v1046 = vsel %vm659, %v1041, 0.0
  %1047 = vadd.xlane.f32.xlu0 %v1046
  %v1048 = vpop.xlane.xlu0 %1047
  %v1049 = vsel %vm659, %v1043, 0.0
  %1050 = vadd.xlane.f32.xlu0 %v1049
  %v1051 = vpop.xlane.xlu0 %1050
  %v1052 = vsel %vm666, %v1045, 0.0
  %1053 = vadd.xlane.f32.xlu0 %v1052
  %v1054 = vpop.xlane.xlu0 %1053
  %v1055 = vrcp.pop %v1048
  %v1056 = vrcp.pop %v1051
  %v1057 = vrcp.pop %v1054
  %v1058 = vmul.f32 %v1041, %v1055
  %v1059 = vmul.f32 %v1043, %v1056
  %v1060 = vmul.f32 %v1045, %v1057
  %v1061 = vpack.c.bf16 %v1059, %v1058
  %v1062 = vpack.c.bf16 %v1060, %v1060
  %v1063 = vpack.c.bf16 %v961, %v958
  %v1064 = vpack.c.bf16 %v966, %v966
  %v1066 = vsel %vm659, %v1061, 0
  %v1069 = vsel %vm659, %v1062, 0
  %v1072 = vsel %vm704, %v1064, 0
  %1074 = vmatprep.subr.bf16.mxu0 0
  %1075 = vmatpush1.bf16.msra.mxu0 0
  %1076 = vmatprep.subr.bf16.mxu0 0
  %1077 = vmatpush1.bf16.msra.mxu0 0
  %1078 = vmatprep.subr.bf16.mxu0 0
  %1079 = vmatpush1.bf16.msra.mxu0 0
  %1080 = vmatprep.subr.bf16.mxu0 0
  %1081 = vmatpush1.bf16.msra.mxu0 0
  %1082 = vmatprep.subr.bf16.mxu0 0
  %1083 = vmatpush1.bf16.msra.mxu0 0
  %1084 = vmatprep.subr.bf16.mxu0 0
  %1085 = vmatpush1.bf16.msra.mxu0 0
  %1086 = vmatprep.subr.bf16.mxu0 0
  %1087 = vmatpush1.bf16.msra.mxu0 %v1072
  %1088 = vmatprep.subr.bf16.mxu0 0
  %1089 = vmatpush1.bf16.msra.mxu0 %v1063
  %1090 = vmatprep.subr.bf16.mxu0 0
  %1091 = vmatpush2.bf16.msra.mxu0 0
  %1092 = vmatprep.subr.bf16.mxu0 0
  %1093 = vmatpush2.bf16.msra.mxu0 0
  %1094 = vmatprep.subr.bf16.mxu0 0
  %1095 = vmatpush2.bf16.msra.mxu0 0
  %1096 = vmatprep.subr.bf16.mxu0 0
  %1097 = vmatpush2.bf16.msra.mxu0 0
  %1098 = vmatprep.subr.bf16.mxu0 0
  %1099 = vmatpush2.bf16.msra.mxu0 0
  %1100 = vmatprep.subr.bf16.mxu0 0
  %1101 = vmatpush2.bf16.msra.mxu0 0
  %1102 = vmatprep.subr.bf16.mxu0 0
  %1103 = vmatpush2.bf16.msra.mxu0 0
  %1104 = vmatprep.subr.bf16.mxu0 0
  %1105 = vmatpush2.bf16.msra.mxu0 0
  %1106 = vmatprep.mubr.bf16.mxu0 0
  %1107 = vmatmul.mubr.bf16.gmra.mxu0 %v1066
  %v1108 = vpop.f32.mrf.mxu0
  %v1109 = vadd.f32 0.0, %v1108
  %v1110 = vpop.f32.mrf.mxu0
  %v1111 = vpop.f32.mrf.mxu0
  %v1112 = vadd.f32 0.0, %v1111
  %v1113 = vpop.f32.mrf.mxu0
  %1114 = vmatprep.mubr.bf16.mxu0 0
  %1115 = vmatmul.mubr.bf16.gmra.mxu0 %v1069
  %v1116 = vpop.f32.mrf.mxu0
  %v1117 = vadd.f32 0.0, %v1116
  %v1118 = vpop.f32.mrf.mxu0
  %v1119 = vpop.f32.mrf.mxu0
  %v1120 = vpop.f32.mrf.mxu0
  %1121 = vdwg.mxu0
  %s1122 = scalar_lea.vmem %s25, 8
  %v1123 = vld [vmem:[%s1122] sm:$0xf]
  %v1124 = vld [vmem:[%s1122 + $0x4] sm:$0xf]
  %v1125 = vpack.c.bf16 %v1112, %v1109
  %v1126 = vpack.c.bf16 %v1117, %v1117
  %v1129 = vunpack.c.l.b16 %v1123
  %v1130 = vunpack.c.l.b16 %v1124
  %v1131 = vpack.c.b16 %v1130, %v1129
  %v1134 = vsel %vm604, %v1125, 0
  %v1137 = vsel %vm604, %v1126, 0
  %1139 = vmatprep.subr.bf16.mxu0 0
  %1140 = vmatpush1.bf16.msra.mxu0 0
  %1141 = vmatprep.subr.bf16.mxu0 0
  %1142 = vmatpush1.bf16.msra.mxu0 0
  %1143 = vmatprep.subr.bf16.mxu0 0
  %1144 = vmatpush1.bf16.msra.mxu0 0
  %1145 = vmatprep.subr.bf16.mxu0 0
  %1146 = vmatpush1.bf16.msra.mxu0 0
  %1147 = vmatprep.subr.bf16.mxu0 0
  %1148 = vmatpush1.bf16.msra.mxu0 0
  %1149 = vmatprep.subr.bf16.mxu0 0
  %1150 = vmatpush1.bf16.msra.mxu0 0
  %1151 = vmatprep.subr.bf16.mxu0 0
  %1152 = vmatpush1.bf16.msra.mxu0 0
  %1153 = vmatprep.subr.bf16.mxu0 0
  %1154 = vmatpush1.bf16.msra.mxu0 %v1131
  %1155 = vmatprep.subr.bf16.mxu0 0
  %1156 = vmatpush2.bf16.msra.mxu0 0
  %1157 = vmatprep.subr.bf16.mxu0 0
  %1158 = vmatpush2.bf16.msra.mxu0 0
  %1159 = vmatprep.subr.bf16.mxu0 0
  %1160 = vmatpush2.bf16.msra.mxu0 0
  %1161 = vmatprep.subr.bf16.mxu0 0
  %1162 = vmatpush2.bf16.msra.mxu0 0
  %1163 = vmatprep.subr.bf16.mxu0 0
  %1164 = vmatpush2.bf16.msra.mxu0 0
  %1165 = vmatprep.subr.bf16.mxu0 0
  %1166 = vmatpush2.bf16.msra.mxu0 0
  %1167 = vmatprep.subr.bf16.mxu0 0
  %1168 = vmatpush2.bf16.msra.mxu0 0
  %1169 = vmatprep.subr.bf16.mxu0 0
  %1170 = vmatpush2.bf16.msra.mxu0 0
  %1171 = vmatprep.mubr.bf16.mxu0 0
  %1172 = vmatmul.mubr.bf16.gmra.mxu0 %v1134
  %v1173 = vpop.f32.mrf.mxu0
  %v1174 = vadd.f32 0.0, %v1173
  %v1175 = vpop.f32.mrf.mxu0
  %v1176 = vpop.f32.mrf.mxu0
  %v1177 = vadd.f32 0.0, %v1176
  %v1178 = vpop.f32.mrf.mxu0
  %1179 = vmatprep.mubr.bf16.mxu0 0
  %1180 = vmatmul.mubr.bf16.gmra.mxu0 %v1137
  %v1181 = vpop.f32.mrf.mxu0
  %v1182 = vadd.f32 0.0, %v1181
  %v1183 = vpop.f32.mrf.mxu0
  %v1184 = vpop.f32.mrf.mxu0
  %v1185 = vpop.f32.mrf.mxu0
  %1186 = vdwg.mxu0
  %v1189 = vunpack.c.l.b16 %v756
  %v1190 = vunpack.c.l.b16 %v757
  %v1191 = vpack.c.b16 %v1190, %v1189
  %v1194 = vsel %vm604, %v758, 0
  %v1197 = vsel %vm604, %v759, 0
  %1199 = vmatprep.subr.bf16.mxu0 0
  %1200 = vmatpush1.bf16.msra.mxu0 0
  %1201 = vmatprep.subr.bf16.mxu0 0
  %1202 = vmatpush1.bf16.msra.mxu0 0
  %1203 = vmatprep.subr.bf16.mxu0 0
  %1204 = vmatpush1.bf16.msra.mxu0 0
  %1205 = vmatprep.subr.bf16.mxu0 0
  %1206 = vmatpush1.bf16.msra.mxu0 0
  %1207 = vmatprep.subr.bf16.mxu0 0
  %1208 = vmatpush1.bf16.msra.mxu0 0
  %1209 = vmatprep.subr.bf16.mxu0 0
  %1210 = vmatpush1.bf16.msra.mxu0 0
  %1211 = vmatprep.subr.bf16.mxu0 0
  %1212 = vmatpush1.bf16.msra.mxu0 0
  %1213 = vmatprep.subr.bf16.mxu0 0
  %1214 = vmatpush1.bf16.msra.mxu0 %v1191
  %1215 = vmatprep.subr.bf16.mxu0 0
  %1216 = vmatpush2.bf16.msra.mxu0 0
  %1217 = vmatprep.subr.bf16.mxu0 0
  %1218 = vmatpush2.bf16.msra.mxu0 0
  %1219 = vmatprep.subr.bf16.mxu0 0
  %1220 = vmatpush2.bf16.msra.mxu0 0
  %1221 = vmatprep.subr.bf16.mxu0 0
  %1222 = vmatpush2.bf16.msra.mxu0 0
  %1223 = vmatprep.subr.bf16.mxu0 0
  %1224 = vmatpush2.bf16.msra.mxu0 0
  %1225 = vmatprep.subr.bf16.mxu0 0
  %1226 = vmatpush2.bf16.msra.mxu0 0
  %1227 = vmatprep.subr.bf16.mxu0 0
  %1228 = vmatpush2.bf16.msra.mxu0 0
  %1229 = vmatprep.subr.bf16.mxu0 0
  %1230 = vmatpush2.bf16.msra.mxu0 0
  %1231 = vmatprep.mubr.bf16.mxu0 0
  %1232 = vmatmul.mubr.bf16.gmra.mxu0 %v1194
  %v1233 = vpop.f32.mrf.mxu0
  %v1234 = vadd.f32 %v1174, %v1233
  %v1235 = vpop.f32.mrf.mxu0
  %v1236 = vpop.f32.mrf.mxu0
  %v1237 = vadd.f32 %v1177, %v1236
  %v1238 = vpop.f32.mrf.mxu0
  %1239 = vmatprep.mubr.bf16.mxu0 0
  %1240 = vmatmul.mubr.bf16.gmra.mxu0 %v1197
  %v1241 = vpop.f32.mrf.mxu0
  %v1242 = vadd.f32 %v1182, %v1241
  %v1243 = vpop.f32.mrf.mxu0
  %v1244 = vpop.f32.mrf.mxu0
  %v1245 = vpop.f32.mrf.mxu0
  %1246 = vdwg.mxu0
  %v1247 = vadd.f32 %v279, %v1234
  %v1248 = vadd.f32 %v282, %v1237
  %v1249 = vadd.f32 %v287, %v1242
  %v1250 = vld [vmem:[%s27] sm:$0x1]
  %v1252 = vlaneseq
  %v1253 = vshrl.u32 %v1252, 7
  %v1254 = vsub.s32 0, %v1253
  %v1255 = vrot.slane %v1250, %v1254
  %v1257 = vadd.f32 %v1247, %v1255
  %v1258 = vadd.f32 %v1248, %v1255
  %v1259 = vadd.f32 %v1249, %v1255
  %v1260 = vld [vmem:[%s29] sm:$0x1]
  %v1261 = vld [vmem:[%s31] sm:$0x1]
  %v1262 = vsel %vm294, %v1257, 0.0
  %1263 = vadd.xlane.f32.xlu0 %v1262
  %v1264 = vpop.xlane.xlu0 %1263
  %v1265 = vsel %vm294, %v1258, 0.0
  %1266 = vadd.xlane.f32.xlu0 %v1265
  %v1267 = vpop.xlane.xlu0 %1266
  %v1268 = vsel %vm301, %v1259, 0.0
  %1269 = vadd.xlane.f32.xlu0 %v1268
  %v1270 = vpop.xlane.xlu0 %1269
  %v1271 = vmul.f32 %v1264, %v305
  %v1272 = vmul.f32 %v1267, %v305
  %v1273 = vmul.f32 %v1270, %v305
  %v1274 = vsub.f32 %v1257, %v1271
  %v1275 = vsub.f32 %v1258, %v1272
  %v1276 = vsub.f32 %v1259, %v1273
  %v1277 = vmul.f32 %v1274, %v1274
  %v1278 = vmul.f32 %v1275, %v1275
  %v1279 = vmul.f32 %v1276, %v1276
  %v1280 = vsel %vm294, %v1277, 0.0
  %1281 = vadd.xlane.f32.xlu0 %v1280
  %v1282 = vpop.xlane.xlu0 %1281
  %v1283 = vsel %vm294, %v1278, 0.0
  %1284 = vadd.xlane.f32.xlu0 %v1283
  %v1285 = vpop.xlane.xlu0 %1284
  %v1286 = vsel %vm301, %v1279, 0.0
  %1287 = vadd.xlane.f32.xlu0 %v1286
  %v1288 = vpop.xlane.xlu0 %1287
  %v1289 = vmul.f32 %v1282, %v305
  %v1290 = vmul.f32 %v1285, %v305
  %v1291 = vmul.f32 %v1288, %v305
  %v1292 = vadd.f32 %v1289, 1e-12
  %v1293 = vadd.f32 %v1290, 1e-12
  %v1294 = vadd.f32 %v1291, 1e-12
  %v1295 = vrsqrt.pop %v1292
  %v1296 = vrsqrt.pop %v1293
  %v1297 = vrsqrt.pop %v1294
  %v1298 = vmul.f32 %v1274, %v1295
  %v1299 = vmul.f32 %v1275, %v1296
  %v1300 = vmul.f32 %v1276, %v1297
  %v1302 = vlaneseq
  %v1303 = vshrl.u32 %v1302, 7
  %v1304 = vsub.s32 0, %v1303
  %v1305 = vrot.slane %v1260, %v1304
  %v1307 = vmul.f32 %v1298, %v1305
  %v1308 = vmul.f32 %v1299, %v1305
  %v1309 = vmul.f32 %v1300, %v1305
  %v1311 = vlaneseq
  %v1312 = vshrl.u32 %v1311, 7
  %v1313 = vsub.s32 0, %v1312
  %v1314 = vrot.slane %v1261, %v1313
  %v1316 = vadd.f32 %v1307, %v1314
  %v1317 = vadd.f32 %v1308, %v1314
  %v1318 = vadd.f32 %v1309, %v1314
  %v1319 = vld [vmem:[%s33] sm:$0xf]
  %v1320 = vld [vmem:[%s33 + $0x4] sm:$0xf]
  %v1321 = vld [vmem:[%s33 + $0x8] sm:$0xf]
  %v1322 = vld [vmem:[%s33 + $0xc] sm:$0xf]
  %v1323 = vpack.c.bf16 %v1317, %v1316
  %v1324 = vpack.c.bf16 %v1318, %v1318
  %v1325 = vld [vmem:[%s35] sm:$0x1]
  %v1327 = vlaneseq
  %v1328 = vshrl.u32 %v1327, 7
  %v1329 = vsub.s32 0, %v1328
  %v1330 = vrot.slane %v1325, %v1329
  %v1336 = vunpack.c.l.b16 %v1319
  %v1337 = vunpack.c.l.b16 %v1320
  %v1338 = vunpack.c.l.b16 %v1321
  %v1339 = vunpack.c.l.b16 %v1322
  %v1340 = vpack.c.b16 %v1337, %v1336
  %v1341 = vpack.c.b16 %v1339, %v1338
  %v1345 = vsel %vm294, %v1323, 0
  %v1348 = vsel %vm294, %v1324, 0
  %1350 = vmatprep.subr.bf16.mxu0 0
  %1351 = vmatpush1.bf16.msra.mxu0 0
  %1352 = vmatprep.subr.bf16.mxu0 0
  %1353 = vmatpush1.bf16.msra.mxu0 0
  %1354 = vmatprep.subr.bf16.mxu0 0
  %1355 = vmatpush1.bf16.msra.mxu0 0
  %1356 = vmatprep.subr.bf16.mxu0 0
  %1357 = vmatpush1.bf16.msra.mxu0 0
  %1358 = vmatprep.subr.bf16.mxu0 0
  %1359 = vmatpush1.bf16.msra.mxu0 0
  %1360 = vmatprep.subr.bf16.mxu0 0
  %1361 = vmatpush1.bf16.msra.mxu0 0
  %1362 = vmatprep.subr.bf16.mxu0 0
  %1363 = vmatpush1.bf16.msra.mxu0 %v1341
  %1364 = vmatprep.subr.bf16.mxu0 0
  %1365 = vmatpush1.bf16.msra.mxu0 %v1340
  %1366 = vmatprep.subr.bf16.mxu0 0
  %1367 = vmatpush2.bf16.msra.mxu0 0
  %1368 = vmatprep.subr.bf16.mxu0 0
  %1369 = vmatpush2.bf16.msra.mxu0 0
  %1370 = vmatprep.subr.bf16.mxu0 0
  %1371 = vmatpush2.bf16.msra.mxu0 0
  %1372 = vmatprep.subr.bf16.mxu0 0
  %1373 = vmatpush2.bf16.msra.mxu0 0
  %1374 = vmatprep.subr.bf16.mxu0 0
  %1375 = vmatpush2.bf16.msra.mxu0 0
  %1376 = vmatprep.subr.bf16.mxu0 0
  %1377 = vmatpush2.bf16.msra.mxu0 0
  %1378 = vmatprep.subr.bf16.mxu0 0
  %1379 = vmatpush2.bf16.msra.mxu0 0
  %1380 = vmatprep.subr.bf16.mxu0 0
  %1381 = vmatpush2.bf16.msra.mxu0 0
  %1382 = vmatprep.mubr.bf16.mxu0 0
  %1383 = vmatmul.mubr.bf16.gmra.mxu0 %v1345
  %v1384 = vpop.f32.mrf.mxu0
  %v1385 = vadd.f32 %v1330, %v1384
  %v1386 = vpop.f32.mrf.mxu0
  %v1387 = vpop.f32.mrf.mxu0
  %v1388 = vadd.f32 %v1330, %v1387
  %v1389 = vpop.f32.mrf.mxu0
  %1390 = vmatprep.mubr.bf16.mxu0 0
  %1391 = vmatmul.mubr.bf16.gmra.mxu0 %v1348
  %v1392 = vpop.f32.mrf.mxu0
  %v1393 = vadd.f32 %v1330, %v1392
  %v1394 = vpop.f32.mrf.mxu0
  %v1395 = vpop.f32.mrf.mxu0
  %v1396 = vpop.f32.mrf.mxu0
  %1397 = vdwg.mxu0
  %v1398 = vmul.f32 %v1385, 0.5
  %v1399 = vmul.f32 %v1388, 0.5
  %v1400 = vmul.f32 %v1393, 0.5
  %v1401 = vmul.f32 %v1385, 0.044715
  %v1402 = vmul.f32 %v1388, 0.044715
  %v1403 = vmul.f32 %v1393, 0.044715
  %v1404 = vmul.f32 %v1401, %v1385
  %v1405 = vmul.f32 %v1402, %v1388
  %v1406 = vmul.f32 %v1403, %v1393
  %v1407 = vmul.f32 %v1404, %v1385
  %v1408 = vmul.f32 %v1405, %v1388
  %v1409 = vmul.f32 %v1406, %v1393
  %v1410 = vadd.f32 %v1385, %v1407
  %v1411 = vadd.f32 %v1388, %v1408
  %v1412 = vadd.f32 %v1393, %v1409
  %v1413 = vmul.f32 %v1410, 0.7978846
  %v1414 = vmul.f32 %v1411, 0.7978846
  %v1415 = vmul.f32 %v1412, 0.7978846
  %v1416 = vtanh.pop %v1413
  %v1417 = vtanh.pop %v1414
  %v1418 = vtanh.pop %v1415
  %v1419 = vadd.f32 %v1416, 1.0
  %v1420 = vadd.f32 %v1417, 1.0
  %v1421 = vadd.f32 %v1418, 1.0
  %v1422 = vmul.f32 %v1398, %v1419
  %v1423 = vmul.f32 %v1399, %v1420
  %v1424 = vmul.f32 %v1400, %v1421
  %v1425 = vld [vmem:[%s37] sm:$0xf]
  %v1426 = vld [vmem:[%s37 + $0x4] sm:$0xf]
  %v1427 = vld [vmem:[%s37 + $0x8] sm:$0xf]
  %v1428 = vld [vmem:[%s37 + $0xc] sm:$0xf]
  %v1429 = vld [vmem:[%s37 + $0x10] sm:$0xf]
  %v1430 = vld [vmem:[%s37 + $0x14] sm:$0xf]
  %v1431 = vld [vmem:[%s37 + $0x18] sm:$0xf]
  %v1432 = vld [vmem:[%s37 + $0x1c] sm:$0xf]
  %v1433 = vld [vmem:[%s37 + $0x20] sm:$0xf]
  %v1434 = vld [vmem:[%s37 + $0x24] sm:$0xf]
  %v1435 = vld [vmem:[%s37 + $0x28] sm:$0xf]
  %v1436 = vld [vmem:[%s37 + $0x2c] sm:$0xf]
  %v1437 = vld [vmem:[%s37 + $0x30] sm:$0xf]
  %v1438 = vld [vmem:[%s37 + $0x34] sm:$0xf]
  %v1439 = vld [vmem:[%s37 + $0x38] sm:$0xf]
  %v1440 = vld [vmem:[%s37 + $0x3c] sm:$0xf]
  %v1441 = vpack.c.bf16 %v1423, %v1422
  %v1442 = vpack.c.bf16 %v1424, %v1424
  %v1459 = vunpack.c.l.b16 %v1425
  %v1460 = vunpack.c.l.b16 %v1426
  %v1461 = vunpack.c.l.b16 %v1427
  %v1462 = vunpack.c.l.b16 %v1428
  %v1463 = vunpack.c.l.b16 %v1429
  %v1464 = vunpack.c.l.b16 %v1430
  %v1465 = vunpack.c.l.b16 %v1431
  %v1466 = vunpack.c.l.b16 %v1432
  %v1467 = vunpack.c.l.b16 %v1433
  %v1468 = vunpack.c.l.b16 %v1434
  %v1469 = vunpack.c.l.b16 %v1435
  %v1470 = vunpack.c.l.b16 %v1436
  %v1471 = vunpack.c.l.b16 %v1437
  %v1472 = vunpack.c.l.b16 %v1438
  %v1473 = vunpack.c.l.b16 %v1439
  %v1474 = vunpack.c.l.b16 %v1440
  %v1475 = vpack.c.b16 %v1460, %v1459
  %v1476 = vpack.c.b16 %v1462, %v1461
  %v1477 = vpack.c.b16 %v1464, %v1463
  %v1478 = vpack.c.b16 %v1466, %v1465
  %v1479 = vpack.c.b16 %v1468, %v1467
  %v1480 = vpack.c.b16 %v1470, %v1469
  %v1481 = vpack.c.b16 %v1472, %v1471
  %v1482 = vpack.c.b16 %v1474, %v1473
  %1491 = vmatprep.subr.bf16.mxu0 0
  %1492 = vmatpush1.bf16.msra.mxu0 %v1482
  %1493 = vmatprep.subr.bf16.mxu0 0
  %1494 = vmatpush1.bf16.msra.mxu0 %v1481
  %1495 = vmatprep.subr.bf16.mxu0 0
  %1496 = vmatpush1.bf16.msra.mxu0 %v1480
  %1497 = vmatprep.subr.bf16.mxu0 0
  %1498 = vmatpush1.bf16.msra.mxu0 %v1479
  %1499 = vmatprep.subr.bf16.mxu0 0
  %1500 = vmatpush1.bf16.msra.mxu0 %v1478
  %1501 = vmatprep.subr.bf16.mxu0 0
  %1502 = vmatpush1.bf16.msra.mxu0 %v1477
  %1503 = vmatprep.subr.bf16.mxu0 0
  %1504 = vmatpush1.bf16.msra.mxu0 %v1476
  %1505 = vmatprep.subr.bf16.mxu0 0
  %1506 = vmatpush1.bf16.msra.mxu0 %v1475
  %1507 = vmatprep.subr.bf16.mxu0 0
  %1508 = vmatpush2.bf16.msra.mxu0 0
  %1509 = vmatprep.subr.bf16.mxu0 0
  %1510 = vmatpush2.bf16.msra.mxu0 0
  %1511 = vmatprep.subr.bf16.mxu0 0
  %1512 = vmatpush2.bf16.msra.mxu0 0
  %1513 = vmatprep.subr.bf16.mxu0 0
  %1514 = vmatpush2.bf16.msra.mxu0 0
  %1515 = vmatprep.subr.bf16.mxu0 0
  %1516 = vmatpush2.bf16.msra.mxu0 0
  %1517 = vmatprep.subr.bf16.mxu0 0
  %1518 = vmatpush2.bf16.msra.mxu0 0
  %1519 = vmatprep.subr.bf16.mxu0 0
  %1520 = vmatpush2.bf16.msra.mxu0 0
  %1521 = vmatprep.subr.bf16.mxu0 0
  %1522 = vmatpush2.bf16.msra.mxu0 0
  %1523 = vmatprep.mubr.bf16.mxu0 0
  %1524 = vmatmul.mubr.bf16.gmra.mxu0 %v1441
  %v1525 = vpop.f32.mrf.mxu0
  %v1526 = vadd.f32 0.0, %v1525
  %v1527 = vpop.f32.mrf.mxu0
  %v1528 = vpop.f32.mrf.mxu0
  %v1529 = vadd.f32 0.0, %v1528
  %v1530 = vpop.f32.mrf.mxu0
  %1531 = vmatprep.mubr.bf16.mxu0 0
  %1532 = vmatmul.mubr.bf16.gmra.mxu0 %v1442
  %v1533 = vpop.f32.mrf.mxu0
  %v1534 = vadd.f32 0.0, %v1533
  %v1535 = vpop.f32.mrf.mxu0
  %v1536 = vpop.f32.mrf.mxu0
  %v1537 = vpop.f32.mrf.mxu0
  %1538 = vdwg.mxu0
  %v1539 = vadd.f32 %v1257, %v1526
  %v1540 = vadd.f32 %v1258, %v1529
  %v1541 = vadd.f32 %v1259, %v1534
  %v1542 = vld [vmem:[%s39] sm:$0x1]
  %v1544 = vlaneseq
  %v1545 = vshrl.u32 %v1544, 7
  %v1546 = vsub.s32 0, %v1545
  %v1547 = vrot.slane %v1542, %v1546
  %v1549 = vadd.f32 %v1539, %v1547
  %v1550 = vadd.f32 %v1540, %v1547
  %v1551 = vadd.f32 %v1541, %v1547
  %s1552 = scalar_lea.vmem %s9, 1
  %v1553 = vld [vmem:[%s1552] sm:$0x1]
  %s1554 = scalar_lea.vmem %s11, 1
  %v1555 = vld [vmem:[%s1554] sm:$0x1]
  %v1556 = vsel %vm294, %v1549, 0.0
  %1557 = vadd.xlane.f32.xlu0 %v1556
  %v1558 = vpop.xlane.xlu0 %1557
  %v1559 = vsel %vm294, %v1550, 0.0
  %1560 = vadd.xlane.f32.xlu0 %v1559
  %v1561 = vpop.xlane.xlu0 %1560
  %v1562 = vsel %vm301, %v1551, 0.0
  %1563 = vadd.xlane.f32.xlu0 %v1562
  %v1564 = vpop.xlane.xlu0 %1563
  %v1565 = vmul.f32 %v1558, %v305
  %v1566 = vmul.f32 %v1561, %v305
  %v1567 = vmul.f32 %v1564, %v305
  %v1568 = vsub.f32 %v1549, %v1565
  %v1569 = vsub.f32 %v1550, %v1566
  %v1570 = vsub.f32 %v1551, %v1567
  %v1571 = vmul.f32 %v1568, %v1568
  %v1572 = vmul.f32 %v1569, %v1569
  %v1573 = vmul.f32 %v1570, %v1570
  %v1574 = vsel %vm294, %v1571, 0.0
  %1575 = vadd.xlane.f32.xlu0 %v1574
  %v1576 = vpop.xlane.xlu0 %1575
  %v1577 = vsel %vm294, %v1572, 0.0
  %1578 = vadd.xlane.f32.xlu0 %v1577
  %v1579 = vpop.xlane.xlu0 %1578
  %v1580 = vsel %vm301, %v1573, 0.0
  %1581 = vadd.xlane.f32.xlu0 %v1580
  %v1582 = vpop.xlane.xlu0 %1581
  %v1583 = vmul.f32 %v1576, %v305
  %v1584 = vmul.f32 %v1579, %v305
  %v1585 = vmul.f32 %v1582, %v305
  %v1586 = vadd.f32 %v1583, 1e-12
  %v1587 = vadd.f32 %v1584, 1e-12
  %v1588 = vadd.f32 %v1585, 1e-12
  %v1589 = vrsqrt.pop %v1586
  %v1590 = vrsqrt.pop %v1587
  %v1591 = vrsqrt.pop %v1588
  %v1592 = vmul.f32 %v1568, %v1589
  %v1593 = vmul.f32 %v1569, %v1590
  %v1594 = vmul.f32 %v1570, %v1591
  %v1596 = vlaneseq
  %v1597 = vshrl.u32 %v1596, 7
  %v1598 = vsub.s32 0, %v1597
  %v1599 = vrot.slane %v1553, %v1598
  %v1601 = vmul.f32 %v1592, %v1599
  %v1602 = vmul.f32 %v1593, %v1599
  %v1603 = vmul.f32 %v1594, %v1599
  %v1605 = vlaneseq
  %v1606 = vshrl.u32 %v1605, 7
  %v1607 = vsub.s32 0, %v1606
  %v1608 = vrot.slane %v1555, %v1607
  %v1610 = vadd.f32 %v1601, %v1608
  %v1611 = vadd.f32 %v1602, %v1608
  %v1612 = vadd.f32 %v1603, %v1608
  %1613 = vxpose.xlu0.b32.start [1/16] %v1610, 128
  %1614 = vxpose.xlu0.b32.cont [2/16] %v1611, 128
  %1615 = vxpose.xlu0.b32.cont [3/16] %v1612, 128
  %1616 = vxpose.xlu0.b32.cont [4/16] 0.0, 128
  %1617 = vxpose.xlu0.b32.cont [5/16] 0.0, 128
  %1618 = vxpose.xlu0.b32.cont [6/16] 0.0, 128
  %1619 = vxpose.xlu0.b32.cont [7/16] 0.0, 128
  %1620 = vxpose.xlu0.b32.cont [8/16] 0.0, 128
  %1621 = vxpose.xlu0.b32.cont [9/16] 0.0, 128
  %1622 = vxpose.xlu0.b32.cont [10/16] 0.0, 128
  %1623 = vxpose.xlu0.b32.cont [11/16] 0.0, 128
  %1624 = vxpose.xlu0.b32.cont [12/16] 0.0, 128
  %1625 = vxpose.xlu0.b32.cont [13/16] 0.0, 128
  %1626 = vxpose.xlu0.b32.cont [14/16] 0.0, 128
  %1627 = vxpose.xlu0.b32.cont [15/16] 0.0, 128
  %1628 = vxpose.xlu0.b32.end [16/16] 0.0, 128
  %v1629 = vpop.trf.xlu0
  %v1630 = vpop.trf.xlu0
  %v1631 = vpop.trf.xlu0
  %v1632 = vpop.trf.xlu0
  %v1633 = vpop.trf.xlu0
  %v1634 = vpop.trf.xlu0
  %v1635 = vpop.trf.xlu0
  %v1636 = vpop.trf.xlu0
  %v1637 = vpop.trf.xlu0
  %v1638 = vpop.trf.xlu0
  %v1639 = vpop.trf.xlu0
  %v1640 = vpop.trf.xlu0
  %v1641 = vpop.trf.xlu0
  %v1642 = vpop.trf.xlu0
  %v1643 = vpop.trf.xlu0
  %v1644 = vpop.trf.xlu0
  %s1645 = scalar_lea.vmem %s13, 32
  %v1646 = vld [vmem:[%s1645] sm:$0xf]
  %v1647 = vld [vmem:[%s1645 + $0x4] sm:$0xf]
  %v1648 = vld [vmem:[%s1645 + $0x8] sm:$0xf]
  %v1649 = vld [vmem:[%s1645 + $0xc] sm:$0xf]
  %v1650 = vpack.c.bf16 %v1611, %v1610
  %v1651 = vpack.c.bf16 %v1612, %v1612
  %s1652 = scalar_lea.vmem %s15, 2
  %v1653 = vld [vmem:[%s1652] sm:$0x1]
  %v1655 = vlaneseq
  %v1656 = vshrl.u32 %v1655, 7
  %v1657 = vsub.s32 0, %v1656
  %v1658 = vrot.slane %v1653, %v1657
  %v1664 = vunpack.c.l.b16 %v1646
  %v1665 = vunpack.c.l.b16 %v1647
  %v1666 = vunpack.c.l.b16 %v1648
  %v1667 = vunpack.c.l.b16 %v1649
  %v1668 = vpack.c.b16 %v1665, %v1664
  %v1669 = vpack.c.b16 %v1667, %v1666
  %v1673 = vsel %vm294, %v1650, 0
  %v1676 = vsel %vm294, %v1651, 0
  %1678 = vmatprep.subr.bf16.mxu0 0
  %1679 = vmatpush1.bf16.msra.mxu0 0
  %1680 = vmatprep.subr.bf16.mxu0 0
  %1681 = vmatpush1.bf16.msra.mxu0 0
  %1682 = vmatprep.subr.bf16.mxu0 0
  %1683 = vmatpush1.bf16.msra.mxu0 0
  %1684 = vmatprep.subr.bf16.mxu0 0
  %1685 = vmatpush1.bf16.msra.mxu0 0
  %1686 = vmatprep.subr.bf16.mxu0 0
  %1687 = vmatpush1.bf16.msra.mxu0 0
  %1688 = vmatprep.subr.bf16.mxu0 0
  %1689 = vmatpush1.bf16.msra.mxu0 0
  %1690 = vmatprep.subr.bf16.mxu0 0
  %1691 = vmatpush1.bf16.msra.mxu0 %v1669
  %1692 = vmatprep.subr.bf16.mxu0 0
  %1693 = vmatpush1.bf16.msra.mxu0 %v1668
  %1694 = vmatprep.subr.bf16.mxu0 0
  %1695 = vmatpush2.bf16.msra.mxu0 0
  %1696 = vmatprep.subr.bf16.mxu0 0
  %1697 = vmatpush2.bf16.msra.mxu0 0
  %1698 = vmatprep.subr.bf16.mxu0 0
  %1699 = vmatpush2.bf16.msra.mxu0 0
  %1700 = vmatprep.subr.bf16.mxu0 0
  %1701 = vmatpush2.bf16.msra.mxu0 0
  %1702 = vmatprep.subr.bf16.mxu0 0
  %1703 = vmatpush2.bf16.msra.mxu0 0
  %1704 = vmatprep.subr.bf16.mxu0 0
  %1705 = vmatpush2.bf16.msra.mxu0 0
  %1706 = vmatprep.subr.bf16.mxu0 0
  %1707 = vmatpush2.bf16.msra.mxu0 0
  %1708 = vmatprep.subr.bf16.mxu0 0
  %1709 = vmatpush2.bf16.msra.mxu0 0
  %1710 = vmatprep.mubr.bf16.mxu0 0
  %1711 = vmatmul.mubr.bf16.gmra.mxu0 %v1673
  %v1712 = vpop.f32.mrf.mxu0
  %v1713 = vadd.f32 %v1658, %v1712
  %v1714 = vpop.f32.mrf.mxu0
  %v1715 = vpop.f32.mrf.mxu0
  %v1716 = vadd.f32 %v1658, %v1715
  %v1717 = vpop.f32.mrf.mxu0
  %1718 = vmatprep.mubr.bf16.mxu0 0
  %1719 = vmatmul.mubr.bf16.gmra.mxu0 %v1676
  %v1720 = vpop.f32.mrf.mxu0
  %v1721 = vadd.f32 %v1658, %v1720
  %v1722 = vpop.f32.mrf.mxu0
  %v1723 = vpop.f32.mrf.mxu0
  %v1724 = vpop.f32.mrf.mxu0
  %1725 = vdwg.mxu0
  %s1726 = scalar_lea.vmem %s17, 16
  %v1727 = vld [vmem:[%s1726] sm:$0xf]
  %v1728 = vld [vmem:[%s1726 + $0x4] sm:$0xf]
  %v1729 = vpack.c.bf16 %v1630, %v1629
  %v1730 = vpack.c.bf16 %v1632, %v1631
  %s1731 = scalar_lea.vmem %s19, 32
  %v1732 = vld [vmem:[%s1731] sm:$0xff]
  %v1733 = vld [vmem:[%s1731 + $0x8] sm:$0xff]
  %1735 = vset.pattern.permute.xlu0 0
  %1736 = vperm.xlu0 %1735, %v1732
  %v1737 = vpop.permute.xlu0 %1736
  %1740 = vset.pattern.permute.xlu0 0
  %1741 = vperm.xlu0 %1740, %v1733
  %v1742 = vpop.permute.xlu0 %1741
  %v1746 = vunpack.c.l.b16 %v1727
  %v1747 = vunpack.c.l.b16 %v1728
  %v1748 = vpack.c.b16 %v1747, %v1746
  %v1750 = vsel %vm294, %v1748, 0
  %1752 = vmatprep.subr.bf16.mxu0 0
  %1753 = vmatpush1.bf16.msra.mxu0 0
  %1754 = vmatprep.subr.bf16.mxu0 0
  %1755 = vmatpush1.bf16.msra.mxu0 0
  %1756 = vmatprep.subr.bf16.mxu0 0
  %1757 = vmatpush1.bf16.msra.mxu0 0
  %1758 = vmatprep.subr.bf16.mxu0 0
  %1759 = vmatpush1.bf16.msra.mxu0 0
  %1760 = vmatprep.subr.bf16.mxu0 0
  %1761 = vmatpush1.bf16.msra.mxu0 0
  %1762 = vmatprep.subr.bf16.mxu0 0
  %1763 = vmatpush1.bf16.msra.mxu0 0
  %1764 = vmatprep.subr.bf16.mxu0 0
  %1765 = vmatpush1.bf16.msra.mxu0 %v1730
  %1766 = vmatprep.subr.bf16.mxu0 0
  %1767 = vmatpush1.bf16.msra.mxu0 %v1729
  %1768 = vmatprep.subr.bf16.mxu0 0
  %1769 = vmatpush2.bf16.msra.mxu0 0
  %1770 = vmatprep.subr.bf16.mxu0 0
  %1771 = vmatpush2.bf16.msra.mxu0 0
  %1772 = vmatprep.subr.bf16.mxu0 0
  %1773 = vmatpush2.bf16.msra.mxu0 0
  %1774 = vmatprep.subr.bf16.mxu0 0
  %1775 = vmatpush2.bf16.msra.mxu0 0
  %1776 = vmatprep.subr.bf16.mxu0 0
  %1777 = vmatpush2.bf16.msra.mxu0 0
  %1778 = vmatprep.subr.bf16.mxu0 0
  %1779 = vmatpush2.bf16.msra.mxu0 0
  %1780 = vmatprep.subr.bf16.mxu0 0
  %1781 = vmatpush2.bf16.msra.mxu0 0
  %1782 = vmatprep.subr.bf16.mxu0 0
  %1783 = vmatpush2.bf16.msra.mxu0 0
  %1784 = vmatprep.mubr.bf16.mxu0 0
  %1785 = vmatmul.mubr.bf16.gmra.mxu0 %v1750
  %v1786 = vpop.f32.mrf.mxu0
  %v1787 = vadd.f32 %v1737, %v1786
  %v1788 = vpop.f32.mrf.mxu0
  %v1789 = vpop.f32.mrf.mxu0
  %v1790 = vadd.f32 %v1742, %v1789
  %v1791 = vpop.f32.mrf.mxu0
  %1792 = vdwg.mxu0
  %s1793 = scalar_lea.vmem %s21, 32
  %v1794 = vld [vmem:[%s1793] sm:$0xf]
  %v1795 = vld [vmem:[%s1793 + $0x4] sm:$0xf]
  %v1796 = vld [vmem:[%s1793 + $0x8] sm:$0xf]
  %v1797 = vld [vmem:[%s1793 + $0xc] sm:$0xf]
  %s1798 = scalar_lea.vmem %s23, 2
  %v1799 = vld [vmem:[%s1798] sm:$0x1]
  %v1801 = vlaneseq
  %v1802 = vshrl.u32 %v1801, 7
  %v1803 = vsub.s32 0, %v1802
  %v1804 = vrot.slane %v1799, %v1803
  %v1810 = vunpack.c.l.b16 %v1794
  %v1811 = vunpack.c.l.b16 %v1795
  %v1812 = vunpack.c.l.b16 %v1796
  %v1813 = vunpack.c.l.b16 %v1797
  %v1814 = vpack.c.b16 %v1811, %v1810
  %v1815 = vpack.c.b16 %v1813, %v1812
  %1818 = vmatprep.subr.bf16.mxu0 0
  %1819 = vmatpush1.bf16.msra.mxu0 0
  %1820 = vmatprep.subr.bf16.mxu0 0
  %1821 = vmatpush1.bf16.msra.mxu0 0
  %1822 = vmatprep.subr.bf16.mxu0 0
  %1823 = vmatpush1.bf16.msra.mxu0 0
  %1824 = vmatprep.subr.bf16.mxu0 0
  %1825 = vmatpush1.bf16.msra.mxu0 0
  %1826 = vmatprep.subr.bf16.mxu0 0
  %1827 = vmatpush1.bf16.msra.mxu0 0
  %1828 = vmatprep.subr.bf16.mxu0 0
  %1829 = vmatpush1.bf16.msra.mxu0 0
  %1830 = vmatprep.subr.bf16.mxu0 0
  %1831 = vmatpush1.bf16.msra.mxu0 %v1815
  %1832 = vmatprep.subr.bf16.mxu0 0
  %1833 = vmatpush1.bf16.msra.mxu0 %v1814
  %1834 = vmatprep.subr.bf16.mxu0 0
  %1835 = vmatpush2.bf16.msra.mxu0 0
  %1836 = vmatprep.subr.bf16.mxu0 0
  %1837 = vmatpush2.bf16.msra.mxu0 0
  %1838 = vmatprep.subr.bf16.mxu0 0
  %1839 = vmatpush2.bf16.msra.mxu0 0
  %1840 = vmatprep.subr.bf16.mxu0 0
  %1841 = vmatpush2.bf16.msra.mxu0 0
  %1842 = vmatprep.subr.bf16.mxu0 0
  %1843 = vmatpush2.bf16.msra.mxu0 0
  %1844 = vmatprep.subr.bf16.mxu0 0
  %1845 = vmatpush2.bf16.msra.mxu0 0
  %1846 = vmatprep.subr.bf16.mxu0 0
  %1847 = vmatpush2.bf16.msra.mxu0 0
  %1848 = vmatprep.subr.bf16.mxu0 0
  %1849 = vmatpush2.bf16.msra.mxu0 0
  %1850 = vmatprep.mubr.bf16.mxu0 0
  %1851 = vmatmul.mubr.bf16.gmra.mxu0 %v1673
  %v1852 = vpop.f32.mrf.mxu0
  %v1853 = vadd.f32 %v1804, %v1852
  %v1854 = vpop.f32.mrf.mxu0
  %v1855 = vpop.f32.mrf.mxu0
  %v1856 = vadd.f32 %v1804, %v1855
  %v1857 = vpop.f32.mrf.mxu0
  %1858 = vmatprep.mubr.bf16.mxu0 0
  %1859 = vmatmul.mubr.bf16.gmra.mxu0 %v1676
  %v1860 = vpop.f32.mrf.mxu0
  %v1861 = vadd.f32 %v1804, %v1860
  %v1862 = vpop.f32.mrf.mxu0
  %v1863 = vpop.f32.mrf.mxu0
  %v1864 = vpop.f32.mrf.mxu0
  %1865 = vdwg.mxu0
  %v1866 = vpack.c.bf16 %v1716, %v1713
  %v1867 = vpack.c.bf16 %v1721, %v1721
  %v1868 = vpack.c.bf16 %v1790, %v1787
  %v1870 = vsel %vm604, %v1866, 0
  %v1873 = vsel %vm604, %v1867, 0
  %1875 = vmatprep.subr.bf16.mxu0 0
  %1876 = vmatpush1.bf16.msra.mxu0 0
  %1877 = vmatprep.subr.bf16.mxu0 0
  %1878 = vmatpush1.bf16.msra.mxu0 0
  %1879 = vmatprep.subr.bf16.mxu0 0
  %1880 = vmatpush1.bf16.msra.mxu0 0
  %1881 = vmatprep.subr.bf16.mxu0 0
  %1882 = vmatpush1.bf16.msra.mxu0 0
  %1883 = vmatprep.subr.bf16.mxu0 0
  %1884 = vmatpush1.bf16.msra.mxu0 0
  %1885 = vmatprep.subr.bf16.mxu0 0
  %1886 = vmatpush1.bf16.msra.mxu0 0
  %1887 = vmatprep.subr.bf16.mxu0 0
  %1888 = vmatpush1.bf16.msra.mxu0 0
  %1889 = vmatprep.subr.bf16.mxu0 0
  %1890 = vmatpush1.bf16.msra.mxu0 %v1868
  %1891 = vmatprep.subr.bf16.mxu0 0
  %1892 = vmatpush2.bf16.msra.mxu0 0
  %1893 = vmatprep.subr.bf16.mxu0 0
  %1894 = vmatpush2.bf16.msra.mxu0 0
  %1895 = vmatprep.subr.bf16.mxu0 0
  %1896 = vmatpush2.bf16.msra.mxu0 0
  %1897 = vmatprep.subr.bf16.mxu0 0
  %1898 = vmatpush2.bf16.msra.mxu0 0
  %1899 = vmatprep.subr.bf16.mxu0 0
  %1900 = vmatpush2.bf16.msra.mxu0 0
  %1901 = vmatprep.subr.bf16.mxu0 0
  %1902 = vmatpush2.bf16.msra.mxu0 0
  %1903 = vmatprep.subr.bf16.mxu0 0
  %1904 = vmatpush2.bf16.msra.mxu0 0
  %1905 = vmatprep.subr.bf16.mxu0 0
  %1906 = vmatpush2.bf16.msra.mxu0 0
  %1907 = vmatprep.mubr.bf16.mxu0 0
  %1908 = vmatmul.mubr.bf16.gmra.mxu0 %v1870
  %v1909 = vpop.f32.mrf.mxu0
  %v1910 = vadd.f32 %v125, %v1909
  %v1911 = vpop.f32.mrf.mxu0
  %v1912 = vpop.f32.mrf.mxu0
  %v1913 = vadd.f32 %v126, %v1912
  %v1914 = vpop.f32.mrf.mxu0
  %1915 = vmatprep.mubr.bf16.mxu0 0
  %1916 = vmatmul.mubr.bf16.gmra.mxu0 %v1873
  %v1917 = vpop.f32.mrf.mxu0
  %v1918 = vadd.f32 %v127, %v1917
  %v1919 = vpop.f32.mrf.mxu0
  %v1920 = vpop.f32.mrf.mxu0
  %v1921 = vpop.f32.mrf.mxu0
  %1922 = vdwg.mxu0
  %v1923 = vsel %vm659, %v1910, -inf
  %1924 = vmax.xlane.f32.xlu0 %v1923
  %v1925 = vpop.xlane.xlu0 %1924
  %v1926 = vsel %vm659, %v1913, -inf
  %1927 = vmax.xlane.f32.xlu0 %v1926
  %v1928 = vpop.xlane.xlu0 %1927
  %v1929 = vsel %vm666, %v1918, -inf
  %1930 = vmax.xlane.f32.xlu0 %v1929
  %v1931 = vpop.xlane.xlu0 %1930
  %v1932 = vsub.f32 %v1910, %v1925
  %v1933 = vsub.f32 %v1913, %v1928
  %v1934 = vsub.f32 %v1918, %v1931
  %v1935 = vmul.f32 %v1932, 1.442695
  %v1936 = vpow.pop %v1935
  %v1937 = vmul.f32 %v1933, 1.442695
  %v1938 = vpow.pop %v1937
  %v1939 = vmul.f32 %v1934, 1.442695
  %v1940 = vpow.pop %v1939
  %v1941 = vsel %vm659, %v1936, 0.0
  %1942 = vadd.xlane.f32.xlu0 %v1941
  %v1943 = vpop.xlane.xlu0 %1942
  %v1944 = vsel %vm659, %v1938, 0.0
  %1945 = vadd.xlane.f32.xlu0 %v1944
  %v1946 = vpop.xlane.xlu0 %1945
  %v1947 = vsel %vm666, %v1940, 0.0
  %1948 = vadd.xlane.f32.xlu0 %v1947
  %v1949 = vpop.xlane.xlu0 %1948
  %v1950 = vrcp.pop %v1943
  %v1951 = vrcp.pop %v1946
  %v1952 = vrcp.pop %v1949
  %v1953 = vmul.f32 %v1936, %v1950
  %v1954 = vmul.f32 %v1938, %v1951
  %v1955 = vmul.f32 %v1940, %v1952
  %v1956 = vpack.c.bf16 %v1954, %v1953
  %v1957 = vpack.c.bf16 %v1955, %v1955
  %v1958 = vpack.c.bf16 %v1856, %v1853
  %v1959 = vpack.c.bf16 %v1861, %v1861
  %v1961 = vsel %vm659, %v1956, 0
  %v1964 = vsel %vm659, %v1957, 0
  %v1967 = vsel %vm704, %v1959, 0
  %1969 = vmatprep.subr.bf16.mxu0 0
  %1970 = vmatpush1.bf16.msra.mxu0 0
  %1971 = vmatprep.subr.bf16.mxu0 0
  %1972 = vmatpush1.bf16.msra.mxu0 0
  %1973 = vmatprep.subr.bf16.mxu0 0
  %1974 = vmatpush1.bf16.msra.mxu0 0
  %1975 = vmatprep.subr.bf16.mxu0 0
  %1976 = vmatpush1.bf16.msra.mxu0 0
  %1977 = vmatprep.subr.bf16.mxu0 0
  %1978 = vmatpush1.bf16.msra.mxu0 0
  %1979 = vmatprep.subr.bf16.mxu0 0
  %1980 = vmatpush1.bf16.msra.mxu0 0
  %1981 = vmatprep.subr.bf16.mxu0 0
  %1982 = vmatpush1.bf16.msra.mxu0 %v1967
  %1983 = vmatprep.subr.bf16.mxu0 0
  %1984 = vmatpush1.bf16.msra.mxu0 %v1958
  %1985 = vmatprep.subr.bf16.mxu0 0
  %1986 = vmatpush2.bf16.msra.mxu0 0
  %1987 = vmatprep.subr.bf16.mxu0 0
  %1988 = vmatpush2.bf16.msra.mxu0 0
  %1989 = vmatprep.subr.bf16.mxu0 0
  %1990 = vmatpush2.bf16.msra.mxu0 0
  %1991 = vmatprep.subr.bf16.mxu0 0
  %1992 = vmatpush2.bf16.msra.mxu0 0
  %1993 = vmatprep.subr.bf16.mxu0 0
  %1994 = vmatpush2.bf16.msra.mxu0 0
  %1995 = vmatprep.subr.bf16.mxu0 0
  %1996 = vmatpush2.bf16.msra.mxu0 0
  %1997 = vmatprep.subr.bf16.mxu0 0
  %1998 = vmatpush2.bf16.msra.mxu0 0
  %1999 = vmatprep.subr.bf16.mxu0 0
  %2000 = vmatpush2.bf16.msra.mxu0 0
  %2001 = vmatprep.mubr.bf16.mxu0 0
  %2002 = vmatmul.mubr.bf16.gmra.mxu0 %v1961
  %v2003 = vpop.f32.mrf.mxu0
  %v2004 = vadd.f32 0.0, %v2003
  %v2005 = vpop.f32.mrf.mxu0
  %v2006 = vpop.f32.mrf.mxu0
  %v2007 = vadd.f32 0.0, %v2006
  %v2008 = vpop.f32.mrf.mxu0
  %2009 = vmatprep.mubr.bf16.mxu0 0
  %2010 = vmatmul.mubr.bf16.gmra.mxu0 %v1964
  %v2011 = vpop.f32.mrf.mxu0
  %v2012 = vadd.f32 0.0, %v2011
  %v2013 = vpop.f32.mrf.mxu0
  %v2014 = vpop.f32.mrf.mxu0
  %v2015 = vpop.f32.mrf.mxu0
  %2016 = vdwg.mxu0
  %s2017 = scalar_lea.vmem %s25, 16
  %v2018 = vld [vmem:[%s2017] sm:$0xf]
  %v2019 = vld [vmem:[%s2017 + $0x4] sm:$0xf]
  %v2020 = vpack.c.bf16 %v2007, %v2004
  %v2021 = vpack.c.bf16 %v2012, %v2012
  %s2022 = scalar_lea.vmem %s13, 48
  %v2023 = vld [vmem:[%s2022] sm:$0xf]
  %v2024 = vld [vmem:[%s2022 + $0x4] sm:$0xf]
  %v2025 = vld [vmem:[%s2022 + $0x8] sm:$0xf]
  %v2026 = vld [vmem:[%s2022 + $0xc] sm:$0xf]
  %s2027 = scalar_lea.vmem %s15, 3
  %v2028 = vld [vmem:[%s2027] sm:$0x1]
  %v2030 = vlaneseq
  %v2031 = vshrl.u32 %v2030, 7
  %v2032 = vsub.s32 0, %v2031
  %v2033 = vrot.slane %v2028, %v2032
  %v2039 = vunpack.c.l.b16 %v2023
  %v2040 = vunpack.c.l.b16 %v2024
  %v2041 = vunpack.c.l.b16 %v2025
  %v2042 = vunpack.c.l.b16 %v2026
  %v2043 = vpack.c.b16 %v2040, %v2039
  %v2044 = vpack.c.b16 %v2042, %v2041
  %2047 = vmatprep.subr.bf16.mxu0 0
  %2048 = vmatpush1.bf16.msra.mxu0 0
  %2049 = vmatprep.subr.bf16.mxu0 0
  %2050 = vmatpush1.bf16.msra.mxu0 0
  %2051 = vmatprep.subr.bf16.mxu0 0
  %2052 = vmatpush1.bf16.msra.mxu0 0
  %2053 = vmatprep.subr.bf16.mxu0 0
  %2054 = vmatpush1.bf16.msra.mxu0 0
  %2055 = vmatprep.subr.bf16.mxu0 0
  %2056 = vmatpush1.bf16.msra.mxu0 0
  %2057 = vmatprep.subr.bf16.mxu0 0
  %2058 = vmatpush1.bf16.msra.mxu0 0
  %2059 = vmatprep.subr.bf16.mxu0 0
  %2060 = vmatpush1.bf16.msra.mxu0 %v2044
  %2061 = vmatprep.subr.bf16.mxu0 0
  %2062 = vmatpush1.bf16.msra.mxu0 %v2043
  %2063 = vmatprep.subr.bf16.mxu0 0
  %2064 = vmatpush2.bf16.msra.mxu0 0
  %2065 = vmatprep.subr.bf16.mxu0 0
  %2066 = vmatpush2.bf16.msra.mxu0 0
  %2067 = vmatprep.subr.bf16.mxu0 0
  %2068 = vmatpush2.bf16.msra.mxu0 0
  %2069 = vmatprep.subr.bf16.mxu0 0
  %2070 = vmatpush2.bf16.msra.mxu0 0
  %2071 = vmatprep.subr.bf16.mxu0 0
  %2072 = vmatpush2.bf16.msra.mxu0 0
  %2073 = vmatprep.subr.bf16.mxu0 0
  %2074 = vmatpush2.bf16.msra.mxu0 0
  %2075 = vmatprep.subr.bf16.mxu0 0
  %2076 = vmatpush2.bf16.msra.mxu0 0
  %2077 = vmatprep.subr.bf16.mxu0 0
  %2078 = vmatpush2.bf16.msra.mxu0 0
  %2079 = vmatprep.mubr.bf16.mxu0 0
  %2080 = vmatmul.mubr.bf16.gmra.mxu0 %v1673
  %v2081 = vpop.f32.mrf.mxu0
  %v2082 = vadd.f32 %v2033, %v2081
  %v2083 = vpop.f32.mrf.mxu0
  %v2084 = vpop.f32.mrf.mxu0
  %v2085 = vadd.f32 %v2033, %v2084
  %v2086 = vpop.f32.mrf.mxu0
  %2087 = vmatprep.mubr.bf16.mxu0 0
  %2088 = vmatmul.mubr.bf16.gmra.mxu0 %v1676
  %v2089 = vpop.f32.mrf.mxu0
  %v2090 = vadd.f32 %v2033, %v2089
  %v2091 = vpop.f32.mrf.mxu0
  %v2092 = vpop.f32.mrf.mxu0
  %v2093 = vpop.f32.mrf.mxu0
  %2094 = vdwg.mxu0
  %s2095 = scalar_lea.vmem %s17, 24
  %v2096 = vld [vmem:[%s2095] sm:$0xf]
  %v2097 = vld [vmem:[%s2095 + $0x4] sm:$0xf]
  %s2098 = scalar_lea.vmem %s19, 48
  %v2099 = vld [vmem:[%s2098] sm:$0xff]
  %v2100 = vld [vmem:[%s2098 + $0x8] sm:$0xff]
  %2102 = vset.pattern.permute.xlu0 0
  %2103 = vperm.xlu0 %2102, %v2099
  %v2104 = vpop.permute.xlu0 %2103
  %2107 = vset.pattern.permute.xlu0 0
  %2108 = vperm.xlu0 %2107, %v2100
  %v2109 = vpop.permute.xlu0 %2108
  %v2113 = vunpack.c.l.b16 %v2096
  %v2114 = vunpack.c.l.b16 %v2097
  %v2115 = vpack.c.b16 %v2114, %v2113
  %v2117 = vsel %vm294, %v2115, 0
  %2119 = vmatprep.subr.bf16.mxu0 0
  %2120 = vmatpush1.bf16.msra.mxu0 0
  %2121 = vmatprep.subr.bf16.mxu0 0
  %2122 = vmatpush1.bf16.msra.mxu0 0
  %2123 = vmatprep.subr.bf16.mxu0 0
  %2124 = vmatpush1.bf16.msra.mxu0 0
  %2125 = vmatprep.subr.bf16.mxu0 0
  %2126 = vmatpush1.bf16.msra.mxu0 0
  %2127 = vmatprep.subr.bf16.mxu0 0
  %2128 = vmatpush1.bf16.msra.mxu0 0
  %2129 = vmatprep.subr.bf16.mxu0 0
  %2130 = vmatpush1.bf16.msra.mxu0 0
  %2131 = vmatprep.subr.bf16.mxu0 0
  %2132 = vmatpush1.bf16.msra.mxu0 %v1730
  %2133 = vmatprep.subr.bf16.mxu0 0
  %2134 = vmatpush1.bf16.msra.mxu0 %v1729
  %2135 = vmatprep.subr.bf16.mxu0 0
  %2136 = vmatpush2.bf16.msra.mxu0 0
  %2137 = vmatprep.subr.bf16.mxu0 0
  %2138 = vmatpush2.bf16.msra.mxu0 0
  %2139 = vmatprep.subr.bf16.mxu0 0
  %2140 = vmatpush2.bf16.msra.mxu0 0
  %2141 = vmatprep.subr.bf16.mxu0 0
  %2142 = vmatpush2.bf16.msra.mxu0 0
  %2143 = vmatprep.subr.bf16.mxu0 0
  %2144 = vmatpush2.bf16.msra.mxu0 0
  %2145 = vmatprep.subr.bf16.mxu0 0
  %2146 = vmatpush2.bf16.msra.mxu0 0
  %2147 = vmatprep.subr.bf16.mxu0 0
  %2148 = vmatpush2.bf16.msra.mxu0 0
  %2149 = vmatprep.subr.bf16.mxu0 0
  %2150 = vmatpush2.bf16.msra.mxu0 0
  %2151 = vmatprep.mubr.bf16.mxu0 0
  %2152 = vmatmul.mubr.bf16.gmra.mxu0 %v2117
  %v2153 = vpop.f32.mrf.mxu0
  %v2154 = vadd.f32 %v2104, %v2153
  %v2155 = vpop.f32.mrf.mxu0
  %v2156 = vpop.f32.mrf.mxu0
  %v2157 = vadd.f32 %v2109, %v2156
  %v2158 = vpop.f32.mrf.mxu0
  %2159 = vdwg.mxu0
  %s2160 = scalar_lea.vmem %s21, 48
  %v2161 = vld [vmem:[%s2160] sm:$0xf]
  %v2162 = vld [vmem:[%s2160 + $0x4] sm:$0xf]
  %v2163 = vld [vmem:[%s2160 + $0x8] sm:$0xf]
  %v2164 = vld [vmem:[%s2160 + $0xc] sm:$0xf]
  %s2165 = scalar_lea.vmem %s23, 3
  %v2166 = vld [vmem:[%s2165] sm:$0x1]
  %v2168 = vlaneseq
  %v2169 = vshrl.u32 %v2168, 7
  %v2170 = vsub.s32 0, %v2169
  %v2171 = vrot.slane %v2166, %v2170
  %v2177 = vunpack.c.l.b16 %v2161
  %v2178 = vunpack.c.l.b16 %v2162
  %v2179 = vunpack.c.l.b16 %v2163
  %v2180 = vunpack.c.l.b16 %v2164
  %v2181 = vpack.c.b16 %v2178, %v2177
  %v2182 = vpack.c.b16 %v2180, %v2179
  %2185 = vmatprep.subr.bf16.mxu0 0
  %2186 = vmatpush1.bf16.msra.mxu0 0
  %2187 = vmatprep.subr.bf16.mxu0 0
  %2188 = vmatpush1.bf16.msra.mxu0 0
  %2189 = vmatprep.subr.bf16.mxu0 0
  %2190 = vmatpush1.bf16.msra.mxu0 0
  %2191 = vmatprep.subr.bf16.mxu0 0
  %2192 = vmatpush1.bf16.msra.mxu0 0
  %2193 = vmatprep.subr.bf16.mxu0 0
  %2194 = vmatpush1.bf16.msra.mxu0 0
  %2195 = vmatprep.subr.bf16.mxu0 0
  %2196 = vmatpush1.bf16.msra.mxu0 0
  %2197 = vmatprep.subr.bf16.mxu0 0
  %2198 = vmatpush1.bf16.msra.mxu0 %v2182
  %2199 = vmatprep.subr.bf16.mxu0 0
  %2200 = vmatpush1.bf16.msra.mxu0 %v2181
  %2201 = vmatprep.subr.bf16.mxu0 0
  %2202 = vmatpush2.bf16.msra.mxu0 0
  %2203 = vmatprep.subr.bf16.mxu0 0
  %2204 = vmatpush2.bf16.msra.mxu0 0
  %2205 = vmatprep.subr.bf16.mxu0 0
  %2206 = vmatpush2.bf16.msra.mxu0 0
  %2207 = vmatprep.subr.bf16.mxu0 0
  %2208 = vmatpush2.bf16.msra.mxu0 0
  %2209 = vmatprep.subr.bf16.mxu0 0
  %2210 = vmatpush2.bf16.msra.mxu0 0
  %2211 = vmatprep.subr.bf16.mxu0 0
  %2212 = vmatpush2.bf16.msra.mxu0 0
  %2213 = vmatprep.subr.bf16.mxu0 0
  %2214 = vmatpush2.bf16.msra.mxu0 0
  %2215 = vmatprep.subr.bf16.mxu0 0
  %2216 = vmatpush2.bf16.msra.mxu0 0
  %2217 = vmatprep.mubr.bf16.mxu0 0
  %2218 = vmatmul.mubr.bf16.gmra.mxu0 %v1673
  %v2219 = vpop.f32.mrf.mxu0
  %v2220 = vadd.f32 %v2171, %v2219
  %v2221 = vpop.f32.mrf.mxu0
  %v2222 = vpop.f32.mrf.mxu0
  %v2223 = vadd.f32 %v2171, %v2222
  %v2224 = vpop.f32.mrf.mxu0
  %2225 = vmatprep.mubr.bf16.mxu0 0
  %2226 = vmatmul.mubr.bf16.gmra.mxu0 %v1676
  %v2227 = vpop.f32.mrf.mxu0
  %v2228 = vadd.f32 %v2171, %v2227
  %v2229 = vpop.f32.mrf.mxu0
  %v2230 = vpop.f32.mrf.mxu0
  %v2231 = vpop.f32.mrf.mxu0
  %2232 = vdwg.mxu0
  %v2233 = vpack.c.bf16 %v2085, %v2082
  %v2234 = vpack.c.bf16 %v2090, %v2090
  %v2235 = vpack.c.bf16 %v2157, %v2154
  %v2237 = vsel %vm604, %v2233, 0
  %v2240 = vsel %vm604, %v2234, 0
  %2242 = vmatprep.subr.bf16.mxu0 0
  %2243 = vmatpush1.bf16.msra.mxu0 0
  %2244 = vmatprep.subr.bf16.mxu0 0
  %2245 = vmatpush1.bf16.msra.mxu0 0
  %2246 = vmatprep.subr.bf16.mxu0 0
  %2247 = vmatpush1.bf16.msra.mxu0 0
  %2248 = vmatprep.subr.bf16.mxu0 0
  %2249 = vmatpush1.bf16.msra.mxu0 0
  %2250 = vmatprep.subr.bf16.mxu0 0
  %2251 = vmatpush1.bf16.msra.mxu0 0
  %2252 = vmatprep.subr.bf16.mxu0 0
  %2253 = vmatpush1.bf16.msra.mxu0 0
  %2254 = vmatprep.subr.bf16.mxu0 0
  %2255 = vmatpush1.bf16.msra.mxu0 0
  %2256 = vmatprep.subr.bf16.mxu0 0
  %2257 = vmatpush1.bf16.msra.mxu0 %v2235
  %2258 = vmatprep.subr.bf16.mxu0 0
  %2259 = vmatpush2.bf16.msra.mxu0 0
  %2260 = vmatprep.subr.bf16.mxu0 0
  %2261 = vmatpush2.bf16.msra.mxu0 0
  %2262 = vmatprep.subr.bf16.mxu0 0
  %2263 = vmatpush2.bf16.msra.mxu0 0
  %2264 = vmatprep.subr.bf16.mxu0 0
  %2265 = vmatpush2.bf16.msra.mxu0 0
  %2266 = vmatprep.subr.bf16.mxu0 0
  %2267 = vmatpush2.bf16.msra.mxu0 0
  %2268 = vmatprep.subr.bf16.mxu0 0
  %2269 = vmatpush2.bf16.msra.mxu0 0
  %2270 = vmatprep.subr.bf16.mxu0 0
  %2271 = vmatpush2.bf16.msra.mxu0 0
  %2272 = vmatprep.subr.bf16.mxu0 0
  %2273 = vmatpush2.bf16.msra.mxu0 0
  %2274 = vmatprep.mubr.bf16.mxu0 0
  %2275 = vmatmul.mubr.bf16.gmra.mxu0 %v2237
  %v2276 = vpop.f32.mrf.mxu0
  %v2277 = vadd.f32 %v125, %v2276
  %v2278 = vpop.f32.mrf.mxu0
  %v2279 = vpop.f32.mrf.mxu0
  %v2280 = vadd.f32 %v126, %v2279
  %v2281 = vpop.f32.mrf.mxu0
  %2282 = vmatprep.mubr.bf16.mxu0 0
  %2283 = vmatmul.mubr.bf16.gmra.mxu0 %v2240
  %v2284 = vpop.f32.mrf.mxu0
  %v2285 = vadd.f32 %v127, %v2284
  %v2286 = vpop.f32.mrf.mxu0
  %v2287 = vpop.f32.mrf.mxu0
  %v2288 = vpop.f32.mrf.mxu0
  %2289 = vdwg.mxu0
  %v2290 = vsel %vm659, %v2277, -inf
  %2291 = vmax.xlane.f32.xlu0 %v2290
  %v2292 = vpop.xlane.xlu0 %2291
  %v2293 = vsel %vm659, %v2280, -inf
  %2294 = vmax.xlane.f32.xlu0 %v2293
  %v2295 = vpop.xlane.xlu0 %2294
  %v2296 = vsel %vm666, %v2285, -inf
  %2297 = vmax.xlane.f32.xlu0 %v2296
  %v2298 = vpop.xlane.xlu0 %2297
  %v2299 = vsub.f32 %v2277, %v2292
  %v2300 = vsub.f32 %v2280, %v2295
  %v2301 = vsub.f32 %v2285, %v2298
  %v2302 = vmul.f32 %v2299, 1.442695
  %v2303 = vpow.pop %v2302
  %v2304 = vmul.f32 %v2300, 1.442695
  %v2305 = vpow.pop %v2304
  %v2306 = vmul.f32 %v2301, 1.442695
  %v2307 = vpow.pop %v2306
  %v2308 = vsel %vm659, %v2303, 0.0
  %2309 = vadd.xlane.f32.xlu0 %v2308
  %v2310 = vpop.xlane.xlu0 %2309
  %v2311 = vsel %vm659, %v2305, 0.0
  %2312 = vadd.xlane.f32.xlu0 %v2311
  %v2313 = vpop.xlane.xlu0 %2312
  %v2314 = vsel %vm666, %v2307, 0.0
  %2315 = vadd.xlane.f32.xlu0 %v2314
  %v2316 = vpop.xlane.xlu0 %2315
  %v2317 = vrcp.pop %v2310
  %v2318 = vrcp.pop %v2313
  %v2319 = vrcp.pop %v2316
  %v2320 = vmul.f32 %v2303, %v2317
  %v2321 = vmul.f32 %v2305, %v2318
  %v2322 = vmul.f32 %v2307, %v2319
  %v2323 = vpack.c.bf16 %v2321, %v2320
  %v2324 = vpack.c.bf16 %v2322, %v2322
  %v2325 = vpack.c.bf16 %v2223, %v2220
  %v2326 = vpack.c.bf16 %v2228, %v2228
  %v2328 = vsel %vm659, %v2323, 0
  %v2331 = vsel %vm659, %v2324, 0
  %v2334 = vsel %vm704, %v2326, 0
  %2336 = vmatprep.subr.bf16.mxu0 0
  %2337 = vmatpush1.bf16.msra.mxu0 0
  %2338 = vmatprep.subr.bf16.mxu0 0
  %2339 = vmatpush1.bf16.msra.mxu0 0
  %2340 = vmatprep.subr.bf16.mxu0 0
  %2341 = vmatpush1.bf16.msra.mxu0 0
  %2342 = vmatprep.subr.bf16.mxu0 0
  %2343 = vmatpush1.bf16.msra.mxu0 0
  %2344 = vmatprep.subr.bf16.mxu0 0
  %2345 = vmatpush1.bf16.msra.mxu0 0
  %2346 = vmatprep.subr.bf16.mxu0 0
  %2347 = vmatpush1.bf16.msra.mxu0 0
  %2348 = vmatprep.subr.bf16.mxu0 0
  %2349 = vmatpush1.bf16.msra.mxu0 %v2334
  %2350 = vmatprep.subr.bf16.mxu0 0
  %2351 = vmatpush1.bf16.msra.mxu0 %v2325
  %2352 = vmatprep.subr.bf16.mxu0 0
  %2353 = vmatpush2.bf16.msra.mxu0 0
  %2354 = vmatprep.subr.bf16.mxu0 0
  %2355 = vmatpush2.bf16.msra.mxu0 0
  %2356 = vmatprep.subr.bf16.mxu0 0
  %2357 = vmatpush2.bf16.msra.mxu0 0
  %2358 = vmatprep.subr.bf16.mxu0 0
  %2359 = vmatpush2.bf16.msra.mxu0 0
  %2360 = vmatprep.subr.bf16.mxu0 0
  %2361 = vmatpush2.bf16.msra.mxu0 0
  %2362 = vmatprep.subr.bf16.mxu0 0
  %2363 = vmatpush2.bf16.msra.mxu0 0
  %2364 = vmatprep.subr.bf16.mxu0 0
  %2365 = vmatpush2.bf16.msra.mxu0 0
  %2366 = vmatprep.subr.bf16.mxu0 0
  %2367 = vmatpush2.bf16.msra.mxu0 0
  %2368 = vmatprep.mubr.bf16.mxu0 0
  %2369 = vmatmul.mubr.bf16.gmra.mxu0 %v2328
  %v2370 = vpop.f32.mrf.mxu0
  %v2371 = vadd.f32 0.0, %v2370
  %v2372 = vpop.f32.mrf.mxu0
  %v2373 = vpop.f32.mrf.mxu0
  %v2374 = vadd.f32 0.0, %v2373
  %v2375 = vpop.f32.mrf.mxu0
  %2376 = vmatprep.mubr.bf16.mxu0 0
  %2377 = vmatmul.mubr.bf16.gmra.mxu0 %v2331
  %v2378 = vpop.f32.mrf.mxu0
  %v2379 = vadd.f32 0.0, %v2378
  %v2380 = vpop.f32.mrf.mxu0
  %v2381 = vpop.f32.mrf.mxu0
  %v2382 = vpop.f32.mrf.mxu0
  %2383 = vdwg.mxu0
  %s2384 = scalar_lea.vmem %s25, 24
  %v2385 = vld [vmem:[%s2384] sm:$0xf]
  %v2386 = vld [vmem:[%s2384 + $0x4] sm:$0xf]
  %v2387 = vpack.c.bf16 %v2374, %v2371
  %v2388 = vpack.c.bf16 %v2379, %v2379
  %v2391 = vunpack.c.l.b16 %v2385
  %v2392 = vunpack.c.l.b16 %v2386
  %v2393 = vpack.c.b16 %v2392, %v2391
  %v2396 = vsel %vm604, %v2387, 0
  %v2399 = vsel %vm604, %v2388, 0
  %2401 = vmatprep.subr.bf16.mxu0 0
  %2402 = vmatpush1.bf16.msra.mxu0 0
  %2403 = vmatprep.subr.bf16.mxu0 0
  %2404 = vmatpush1.bf16.msra.mxu0 0
  %2405 = vmatprep.subr.bf16.mxu0 0
  %2406 = vmatpush1.bf16.msra.mxu0 0
  %2407 = vmatprep.subr.bf16.mxu0 0
  %2408 = vmatpush1.bf16.msra.mxu0 0
  %2409 = vmatprep.subr.bf16.mxu0 0
  %2410 = vmatpush1.bf16.msra.mxu0 0
  %2411 = vmatprep.subr.bf16.mxu0 0
  %2412 = vmatpush1.bf16.msra.mxu0 0
  %2413 = vmatprep.subr.bf16.mxu0 0
  %2414 = vmatpush1.bf16.msra.mxu0 0
  %2415 = vmatprep.subr.bf16.mxu0 0
  %2416 = vmatpush1.bf16.msra.mxu0 %v2393
  %2417 = vmatprep.subr.bf16.mxu0 0
  %2418 = vmatpush2.bf16.msra.mxu0 0
  %2419 = vmatprep.subr.bf16.mxu0 0
  %2420 = vmatpush2.bf16.msra.mxu0 0
  %2421 = vmatprep.subr.bf16.mxu0 0
  %2422 = vmatpush2.bf16.msra.mxu0 0
  %2423 = vmatprep.subr.bf16.mxu0 0
  %2424 = vmatpush2.bf16.msra.mxu0 0
  %2425 = vmatprep.subr.bf16.mxu0 0
  %2426 = vmatpush2.bf16.msra.mxu0 0
  %2427 = vmatprep.subr.bf16.mxu0 0
  %2428 = vmatpush2.bf16.msra.mxu0 0
  %2429 = vmatprep.subr.bf16.mxu0 0
  %2430 = vmatpush2.bf16.msra.mxu0 0
  %2431 = vmatprep.subr.bf16.mxu0 0
  %2432 = vmatpush2.bf16.msra.mxu0 0
  %2433 = vmatprep.mubr.bf16.mxu0 0
  %2434 = vmatmul.mubr.bf16.gmra.mxu0 %v2396
  %v2435 = vpop.f32.mrf.mxu0
  %v2436 = vadd.f32 0.0, %v2435
  %v2437 = vpop.f32.mrf.mxu0
  %v2438 = vpop.f32.mrf.mxu0
  %v2439 = vadd.f32 0.0, %v2438
  %v2440 = vpop.f32.mrf.mxu0
  %2441 = vmatprep.mubr.bf16.mxu0 0
  %2442 = vmatmul.mubr.bf16.gmra.mxu0 %v2399
  %v2443 = vpop.f32.mrf.mxu0
  %v2444 = vadd.f32 0.0, %v2443
  %v2445 = vpop.f32.mrf.mxu0
  %v2446 = vpop.f32.mrf.mxu0
  %v2447 = vpop.f32.mrf.mxu0
  %2448 = vdwg.mxu0
  %v2451 = vunpack.c.l.b16 %v2018
  %v2452 = vunpack.c.l.b16 %v2019
  %v2453 = vpack.c.b16 %v2452, %v2451
  %v2456 = vsel %vm604, %v2020, 0
  %v2459 = vsel %vm604, %v2021, 0
  %2461 = vmatprep.subr.bf16.mxu0 0
  %2462 = vmatpush1.bf16.msra.mxu0 0
  %2463 = vmatprep.subr.bf16.mxu0 0
  %2464 = vmatpush1.bf16.msra.mxu0 0
  %2465 = vmatprep.subr.bf16.mxu0 0
  %2466 = vmatpush1.bf16.msra.mxu0 0
  %2467 = vmatprep.subr.bf16.mxu0 0
  %2468 = vmatpush1.bf16.msra.mxu0 0
  %2469 = vmatprep.subr.bf16.mxu0 0
  %2470 = vmatpush1.bf16.msra.mxu0 0
  %2471 = vmatprep.subr.bf16.mxu0 0
  %2472 = vmatpush1.bf16.msra.mxu0 0
  %2473 = vmatprep.subr.bf16.mxu0 0
  %2474 = vmatpush1.bf16.msra.mxu0 0
  %2475 = vmatprep.subr.bf16.mxu0 0
  %2476 = vmatpush1.bf16.msra.mxu0 %v2453
  %2477 = vmatprep.subr.bf16.mxu0 0
  %2478 = vmatpush2.bf16.msra.mxu0 0
  %2479 = vmatprep.subr.bf16.mxu0 0
  %2480 = vmatpush2.bf16.msra.mxu0 0
  %2481 = vmatprep.subr.bf16.mxu0 0
  %2482 = vmatpush2.bf16.msra.mxu0 0
  %2483 = vmatprep.subr.bf16.mxu0 0
  %2484 = vmatpush2.bf16.msra.mxu0 0
  %2485 = vmatprep.subr.bf16.mxu0 0
  %2486 = vmatpush2.bf16.msra.mxu0 0
  %2487 = vmatprep.subr.bf16.mxu0 0
  %2488 = vmatpush2.bf16.msra.mxu0 0
  %2489 = vmatprep.subr.bf16.mxu0 0
  %2490 = vmatpush2.bf16.msra.mxu0 0
  %2491 = vmatprep.subr.bf16.mxu0 0
  %2492 = vmatpush2.bf16.msra.mxu0 0
  %2493 = vmatprep.mubr.bf16.mxu0 0
  %2494 = vmatmul.mubr.bf16.gmra.mxu0 %v2456
  %v2495 = vpop.f32.mrf.mxu0
  %v2496 = vadd.f32 %v2436, %v2495
  %v2497 = vpop.f32.mrf.mxu0
  %v2498 = vpop.f32.mrf.mxu0
  %v2499 = vadd.f32 %v2439, %v2498
  %v2500 = vpop.f32.mrf.mxu0
  %2501 = vmatprep.mubr.bf16.mxu0 0
  %2502 = vmatmul.mubr.bf16.gmra.mxu0 %v2459
  %v2503 = vpop.f32.mrf.mxu0
  %v2504 = vadd.f32 %v2444, %v2503
  %v2505 = vpop.f32.mrf.mxu0
  %v2506 = vpop.f32.mrf.mxu0
  %v2507 = vpop.f32.mrf.mxu0
  %2508 = vdwg.mxu0
  %v2509 = vadd.f32 %v1549, %v2496
  %v2510 = vadd.f32 %v1550, %v2499
  %v2511 = vadd.f32 %v1551, %v2504
  %s2512 = scalar_lea.vmem %s27, 1
  %v2513 = vld [vmem:[%s2512] sm:$0x1]
  %v2515 = vlaneseq
  %v2516 = vshrl.u32 %v2515, 7
  %v2517 = vsub.s32 0, %v2516
  %v2518 = vrot.slane %v2513, %v2517
  %v2520 = vadd.f32 %v2509, %v2518
  %v2521 = vadd.f32 %v2510, %v2518
  %v2522 = vadd.f32 %v2511, %v2518
  %s2523 = scalar_lea.vmem %s29, 1
  %v2524 = vld [vmem:[%s2523] sm:$0x1]
  %s2525 = scalar_lea.vmem %s31, 1
  %v2526 = vld [vmem:[%s2525] sm:$0x1]
  %v2527 = vsel %vm294, %v2520, 0.0
  %2528 = vadd.xlane.f32.xlu0 %v2527
  %v2529 = vpop.xlane.xlu0 %2528
  %v2530 = vsel %vm294, %v2521, 0.0
  %2531 = vadd.xlane.f32.xlu0 %v2530
  %v2532 = vpop.xlane.xlu0 %2531
  %v2533 = vsel %vm301, %v2522, 0.0
  %2534 = vadd.xlane.f32.xlu0 %v2533
  %v2535 = vpop.xlane.xlu0 %2534
  %v2536 = vmul.f32 %v2529, %v305
  %v2537 = vmul.f32 %v2532, %v305
  %v2538 = vmul.f32 %v2535, %v305
  %v2539 = vsub.f32 %v2520, %v2536
  %v2540 = vsub.f32 %v2521, %v2537
  %v2541 = vsub.f32 %v2522, %v2538
  %v2542 = vmul.f32 %v2539, %v2539
  %v2543 = vmul.f32 %v2540, %v2540
  %v2544 = vmul.f32 %v2541, %v2541
  %v2545 = vsel %vm294, %v2542, 0.0
  %2546 = vadd.xlane.f32.xlu0 %v2545
  %v2547 = vpop.xlane.xlu0 %2546
  %v2548 = vsel %vm294, %v2543, 0.0
  %2549 = vadd.xlane.f32.xlu0 %v2548
  %v2550 = vpop.xlane.xlu0 %2549
  %v2551 = vsel %vm301, %v2544, 0.0
  %2552 = vadd.xlane.f32.xlu0 %v2551
  %v2553 = vpop.xlane.xlu0 %2552
  %v2554 = vmul.f32 %v2547, %v305
  %v2555 = vmul.f32 %v2550, %v305
  %v2556 = vmul.f32 %v2553, %v305
  %v2557 = vadd.f32 %v2554, 1e-12
  %v2558 = vadd.f32 %v2555, 1e-12
  %v2559 = vadd.f32 %v2556, 1e-12
  %v2560 = vrsqrt.pop %v2557
  %v2561 = vrsqrt.pop %v2558
  %v2562 = vrsqrt.pop %v2559
  %v2563 = vmul.f32 %v2539, %v2560
  %v2564 = vmul.f32 %v2540, %v2561
  %v2565 = vmul.f32 %v2541, %v2562
  %v2567 = vlaneseq
  %v2568 = vshrl.u32 %v2567, 7
  %v2569 = vsub.s32 0, %v2568
  %v2570 = vrot.slane %v2524, %v2569
  %v2572 = vmul.f32 %v2563, %v2570
  %v2573 = vmul.f32 %v2564, %v2570
  %v2574 = vmul.f32 %v2565, %v2570
  %v2576 = vlaneseq
  %v2577 = vshrl.u32 %v2576, 7
  %v2578 = vsub.s32 0, %v2577
  %v2579 = vrot.slane %v2526, %v2578
  %v2581 = vadd.f32 %v2572, %v2579
  %v2582 = vadd.f32 %v2573, %v2579
  %v2583 = vadd.f32 %v2574, %v2579
  %s2584 = scalar_lea.vmem %s33, 16
  %v2585 = vld [vmem:[%s2584] sm:$0xf]
  %v2586 = vld [vmem:[%s2584 + $0x4] sm:$0xf]
  %v2587 = vld [vmem:[%s2584 + $0x8] sm:$0xf]
  %v2588 = vld [vmem:[%s2584 + $0xc] sm:$0xf]
  %v2589 = vpack.c.bf16 %v2582, %v2581
  %v2590 = vpack.c.bf16 %v2583, %v2583
  %s2591 = scalar_lea.vmem %s35, 1
  %v2592 = vld [vmem:[%s2591] sm:$0x1]
  %v2594 = vlaneseq
  %v2595 = vshrl.u32 %v2594, 7
  %v2596 = vsub.s32 0, %v2595
  %v2597 = vrot.slane %v2592, %v2596
  %v2603 = vunpack.c.l.b16 %v2585
  %v2604 = vunpack.c.l.b16 %v2586
  %v2605 = vunpack.c.l.b16 %v2587
  %v2606 = vunpack.c.l.b16 %v2588
  %v2607 = vpack.c.b16 %v2604, %v2603
  %v2608 = vpack.c.b16 %v2606, %v2605
  %v2612 = vsel %vm294, %v2589, 0
  %v2615 = vsel %vm294, %v2590, 0
  %2617 = vmatprep.subr.bf16.mxu0 0
  %2618 = vmatpush1.bf16.msra.mxu0 0
  %2619 = vmatprep.subr.bf16.mxu0 0
  %2620 = vmatpush1.bf16.msra.mxu0 0
  %2621 = vmatprep.subr.bf16.mxu0 0
  %2622 = vmatpush1.bf16.msra.mxu0 0
  %2623 = vmatprep.subr.bf16.mxu0 0
  %2624 = vmatpush1.bf16.msra.mxu0 0
  %2625 = vmatprep.subr.bf16.mxu0 0
  %2626 = vmatpush1.bf16.msra.mxu0 0
  %2627 = vmatprep.subr.bf16.mxu0 0
  %2628 = vmatpush1.bf16.msra.mxu0 0
  %2629 = vmatprep.subr.bf16.mxu0 0
  %2630 = vmatpush1.bf16.msra.mxu0 %v2608
  %2631 = vmatprep.subr.bf16.mxu0 0
  %2632 = vmatpush1.bf16.msra.mxu0 %v2607
  %2633 = vmatprep.subr.bf16.mxu0 0
  %2634 = vmatpush2.bf16.msra.mxu0 0
  %2635 = vmatprep.subr.bf16.mxu0 0
  %2636 = vmatpush2.bf16.msra.mxu0 0
  %2637 = vmatprep.subr.bf16.mxu0 0
  %2638 = vmatpush2.bf16.msra.mxu0 0
  %2639 = vmatprep.subr.bf16.mxu0 0
  %2640 = vmatpush2.bf16.msra.mxu0 0
  %2641 = vmatprep.subr.bf16.mxu0 0
  %2642 = vmatpush2.bf16.msra.mxu0 0
  %2643 = vmatprep.subr.bf16.mxu0 0
  %2644 = vmatpush2.bf16.msra.mxu0 0
  %2645 = vmatprep.subr.bf16.mxu0 0
  %2646 = vmatpush2.bf16.msra.mxu0 0
  %2647 = vmatprep.subr.bf16.mxu0 0
  %2648 = vmatpush2.bf16.msra.mxu0 0
  %2649 = vmatprep.mubr.bf16.mxu0 0
  %2650 = vmatmul.mubr.bf16.gmra.mxu0 %v2612
  %v2651 = vpop.f32.mrf.mxu0
  %v2652 = vadd.f32 %v2597, %v2651
  %v2653 = vpop.f32.mrf.mxu0
  %v2654 = vpop.f32.mrf.mxu0
  %v2655 = vadd.f32 %v2597, %v2654
  %v2656 = vpop.f32.mrf.mxu0
  %2657 = vmatprep.mubr.bf16.mxu0 0
  %2658 = vmatmul.mubr.bf16.gmra.mxu0 %v2615
  %v2659 = vpop.f32.mrf.mxu0
  %v2660 = vadd.f32 %v2597, %v2659
  %v2661 = vpop.f32.mrf.mxu0
  %v2662 = vpop.f32.mrf.mxu0
  %v2663 = vpop.f32.mrf.mxu0
  %2664 = vdwg.mxu0
  %v2665 = vmul.f32 %v2652, 0.5
  %v2666 = vmul.f32 %v2655, 0.5
  %v2667 = vmul.f32 %v2660, 0.5
  %v2668 = vmul.f32 %v2652, 0.044715
  %v2669 = vmul.f32 %v2655, 0.044715
  %v2670 = vmul.f32 %v2660, 0.044715
  %v2671 = vmul.f32 %v2668, %v2652
  %v2672 = vmul.f32 %v2669, %v2655
  %v2673 = vmul.f32 %v2670, %v2660
  %v2674 = vmul.f32 %v2671, %v2652
  %v2675 = vmul.f32 %v2672, %v2655
  %v2676 = vmul.f32 %v2673, %v2660
  %v2677 = vadd.f32 %v2652, %v2674
  %v2678 = vadd.f32 %v2655, %v2675
  %v2679 = vadd.f32 %v2660, %v2676
  %v2680 = vmul.f32 %v2677, 0.7978846
  %v2681 = vmul.f32 %v2678, 0.7978846
  %v2682 = vmul.f32 %v2679, 0.7978846
  %v2683 = vtanh.pop %v2680
  %v2684 = vtanh.pop %v2681
  %v2685 = vtanh.pop %v2682
  %v2686 = vadd.f32 %v2683, 1.0
  %v2687 = vadd.f32 %v2684, 1.0
  %v2688 = vadd.f32 %v2685, 1.0
  %v2689 = vmul.f32 %v2665, %v2686
  %v2690 = vmul.f32 %v2666, %v2687
  %v2691 = vmul.f32 %v2667, %v2688
  %s2692 = scalar_lea.vmem %s37, 64
  %v2693 = vld [vmem:[%s2692] sm:$0xf]
  %v2694 = vld [vmem:[%s2692 + $0x4] sm:$0xf]
  %v2695 = vld [vmem:[%s2692 + $0x8] sm:$0xf]
  %v2696 = vld [vmem:[%s2692 + $0xc] sm:$0xf]
  %v2697 = vld [vmem:[%s2692 + $0x10] sm:$0xf]
  %v2698 = vld [vmem:[%s2692 + $0x14] sm:$0xf]
  %v2699 = vld [vmem:[%s2692 + $0x18] sm:$0xf]
  %v2700 = vld [vmem:[%s2692 + $0x1c] sm:$0xf]
  %v2701 = vld [vmem:[%s2692 + $0x20] sm:$0xf]
  %v2702 = vld [vmem:[%s2692 + $0x24] sm:$0xf]
  %v2703 = vld [vmem:[%s2692 + $0x28] sm:$0xf]
  %v2704 = vld [vmem:[%s2692 + $0x2c] sm:$0xf]
  %v2705 = vld [vmem:[%s2692 + $0x30] sm:$0xf]
  %v2706 = vld [vmem:[%s2692 + $0x34] sm:$0xf]
  %v2707 = vld [vmem:[%s2692 + $0x38] sm:$0xf]
  %v2708 = vld [vmem:[%s2692 + $0x3c] sm:$0xf]
  %v2709 = vpack.c.bf16 %v2690, %v2689
  %v2710 = vpack.c.bf16 %v2691, %v2691
  %v2727 = vunpack.c.l.b16 %v2693
  %v2728 = vunpack.c.l.b16 %v2694
  %v2729 = vunpack.c.l.b16 %v2695
  %v2730 = vunpack.c.l.b16 %v2696
  %v2731 = vunpack.c.l.b16 %v2697
  %v2732 = vunpack.c.l.b16 %v2698
  %v2733 = vunpack.c.l.b16 %v2699
  %v2734 = vunpack.c.l.b16 %v2700
  %v2735 = vunpack.c.l.b16 %v2701
  %v2736 = vunpack.c.l.b16 %v2702
  %v2737 = vunpack.c.l.b16 %v2703
  %v2738 = vunpack.c.l.b16 %v2704
  %v2739 = vunpack.c.l.b16 %v2705
  %v2740 = vunpack.c.l.b16 %v2706
  %v2741 = vunpack.c.l.b16 %v2707
  %v2742 = vunpack.c.l.b16 %v2708
  %v2743 = vpack.c.b16 %v2728, %v2727
  %v2744 = vpack.c.b16 %v2730, %v2729
  %v2745 = vpack.c.b16 %v2732, %v2731
  %v2746 = vpack.c.b16 %v2734, %v2733
  %v2747 = vpack.c.b16 %v2736, %v2735
  %v2748 = vpack.c.b16 %v2738, %v2737
  %v2749 = vpack.c.b16 %v2740, %v2739
  %v2750 = vpack.c.b16 %v2742, %v2741
  %2759 = vmatprep.subr.bf16.mxu0 0
  %2760 = vmatpush1.bf16.msra.mxu0 %v2750
  %2761 = vmatprep.subr.bf16.mxu0 0
  %2762 = vmatpush1.bf16.msra.mxu0 %v2749
  %2763 = vmatprep.subr.bf16.mxu0 0
  %2764 = vmatpush1.bf16.msra.mxu0 %v2748
  %2765 = vmatprep.subr.bf16.mxu0 0
  %2766 = vmatpush1.bf16.msra.mxu0 %v2747
  %2767 = vmatprep.subr.bf16.mxu0 0
  %2768 = vmatpush1.bf16.msra.mxu0 %v2746
  %2769 = vmatprep.subr.bf16.mxu0 0
  %2770 = vmatpush1.bf16.msra.mxu0 %v2745
  %2771 = vmatprep.subr.bf16.mxu0 0
  %2772 = vmatpush1.bf16.msra.mxu0 %v2744
  %2773 = vmatprep.subr.bf16.mxu0 0
  %2774 = vmatpush1.bf16.msra.mxu0 %v2743
  %2775 = vmatprep.subr.bf16.mxu0 0
  %2776 = vmatpush2.bf16.msra.mxu0 0
  %2777 = vmatprep.subr.bf16.mxu0 0
  %2778 = vmatpush2.bf16.msra.mxu0 0
  %2779 = vmatprep.subr.bf16.mxu0 0
  %2780 = vmatpush2.bf16.msra.mxu0 0
  %2781 = vmatprep.subr.bf16.mxu0 0
  %2782 = vmatpush2.bf16.msra.mxu0 0
  %2783 = vmatprep.subr.bf16.mxu0 0
  %2784 = vmatpush2.bf16.msra.mxu0 0
  %2785 = vmatprep.subr.bf16.mxu0 0
  %2786 = vmatpush2.bf16.msra.mxu0 0
  %2787 = vmatprep.subr.bf16.mxu0 0
  %2788 = vmatpush2.bf16.msra.mxu0 0
  %2789 = vmatprep.subr.bf16.mxu0 0
  %2790 = vmatpush2.bf16.msra.mxu0 0
  %2791 = vmatprep.mubr.bf16.mxu0 0
  %2792 = vmatmul.mubr.bf16.gmra.mxu0 %v2709
  %v2793 = vpop.f32.mrf.mxu0
  %v2794 = vadd.f32 0.0, %v2793
  %v2795 = vpop.f32.mrf.mxu0
  %v2796 = vpop.f32.mrf.mxu0
  %v2797 = vadd.f32 0.0, %v2796
  %v2798 = vpop.f32.mrf.mxu0
  %2799 = vmatprep.mubr.bf16.mxu0 0
  %2800 = vmatmul.mubr.bf16.gmra.mxu0 %v2710
  %v2801 = vpop.f32.mrf.mxu0
  %v2802 = vadd.f32 0.0, %v2801
  %v2803 = vpop.f32.mrf.mxu0
  %v2804 = vpop.f32.mrf.mxu0
  %v2805 = vpop.f32.mrf.mxu0
  %2806 = vdwg.mxu0
  %v2807 = vadd.f32 %v2520, %v2794
  %v2808 = vadd.f32 %v2521, %v2797
  %v2809 = vadd.f32 %v2522, %v2802
  %s2810 = scalar_lea.vmem %s39, 1
  %v2811 = vld [vmem:[%s2810] sm:$0x1]
  %v2813 = vlaneseq
  %v2814 = vshrl.u32 %v2813, 7
  %v2815 = vsub.s32 0, %v2814
  %v2816 = vrot.slane %v2811, %v2815
  %v2818 = vadd.f32 %v2807, %v2816
  %v2819 = vadd.f32 %v2808, %v2816
  %v2820 = vadd.f32 %v2809, %v2816
  %v2821 = vld [vmem:[%s45] sm:$0x3]
  %v2822 = vpack.c.bf16 %v2821, %v2821
  %v2823 = vpack.c.bf16 %v2819, %v2818
  %v2824 = vpack.c.bf16 %v2820, %v2820
  %v2826 = vsel %vm659, %v2822, 0
  %v2829 = vsel %vm704, %v2824, 0
  %2831 = vmatprep.subr.bf16.mxu0 0
  %2832 = vmatpush1.bf16.msra.mxu0 0
  %2833 = vmatprep.subr.bf16.mxu0 0
  %2834 = vmatpush1.bf16.msra.mxu0 0
  %2835 = vmatprep.subr.bf16.mxu0 0
  %2836 = vmatpush1.bf16.msra.mxu0 0
  %2837 = vmatprep.subr.bf16.mxu0 0
  %2838 = vmatpush1.bf16.msra.mxu0 0
  %2839 = vmatprep.subr.bf16.mxu0 0
  %2840 = vmatpush1.bf16.msra.mxu0 0
  %2841 = vmatprep.subr.bf16.mxu0 0
  %2842 = vmatpush1.bf16.msra.mxu0 0
  %2843 = vmatprep.subr.bf16.mxu0 0
  %2844 = vmatpush1.bf16.msra.mxu0 %v2829
  %2845 = vmatprep.subr.bf16.mxu0 0
  %2846 = vmatpush1.bf16.msra.mxu0 %v2823
  %2847 = vmatprep.subr.bf16.mxu0 0
  %2848 = vmatpush2.bf16.msra.mxu0 0
  %2849 = vmatprep.subr.bf16.mxu0 0
  %2850 = vmatpush2.bf16.msra.mxu0 0
  %2851 = vmatprep.subr.bf16.mxu0 0
  %2852 = vmatpush2.bf16.msra.mxu0 0
  %2853 = vmatprep.subr.bf16.mxu0 0
  %2854 = vmatpush2.bf16.msra.mxu0 0
  %2855 = vmatprep.subr.bf16.mxu0 0
  %2856 = vmatpush2.bf16.msra.mxu0 0
  %2857 = vmatprep.subr.bf16.mxu0 0
  %2858 = vmatpush2.bf16.msra.mxu0 0
  %2859 = vmatprep.subr.bf16.mxu0 0
  %2860 = vmatpush2.bf16.msra.mxu0 0
  %2861 = vmatprep.subr.bf16.mxu0 0
  %2862 = vmatpush2.bf16.msra.mxu0 0
  %2863 = vmatprep.mubr.bf16.mxu0 0
  %2864 = vmatmul.mubr.bf16.gmra.mxu0 %v2826
  %v2865 = vpop.f32.mrf.mxu0
  %v2866 = vadd.f32 0.0, %v2865
  %v2867 = vpop.f32.mrf.mxu0
  %v2868 = vpop.f32.mrf.mxu0
  %v2869 = vpop.f32.mrf.mxu0
  %2870 = vdwg.mxu0
  %v2871 = vld [vmem:[%s41] sm:$0x1]
  %v2872 = vld [vmem:[%s43] sm:$0x1]
  %vm2873 = vcmask 254976
  %v2874 = vsel %vm2873, %v2866, 0.0
  %2875 = vadd.xlane.f32.xlu0 %v2874
  %v2876 = vpop.xlane.xlu0 %2875
  %v2877 = vmul.f32 %v2876, %v305
  %v2878 = vsub.f32 %v2866, %v2877
  %v2879 = vmul.f32 %v2878, %v2878
  %v2880 = vsel %vm2873, %v2879, 0.0
  %2881 = vadd.xlane.f32.xlu0 %v2880
  %v2882 = vpop.xlane.xlu0 %2881
  %v2883 = vmul.f32 %v2882, %v305
  %v2884 = vadd.f32 %v2883, 1e-12
  %v2885 = vrsqrt.pop %v2884
  %v2886 = vmul.f32 %v2878, %v2885
  %v2888 = vlaneseq
  %v2889 = vshrl.u32 %v2888, 7
  %v2890 = vsub.s32 0, %v2889
  %v2891 = vrot.slane %v2871, %v2890
  %v2893 = vmul.f32 %v2886, %v2891
  %v2895 = vlaneseq
  %v2896 = vshrl.u32 %v2895, 7
  %v2897 = vsub.s32 0, %v2896
  %v2898 = vrot.slane %v2872, %v2897
  %v2900 = vadd.f32 %v2893, %v2898
  %v2901 = vld [vmem:[%s47] sm:$0x3]
  %v2902 = vpack.c.bf16 %v2901, %v2901
  %v2904 = vsel %vm659, %v2902, 0
  %2906 = vmatprep.subr.bf16.mxu0 0
  %2907 = vmatpush1.bf16.msra.mxu0 0
  %2908 = vmatprep.subr.bf16.mxu0 0
  %2909 = vmatpush1.bf16.msra.mxu0 0
  %2910 = vmatprep.subr.bf16.mxu0 0
  %2911 = vmatpush1.bf16.msra.mxu0 0
  %2912 = vmatprep.subr.bf16.mxu0 0
  %2913 = vmatpush1.bf16.msra.mxu0 0
  %2914 = vmatprep.subr.bf16.mxu0 0
  %2915 = vmatpush1.bf16.msra.mxu0 0
  %2916 = vmatprep.subr.bf16.mxu0 0
  %2917 = vmatpush1.bf16.msra.mxu0 0
  %2918 = vmatprep.subr.bf16.mxu0 0
  %2919 = vmatpush1.bf16.msra.mxu0 %v2829
  %2920 = vmatprep.subr.bf16.mxu0 0
  %2921 = vmatpush1.bf16.msra.mxu0 %v2823
  %2922 = vmatprep.subr.bf16.mxu0 0
  %2923 = vmatpush2.bf16.msra.mxu0 0
  %2924 = vmatprep.subr.bf16.mxu0 0
  %2925 = vmatpush2.bf16.msra.mxu0 0
  %2926 = vmatprep.subr.bf16.mxu0 0
  %2927 = vmatpush2.bf16.msra.mxu0 0
  %2928 = vmatprep.subr.bf16.mxu0 0
  %2929 = vmatpush2.bf16.msra.mxu0 0
  %2930 = vmatprep.subr.bf16.mxu0 0
  %2931 = vmatpush2.bf16.msra.mxu0 0
  %2932 = vmatprep.subr.bf16.mxu0 0
  %2933 = vmatpush2.bf16.msra.mxu0 0
  %2934 = vmatprep.subr.bf16.mxu0 0
  %2935 = vmatpush2.bf16.msra.mxu0 0
  %2936 = vmatprep.subr.bf16.mxu0 0
  %2937 = vmatpush2.bf16.msra.mxu0 0
  %2938 = vmatprep.mubr.bf16.mxu0 0
  %2939 = vmatmul.mubr.bf16.gmra.mxu0 %v2904
  %v2940 = vpop.f32.mrf.mxu0
  %v2941 = vadd.f32 0.0, %v2940
  %v2942 = vpop.f32.mrf.mxu0
  %v2943 = vpop.f32.mrf.mxu0
  %v2944 = vpop.f32.mrf.mxu0
  %2945 = vdwg.mxu0
  %v2946 = vsel %vm2873, %v2941, 0.0
  %2947 = vadd.xlane.f32.xlu0 %v2946
  %v2948 = vpop.xlane.xlu0 %2947
  %v2949 = vmul.f32 %v2948, %v305
  %v2950 = vsub.f32 %v2941, %v2949
  %v2951 = vmul.f32 %v2950, %v2950
  %v2952 = vsel %vm2873, %v2951, 0.0
  %2953 = vadd.xlane.f32.xlu0 %v2952
  %v2954 = vpop.xlane.xlu0 %2953
  %v2955 = vmul.f32 %v2954, %v305
  %v2956 = vadd.f32 %v2955, 1e-12
  %v2957 = vrsqrt.pop %v2956
  %v2958 = vmul.f32 %v2950, %v2957
  %v2959 = vmul.f32 %v2958, %v2891
  %v2960 = vadd.f32 %v2959, %v2898
  %v2961 = vld [vmem:[%s49] sm:$0xff]
  %v2962 = vld [vmem:[%s49 + $0x8] sm:$0xff]
  %v2963 = vld [vmem:[%s49 + $0x10] sm:$0xff]
  %v2964 = vld [vmem:[%s49 + $0x18] sm:$0xff]
  %v2965 = vld [vmem:[%s49 + $0x20] sm:$0xff]
  %v2966 = vld [vmem:[%s49 + $0x28] sm:$0xff]
  %v2967 = vld [vmem:[%s49 + $0x30] sm:$0xff]
  %v2968 = vld [vmem:[%s49 + $0x38] sm:$0xff]
  %v2969 = vpack.c.bf16 %v2900, %v2900
  %v2970 = vld [vmem:[%s51] sm:$0xff]
  %v2971 = vld [vmem:[%s51 + $0x8] sm:$0xff]
  %v2972 = vld [vmem:[%s51 + $0x10] sm:$0xff]
  %v2973 = vld [vmem:[%s51 + $0x18] sm:$0xff]
  %v2974 = vld [vmem:[%s51 + $0x20] sm:$0xff]
  %v2975 = vld [vmem:[%s51 + $0x28] sm:$0xff]
  %v2976 = vld [vmem:[%s51 + $0x30] sm:$0xff]
  %v2977 = vld [vmem:[%s51 + $0x38] sm:$0xff]
  %v2978 = vpack.c.bf16 %v2960, %v2960
  %v2987 = vunpack.c.l.b16 %v2970
  %v2988 = vunpack.c.h.b16 %v2970
  %v2989 = vunpack.c.l.b16 %v2971
  %v2990 = vunpack.c.h.b16 %v2971
  %v2991 = vunpack.c.l.b16 %v2972
  %v2992 = vunpack.c.h.b16 %v2972
  %v2993 = vunpack.c.l.b16 %v2973
  %v2994 = vunpack.c.h.b16 %v2973
  %v2995 = vunpack.c.l.b16 %v2974
  %v2996 = vunpack.c.h.b16 %v2974
  %v2997 = vunpack.c.l.b16 %v2975
  %v2998 = vunpack.c.h.b16 %v2975
  %v2999 = vunpack.c.l.b16 %v2976
  %v3000 = vunpack.c.h.b16 %v2976
  %v3001 = vunpack.c.l.b16 %v2977
  %v3002 = vunpack.c.h.b16 %v2977
  %v3003 = vpack.c.b16 %v2991, %v2987
  %v3004 = vpack.c.b16 %v2992, %v2988
  %v3005 = vpack.c.b16 %v2993, %v2989
  %v3006 = vpack.c.b16 %v2994, %v2990
  %v3007 = vpack.c.b16 %v2999, %v2995
  %v3008 = vpack.c.b16 %v3000, %v2996
  %v3009 = vpack.c.b16 %v3001, %v2997
  %v3010 = vpack.c.b16 %v3002, %v2998
  %v3020 = vsel %vm294, %v2978, 0
  %3022 = vmatprep.subr.bf16.mxu0 0
  %3023 = vmatpush1.bf16.msra.mxu0 0
  %3024 = vmatprep.subr.bf16.mxu0 0
  %3025 = vmatpush1.bf16.msra.mxu0 0
  %3026 = vmatprep.subr.bf16.mxu0 0
  %3027 = vmatpush1.bf16.msra.mxu0 0
  %3028 = vmatprep.subr.bf16.mxu0 0
  %3029 = vmatpush1.bf16.msra.mxu0 0
  %3030 = vmatprep.subr.bf16.mxu0 0
  %3031 = vmatpush1.bf16.msra.mxu0 0
  %3032 = vmatprep.subr.bf16.mxu0 0
  %3033 = vmatpush1.bf16.msra.mxu0 0
  %3034 = vmatprep.subr.bf16.mxu0 %v3008
  %3035 = vmatpush1.bf16.msra.mxu0 %v3007
  %3036 = vmatprep.subr.bf16.mxu0 %v3004
  %3037 = vmatpush1.bf16.msra.mxu0 %v3003
  %3038 = vmatprep.subr.bf16.mxu0 0
  %3039 = vmatpush2.bf16.msra.mxu0 0
  %3040 = vmatprep.subr.bf16.mxu0 0
  %3041 = vmatpush2.bf16.msra.mxu0 0
  %3042 = vmatprep.subr.bf16.mxu0 0
  %3043 = vmatpush2.bf16.msra.mxu0 0
  %3044 = vmatprep.subr.bf16.mxu0 0
  %3045 = vmatpush2.bf16.msra.mxu0 0
  %3046 = vmatprep.subr.bf16.mxu0 0
  %3047 = vmatpush2.bf16.msra.mxu0 0
  %3048 = vmatprep.subr.bf16.mxu0 0
  %3049 = vmatpush2.bf16.msra.mxu0 0
  %3050 = vmatprep.subr.bf16.mxu0 0
  %3051 = vmatpush2.bf16.msra.mxu0 0
  %3052 = vmatprep.subr.bf16.mxu0 0
  %3053 = vmatpush2.bf16.msra.mxu0 0
  %3054 = vmatprep.mubr.bf16.mxu0 0
  %3055 = vmatmul.mubr.bf16.gmra.mxu0 %v3020
  %v3056 = vpop.f32.mrf.mxu0
  %v3057 = vadd.f32 0.0, %v3056
  %v3058 = vpop.f32.mrf.mxu0
  %v3059 = vadd.f32 0.0, %v3058
  %v3060 = vpop.f32.mrf.mxu0
  %v3061 = vpop.f32.mrf.mxu0
  %3062 = vdwg.mxu0
  %3063 = vmatprep.subr.bf16.mxu0 0
  %3064 = vmatpush1.bf16.msra.mxu0 0
  %3065 = vmatprep.subr.bf16.mxu0 0
  %3066 = vmatpush1.bf16.msra.mxu0 0
  %3067 = vmatprep.subr.bf16.mxu0 0
  %3068 = vmatpush1.bf16.msra.mxu0 0
  %3069 = vmatprep.subr.bf16.mxu0 0
  %3070 = vmatpush1.bf16.msra.mxu0 0
  %3071 = vmatprep.subr.bf16.mxu0 0
  %3072 = vmatpush1.bf16.msra.mxu0 0
  %3073 = vmatprep.subr.bf16.mxu0 0
  %3074 = vmatpush1.bf16.msra.mxu0 0
  %3075 = vmatprep.subr.bf16.mxu0 %v3010
  %3076 = vmatpush1.bf16.msra.mxu0 %v3009
  %3077 = vmatprep.subr.bf16.mxu0 %v3006
  %3078 = vmatpush1.bf16.msra.mxu0 %v3005
  %3079 = vmatprep.subr.bf16.mxu0 0
  %3080 = vmatpush2.bf16.msra.mxu0 0
  %3081 = vmatprep.subr.bf16.mxu0 0
  %3082 = vmatpush2.bf16.msra.mxu0 0
  %3083 = vmatprep.subr.bf16.mxu0 0
  %3084 = vmatpush2.bf16.msra.mxu0 0
  %3085 = vmatprep.subr.bf16.mxu0 0
  %3086 = vmatpush2.bf16.msra.mxu0 0
  %3087 = vmatprep.subr.bf16.mxu0 0
  %3088 = vmatpush2.bf16.msra.mxu0 0
  %3089 = vmatprep.subr.bf16.mxu0 0
  %3090 = vmatpush2.bf16.msra.mxu0 0
  %3091 = vmatprep.subr.bf16.mxu0 0
  %3092 = vmatpush2.bf16.msra.mxu0 0
  %3093 = vmatprep.subr.bf16.mxu0 0
  %3094 = vmatpush2.bf16.msra.mxu0 0
  %3095 = vmatprep.mubr.bf16.mxu0 0
  %3096 = vmatmul.mubr.bf16.gmra.mxu0 %v3020
  %v3097 = vpop.f32.mrf.mxu0
  %v3098 = vadd.f32 0.0, %v3097
  %v3099 = vpop.f32.mrf.mxu0
  %v3100 = vadd.f32 0.0, %v3099
  %v3101 = vpop.f32.mrf.mxu0
  %v3102 = vpop.f32.mrf.mxu0
  %3103 = vdwg.mxu0
  %v3112 = vunpack.c.l.b16 %v2961
  %v3113 = vunpack.c.h.b16 %v2961
  %v3114 = vunpack.c.l.b16 %v2962
  %v3115 = vunpack.c.h.b16 %v2962
  %v3116 = vunpack.c.l.b16 %v2963
  %v3117 = vunpack.c.h.b16 %v2963
  %v3118 = vunpack.c.l.b16 %v2964
  %v3119 = vunpack.c.h.b16 %v2964
  %v3120 = vunpack.c.l.b16 %v2965
  %v3121 = vunpack.c.h.b16 %v2965
  %v3122 = vunpack.c.l.b16 %v2966
  %v3123 = vunpack.c.h.b16 %v2966
  %v3124 = vunpack.c.l.b16 %v2967
  %v3125 = vunpack.c.h.b16 %v2967
  %v3126 = vunpack.c.l.b16 %v2968
  %v3127 = vunpack.c.h.b16 %v2968
  %v3128 = vpack.c.b16 %v3116, %v3112
  %v3129 = vpack.c.b16 %v3117, %v3113
  %v3130 = vpack.c.b16 %v3118, %v3114
  %v3131 = vpack.c.b16 %v3119, %v3115
  %v3132 = vpack.c.b16 %v3124, %v3120
  %v3133 = vpack.c.b16 %v3125, %v3121
  %v3134 = vpack.c.b16 %v3126, %v3122
  %v3135 = vpack.c.b16 %v3127, %v3123
  %v3145 = vsel %vm294, %v2969, 0
  %3147 = vmatprep.subr.bf16.mxu0 0
  %3148 = vmatpush1.bf16.msra.mxu0 0
  %3149 = vmatprep.subr.bf16.mxu0 0
  %3150 = vmatpush1.bf16.msra.mxu0 0
  %3151 = vmatprep.subr.bf16.mxu0 0
  %3152 = vmatpush1.bf16.msra.mxu0 0
  %3153 = vmatprep.subr.bf16.mxu0 0
  %3154 = vmatpush1.bf16.msra.mxu0 0
  %3155 = vmatprep.subr.bf16.mxu0 0
  %3156 = vmatpush1.bf16.msra.mxu0 0
  %3157 = vmatprep.subr.bf16.mxu0 0
  %3158 = vmatpush1.bf16.msra.mxu0 0
  %3159 = vmatprep.subr.bf16.mxu0 %v3133
  %3160 = vmatpush1.bf16.msra.mxu0 %v3132
  %3161 = vmatprep.subr.bf16.mxu0 %v3129
  %3162 = vmatpush1.bf16.msra.mxu0 %v3128
  %3163 = vmatprep.subr.bf16.mxu0 0
  %3164 = vmatpush2.bf16.msra.mxu0 0
  %3165 = vmatprep.subr.bf16.mxu0 0
  %3166 = vmatpush2.bf16.msra.mxu0 0
  %3167 = vmatprep.subr.bf16.mxu0 0
  %3168 = vmatpush2.bf16.msra.mxu0 0
  %3169 = vmatprep.subr.bf16.mxu0 0
  %3170 = vmatpush2.bf16.msra.mxu0 0
  %3171 = vmatprep.subr.bf16.mxu0 0
  %3172 = vmatpush2.bf16.msra.mxu0 0
  %3173 = vmatprep.subr.bf16.mxu0 0
  %3174 = vmatpush2.bf16.msra.mxu0 0
  %3175 = vmatprep.subr.bf16.mxu0 0
  %3176 = vmatpush2.bf16.msra.mxu0 0
  %3177 = vmatprep.subr.bf16.mxu0 0
  %3178 = vmatpush2.bf16.msra.mxu0 0
  %3179 = vmatprep.mubr.bf16.mxu0 0
  %3180 = vmatmul.mubr.bf16.gmra.mxu0 %v3145
  %v3181 = vpop.f32.mrf.mxu0
  %v3182 = vadd.f32 %v3057, %v3181
  %v3183 = vpop.f32.mrf.mxu0
  %v3184 = vadd.f32 %v3059, %v3183
  %v3185 = vpop.f32.mrf.mxu0
  %v3186 = vpop.f32.mrf.mxu0
  %3187 = vdwg.mxu0
  %3188 = vmatprep.subr.bf16.mxu0 0
  %3189 = vmatpush1.bf16.msra.mxu0 0
  %3190 = vmatprep.subr.bf16.mxu0 0
  %3191 = vmatpush1.bf16.msra.mxu0 0
  %3192 = vmatprep.subr.bf16.mxu0 0
  %3193 = vmatpush1.bf16.msra.mxu0 0
  %3194 = vmatprep.subr.bf16.mxu0 0
  %3195 = vmatpush1.bf16.msra.mxu0 0
  %3196 = vmatprep.subr.bf16.mxu0 0
  %3197 = vmatpush1.bf16.msra.mxu0 0
  %3198 = vmatprep.subr.bf16.mxu0 0
  %3199 = vmatpush1.bf16.msra.mxu0 0
  %3200 = vmatprep.subr.bf16.mxu0 %v3135
  %3201 = vmatpush1.bf16.msra.mxu0 %v3134
  %3202 = vmatprep.subr.bf16.mxu0 %v3131
  %3203 = vmatpush1.bf16.msra.mxu0 %v3130
  %3204 = vmatprep.subr.bf16.mxu0 0
  %3205 = vmatpush2.bf16.msra.mxu0 0
  %3206 = vmatprep.subr.bf16.mxu0 0
  %3207 = vmatpush2.bf16.msra.mxu0 0
  %3208 = vmatprep.subr.bf16.mxu0 0
  %3209 = vmatpush2.bf16.msra.mxu0 0
  %3210 = vmatprep.subr.bf16.mxu0 0
  %3211 = vmatpush2.bf16.msra.mxu0 0
  %3212 = vmatprep.subr.bf16.mxu0 0
  %3213 = vmatpush2.bf16.msra.mxu0 0
  %3214 = vmatprep.subr.bf16.mxu0 0
  %3215 = vmatpush2.bf16.msra.mxu0 0
  %3216 = vmatprep.subr.bf16.mxu0 0
  %3217 = vmatpush2.bf16.msra.mxu0 0
  %3218 = vmatprep.subr.bf16.mxu0 0
  %3219 = vmatpush2.bf16.msra.mxu0 0
  %3220 = vmatprep.mubr.bf16.mxu0 0
  %3221 = vmatmul.mubr.bf16.gmra.mxu0 %v3145
  %v3222 = vpop.f32.mrf.mxu0
  %v3223 = vadd.f32 %v3098, %v3222
  %v3224 = vpop.f32.mrf.mxu0
  %v3225 = vadd.f32 %v3100, %v3224
  %v3226 = vpop.f32.mrf.mxu0
  %v3227 = vpop.f32.mrf.mxu0
  %3228 = vdwg.mxu0
  %v3229 = vld [vmem:[%s53] sm:$0xf]
  %v3231 = vlaneseq
  %v3232 = vshrl.u32 %v3231, 7
  %v3233 = vsub.s32 0, %v3232
  %v3234 = vrot.slane %v3229, %v3233
  %v3235 = vlaneseq
  %v3236 = vshrl.u32 %v3235, 7
  %v3237 = vsub.s32 1, %v3236
  %v3238 = vrot.slane %v3229, %v3237
  %v3239 = vlaneseq
  %v3240 = vshrl.u32 %v3239, 7
  %v3241 = vsub.s32 2, %v3240
  %v3242 = vrot.slane %v3229, %v3241
  %v3243 = vlaneseq
  %v3244 = vshrl.u32 %v3243, 7
  %v3245 = vsub.s32 3, %v3244
  %v3246 = vrot.slane %v3229, %v3245
  %v3251 = vadd.f32 %v3182, %v3234
  %v3252 = vadd.f32 %v3184, %v3238
  %v3253 = vadd.f32 %v3223, %v3242
  %v3254 = vadd.f32 %v3225, %v3246
  %v3255 = vmax.f32 %v3251, 0.0
  %v3256 = vmax.f32 %v3252, 0.0
  %v3257 = vmax.f32 %v3253, 0.0
  %v3258 = vmax.f32 %v3254, 0.0
  %v3259 = vld [vmem:[%s55] sm:$0xf]
  %v3261 = vlaneseq
  %v3262 = vshrl.u32 %v3261, 7
  %v3263 = vsub.s32 0, %v3262
  %v3264 = vrot.slane %v3259, %v3263
  %v3265 = vlaneseq
  %v3266 = vshrl.u32 %v3265, 7
  %v3267 = vsub.s32 1, %v3266
  %v3268 = vrot.slane %v3259, %v3267
  %v3269 = vlaneseq
  %v3270 = vshrl.u32 %v3269, 7
  %v3271 = vsub.s32 2, %v3270
  %v3272 = vrot.slane %v3259, %v3271
  %v3273 = vlaneseq
  %v3274 = vshrl.u32 %v3273, 7
  %v3275 = vsub.s32 3, %v3274
  %v3276 = vrot.slane %v3259, %v3275
  %v3281 = vmul.f32 %v3255, %v3264
  %v3282 = vmul.f32 %v3256, %v3268
  %v3283 = vmul.f32 %v3257, %v3272
  %v3284 = vmul.f32 %v3258, %v3276
  %v3285 = vsel %vm704, %v3281, 0.0
  %v3286 = vsel %vm704, %v3282, 0.0
  %v3287 = vadd.f32 %v3285, %v3286
  %v3288 = vsel %vm704, %v3283, 0.0
  %v3289 = vadd.f32 %v3287, %v3288
  %v3290 = vsel %vm704, %v3284, 0.0
  %v3291 = vadd.f32 %v3289, %v3290
  %3292 = vadd.xlane.f32.xlu0 %v3291
  %v3293 = vpop.xlane.xlu0 %3292
  %v3294 = vld [vmem:[#allocation2] sm:$0x1]
  %v3296 = vlaneseq
  %v3297 = vshrl.u32 %v3296, 7
  %v3298 = vsub.s32 0, %v3297
  %v3299 = vrot.slane %v3294, %v3298
  %v3301 = vadd.f32 %v3293, %v3299
  %vm3302 = vcmask 1024
  %3303 = vst.msk [vmem:[%s59] sm:$0x3] %vm3302, %v3301
  // Predicated region
  $region118: #{vit_pair_classifier_forward.1} parent=0 // pred_check
    _
  $region119: #{vit_pair_classifier_forward.1} parent=0 // pred_check_branch
    %3305 = sbr.rel (0) target = $region121
  $region120: #{vit_pair_classifier_forward.1} parent=0 // pred_region
    _
  $region121: #{vit_pair_classifier_forward.1} parent=0 // pred_fallthru
    _
  // Predicated region
  $region122: #{vit_pair_classifier_forward.1} parent=0 // pred_check
    _
  $region123: #{vit_pair_classifier_forward.1} parent=0 // pred_check_branch
    %3307 = sbr.rel (0) target = $region125
  $region124: #{vit_pair_classifier_forward.1} parent=0 // pred_region
    _
  $region125: #{vit_pair_classifier_forward.1} parent=0 // pred_fallthru
    _

</llo_original>
